<compile_context>
chip_gen: v7x
topology: tpu7x:2x2x1
jax: 0.10.0
libtpu: 0.0.40
codegen_flags: <defaults>
</compile_context>

<pallas_src>
import functools
import math

import jax
import jax.numpy as jnp
from jax.experimental import pallas as pl
from jax.experimental.pallas import tpu as pltpu

NEG_INF = -1e9

_PARAM_ORDER = ("ln", "bias", "wx", "wy", "wo", "w1", "w2")


# ----------------------------------------------------------------------------
# LayerNorm (spec formula): a_2 * (x - mean) / (std + eps) + b_2, unbiased std.
# ----------------------------------------------------------------------------
def _ln_kernel(v, g, b, eps):
    mu = jnp.mean(v, axis=-1, keepdims=True)
    var = jnp.sum((v - mu) ** 2, axis=-1, keepdims=True) * (1.0 / (v.shape[-1] - 1))
    inv = pl.reciprocal(jnp.sqrt(var) + eps, approx=False)   # EUP, off the VALU
    return g * (v - mu) * inv + b


def _ln_ref(v, g, b, eps):
    mu = jnp.mean(v, axis=-1, keepdims=True)
    var = jnp.sum((v - mu) ** 2, axis=-1, keepdims=True) / (v.shape[-1] - 1)
    return g * (v - mu) / (jnp.sqrt(var) + eps) + b


# ----------------------------------------------------------------------------
# Fused single-layer kernel (one grid step = Bblk batches)
# ----------------------------------------------------------------------------
def _encoder_layer_kernel(
    x_ref, y_ref, mask_ref, iod_ref,
    ln_ref, bias_ref, wx_ref, wy_ref, wo_ref, w1_ref, w2_ref,
    o_ref, ctx_scr, *, n_heads, eps):
    Bblk, T, D = x_ref.shape
    S = y_ref.shape[1]
    H = n_heads
    dh = D // H
    dff = w1_ref.shape[1]
    M = Bblk * T
    N = Bblk * S
    f32 = jnp.float32
    bf16 = jnp.bfloat16

    # Fold batch into rows so every matmul sees M = Bblk*T rows.
    x = x_ref[...].reshape(M, D).astype(f32)
    y = y_ref[...].reshape(N, D).astype(f32)

    # Packed LayerNorm params: rows = [gy, by, g1, b1, g2, b2]
    gy, byn = ln_ref[0], ln_ref[1]
    g1, b1 = ln_ref[2], ln_ref[3]
    g2, b2 = ln_ref[4], ln_ref[5]

    # Packed bias row: [bx(4D) | byp(2D) | bo(D) | b1f(dff) | b2f(D)]
    bias = bias_ref[0]
    bx = bias[0:4 * D]
    byp = bias[4 * D:6 * D]
    bo = bias[6 * D:7 * D]
    b1f = bias[7 * D:7 * D + dff]
    b2f = bias[7 * D + dff:8 * D + dff]

    # Pre-norms (fp32 math)
    x_n = _ln_kernel(x, g1, b1, eps)     # sublayer[0].norm(x)
    y_n = _ln_kernel(y, gy, byn, eps)    # self.norm(y)

    # Fused projections (1/sqrt(dh) already folded into the Wq columns):
    #   wx = [Wq_self*s | Wk_self | Wv_self | Wq_src*s]    [D, 4D]
    #   wy = [Wk_src    | Wv_src]                           [D, 2D]
    xp = jnp.dot(x_n.astype(bf16), wx_ref[...],
                 preferred_element_type=f32) + bx            # [M, 4D] f32
    yp = jnp.dot(y_n.astype(bf16), wy_ref[...],
                 preferred_element_type=f32) + byp           # [N, 2D] f32
    xp_b = xp.astype(bf16)
    yp_b = yp.astype(bf16)

    # Attention: heads are static lane slices; per-batch rows are static
    # sublane slices.  Contexts land at lane offsets in a VMEM scratch
    # [M, 2D] laid out as [ctx_src | ctx_self] (matches the fused wo).
    for b in range(Bblk):
        rows = slice(b * T, (b + 1) * T)
        krows = slice(b * S, (b + 1) * S)

        q_s = xp_b[rows, 0 * D:1 * D]                        # [T, D]
        v_s = xp_b[rows, 2 * D:3 * D]
        q_c = xp_b[rows, 3 * D:4 * D]
        v_c = yp_b[krows, 1 * D:2 * D]                       # [S, D]
        # One whole-tile K transpose per attention source per batch.
        kT_s = xp[rows, 1 * D:2 * D].T.astype(bf16)          # [D, T]
        kT_c = yp[krows, 0 * D:1 * D].T.astype(bf16)         # [D, S]

        # Additive mask bias computed once, shared by all heads
        # (masked_fill(mask == 0, -1e9) semantics).
        bias_self = jnp.where(mask_ref[b] != 0, 0.0, NEG_INF)   # [1, T]
        bias_src = jnp.where(iod_ref[b] != 0, 0.0, NEG_INF)     # [1, S]

        for h in range(H):
            sl = slice(h * dh, (h + 1) * dh)

            # --- src_attn(x_n, y_n, y_n, iod_mask) ---
            s = jnp.dot(q_c[:, sl], kT_c[sl, :],
                        preferred_element_type=f32) + bias_src
            s = s - jnp.max(s, axis=-1, keepdims=True)
            e = jnp.exp(s)
            p = e * pl.reciprocal(jnp.sum(e, axis=-1, keepdims=True), approx=True)
            ctx_scr[rows, sl] = jnp.dot(p.astype(bf16), v_c[:, sl],
                                        preferred_element_type=f32)

            # --- self_attn(x_n, x_n, x_n, mask) ---
            s2 = jnp.dot(q_s[:, sl], kT_s[sl, :],
                         preferred_element_type=f32) + bias_self
            s2 = s2 - jnp.max(s2, axis=-1, keepdims=True)
            e2 = jnp.exp(s2)
            p2 = e2 * pl.reciprocal(jnp.sum(e2, axis=-1, keepdims=True), approx=True)
            ctx_scr[rows, slice(D + h * dh, D + (h + 1) * dh)] = jnp.dot(
                p2.astype(bf16), v_s[:, sl], preferred_element_type=f32)

    # Fused output projections: [ctx_src | ctx_self] @ [[Wo_src],[Wo_self]]
    ctx = ctx_scr[...]                                        # [M, 2D] f32
    attn = jnp.dot(ctx.astype(bf16), wo_ref[...],
                   preferred_element_type=f32) + bo
    x1 = x + attn                                             # residual 1

    # Feed-forward sublayer (pre-norm + residual)
    x1n = _ln_kernel(x1, g2, b2, eps)
    h1 = jnp.maximum(jnp.dot(x1n.astype(bf16), w1_ref[...],
                             preferred_element_type=f32) + b1f, 0.0)
    ffn = jnp.dot(h1.astype(bf16), w2_ref[...],
                  preferred_element_type=f32) + b2f

    o_ref[...] = (x1 + ffn).reshape(Bblk, T, D).astype(o_ref.dtype)


# ----------------------------------------------------------------------------
# Wrapper
# ----------------------------------------------------------------------------
def _choose_batch_block(B, T, target_rows=256, max_rows=1024):
    """Largest divisor of B whose row count Bblk*T stays <= max_rows,
    stopping once we hit target_rows (MXU-friendly M)."""
    best = 1
    for c in range(1, B + 1):
        if B % c:
            continue
        if c * T > max_rows:
            break
        best = c
        if c * T >= target_rows:
            break
    return best


def encoder_layer_forward(fused, x, y, mask, iod_mask, *, n_heads, eps=1e-6):
    B, T, D = x.shape
    S = y.shape[1]
    dff = fused["w1"].shape[1]
    Bblk = _choose_batch_block(B, T)
    grid = (B // Bblk,)

    params = [fused[k] for k in _PARAM_ORDER]

    def const_spec(arr):
        zeros = (0,) * arr.ndim
        return pl.BlockSpec(arr.shape, lambda g, z=zeros: z)

    in_specs = [
        pl.BlockSpec((Bblk, T, D), lambda g: (g, 0, 0)),   # x
        pl.BlockSpec((Bblk, S, D), lambda g: (g, 0, 0)),   # y
        pl.BlockSpec((Bblk, 1, T), lambda g: (g, 0, 0)),   # self-attn mask
        pl.BlockSpec((Bblk, 1, S), lambda g: (g, 0, 0)),   # src-attn mask
    ] + [const_spec(a) for a in params]

    # Advisory cost model for XLA's scheduler.
    flops = 2 * B * (
        T * D * (4 * D)          # fused x projections
        + S * D * (2 * D)        # fused y projections
        + 2 * T * T * D          # self-attn QK^T + PV
        + 2 * T * S * D          # src-attn  QK^T + PV
        + T * (2 * D) * D        # fused output projection
        + 2 * T * D * dff        # FFN
    )
    bytes_accessed = sum(int(a.size) * a.dtype.itemsize
                         for a in (x, y, mask, iod_mask, *params))
    bytes_accessed += B * T * D * x.dtype.itemsize          # output
    cost = pl.CostEstimate(flops=int(flops),
                           transcendentals=int(B * n_heads * T * (T + S)),
                           bytes_accessed=int(bytes_accessed))

    kernel = functools.partial(_encoder_layer_kernel, n_heads=n_heads, eps=eps)

    return pl.pallas_call(
        kernel,
        out_shape=jax.ShapeDtypeStruct((B, T, D), x.dtype),
        grid=grid,
        in_specs=in_specs,
        out_specs=pl.BlockSpec((Bblk, T, D), lambda g: (g, 0, 0)),
        scratch_shapes=[pltpu.VMEM((Bblk * T, 2 * D), jnp.float32)],
        compiler_params=pltpu.CompilerParams(
            dimension_semantics=("parallel",),
            vmem_limit_bytes=32 * 1024 * 1024),
        cost_estimate=cost,
    )(x, y, mask, iod_mask, *params)


# ----------------------------------------------------------------------------
# Parameter init and one-time weight fusion / packing / bf16 cast.
# ----------------------------------------------------------------------------
def _linear_init(key, din, dout):
    kw, kb = jax.random.split(key)
    lim = 1.0 / math.sqrt(din)
    return {"w": jax.random.uniform(kw, (din, dout), jnp.float32, -lim, lim),
            "b": jax.random.uniform(kb, (1, dout), jnp.float32, -lim, lim)}


def _mha_init(key, d):
    ks = jax.random.split(key, 4)
    return {n: _linear_init(k, d, d) for n, k in zip(("q", "k", "v", "o"), ks)}


def _ln_init(d):
    return {"g": jnp.ones((1, d), jnp.float32), "b": jnp.zeros((1, d), jnp.float32)}


def init_params(key, d_model, d_ff):
    ks = jax.random.split(key, 4)
    return {
        "self_attn": _mha_init(ks[0], d_model),
        "src_attn": _mha_init(ks[1], d_model),
        "ffn": {"l1": _linear_init(ks[2], d_model, d_ff),
                "l2": _linear_init(ks[3], d_ff, d_model)},
        "norm_y": _ln_init(d_model),   # self.norm (applied to y)
        "norm1": _ln_init(d_model),    # sublayer[0].norm
        "norm2": _ln_init(d_model),    # sublayer[1].norm
    }


def prepare_fused_params(p, n_heads):
    """Fuse projections, fold the attention scale into Wq, pack the small
    LayerNorm / bias vectors, cast matmul weights to bf16."""
    sa, ca, ff = p["self_attn"], p["src_attn"], p["ffn"]
    d = sa["q"]["w"].shape[0]
    scale = 1.0 / math.sqrt(d // n_heads)

    wx = jnp.concatenate([sa["q"]["w"] * scale, sa["k"]["w"], sa["v"]["w"],
                          ca["q"]["w"] * scale], axis=1)           # [D, 4D]
    bx = jnp.concatenate([sa["q"]["b"] * scale, sa["k"]["b"], sa["v"]["b"],
                          ca["q"]["b"] * scale], axis=1)           # [1, 4D]
    wy = jnp.concatenate([ca["k"]["w"], ca["v"]["w"]], axis=1)     # [D, 2D]
    byp = jnp.concatenate([ca["k"]["b"], ca["v"]["b"]], axis=1)    # [1, 2D]
    wo = jnp.concatenate([ca["o"]["w"], sa["o"]["w"]], axis=0)     # [2D, D]
    bo = ca["o"]["b"] + sa["o"]["b"]                               # [1, D]

    ln = jnp.concatenate([p["norm_y"]["g"], p["norm_y"]["b"],
                          p["norm1"]["g"], p["norm1"]["b"],
                          p["norm2"]["g"], p["norm2"]["b"]], axis=0)   # [6, D]
    bias = jnp.concatenate([bx, byp, bo, ff["l1"]["b"], ff["l2"]["b"]],
                           axis=1)                                 # [1, 8D+dff]
    return {
        "ln": ln, "bias": bias,
        "wx": wx.astype(jnp.bfloat16), "wy": wy.astype(jnp.bfloat16),
        "wo": wo.astype(jnp.bfloat16),
        "w1": ff["l1"]["w"].astype(jnp.bfloat16),
        "w2": ff["l2"]["w"].astype(jnp.bfloat16),
    }


# ----------------------------------------------------------------------------
# Pure-JAX fp32 reference (mirrors the PyTorch module) for correctness checks.
# ----------------------------------------------------------------------------
def _ref_attention(p, q_in, k_in, v_in, mask, n_heads):
    B, Tq, D = q_in.shape
    Tk = k_in.shape[1]
    dh = D // n_heads
    q = q_in @ p["q"]["w"] + p["q"]["b"]
    k = k_in @ p["k"]["w"] + p["k"]["b"]
    v = v_in @ p["v"]["w"] + p["v"]["b"]
    split = lambda t, T: t.reshape(B, T, n_heads, dh).transpose(0, 2, 1, 3)
    qh, kh, vh = split(q, Tq), split(k, Tk), split(v, Tk)
    s = jnp.einsum("bhqd,bhkd->bhqk", qh, kh) / math.sqrt(dh)
    s = jnp.where(mask[:, None, :, :] != 0, s, NEG_INF)
    pattn = jax.nn.softmax(s, axis=-1)
    ctx = jnp.einsum("bhqk,bhkd->bhqd", pattn, vh)
    ctx = ctx.transpose(0, 2, 1, 3).reshape(B, Tq, D)
    return ctx @ p["o"]["w"] + p["o"]["b"]


def encoder_layer_ref(p, x, y, mask, iod_mask, n_heads, eps=1e-6):
    y_n = _ln_ref(y, p["norm_y"]["g"], p["norm_y"]["b"], eps)
    x_n = _ln_ref(x, p["norm1"]["g"], p["norm1"]["b"], eps)
    attn = (_ref_attention(p["src_attn"], x_n, y_n, y_n, iod_mask, n_heads)
            + _ref_attention(p["self_attn"], x_n, x_n, x_n, mask, n_heads))
    x1 = x + attn
    x1n = _ln_ref(x1, p["norm2"]["g"], p["norm2"]["b"], eps)
    h = jnp.maximum(x1n @ p["ffn"]["l1"]["w"] + p["ffn"]["l1"]["b"], 0.0)
    return x1 + (h @ p["ffn"]["l2"]["w"] + p["ffn"]["l2"]["b"])


# ----------------------------------------------------------------------------
if __name__ == "__main__":
    B, T, S = 2, 16, 8
    D_MODEL, D_FF, N_HEADS = 128, 256, 4   # lane-dense feature dims

    key = jax.random.PRNGKey(0)
    kp, kx, ky = jax.random.split(key, 3)

    params = init_params(kp, D_MODEL, D_FF)
    fused = prepare_fused_params(params, N_HEADS)

    x = jax.random.normal(kx, (B, T, D_MODEL), jnp.float32)
    y = jax.random.normal(ky, (B, S, D_MODEL), jnp.float32)
    # padding-style masks (1 = attend), with a few padded positions
    mask = jnp.ones((B, 1, T), jnp.float32).at[:, :, T - 2:].set(0.0)
    iod_mask = jnp.ones((B, 1, S), jnp.float32).at[:, :, S - 1:].set(0.0)

    fwd = jax.jit(functools.partial(encoder_layer_forward, n_heads=N_HEADS))
    out = fwd(fused, x, y, mask, iod_mask)
    jax.block_until_ready(out)

    ref = encoder_layer_ref(params, x, y, mask, iod_mask, N_HEADS)
    assert out.shape == (B, T, D_MODEL) and out.dtype == x.dtype
    assert bool(jnp.all(jnp.isfinite(out)))
    max_err = float(jnp.max(jnp.abs(out - ref)))
    mean_err = float(jnp.mean(jnp.abs(out - ref)))
    # kernel uses bf16 matmul operands + approx softmax reciprocal; the
    # reference is pure fp32 -> small bounded error; wiring bugs would be O(1).
    assert max_err < 1e-1, f"max abs error vs fp32 reference: {max_err}"
    assert mean_err < 3e-2, f"mean abs error vs fp32 reference: {mean_err}"

    # bf16 activation path (halves x/y/output HBM traffic); sanity check only.
    out_bf16 = fwd(fused, x.astype(jnp.bfloat16), y.astype(jnp.bfloat16),
                   mask, iod_mask)
    jax.block_until_ready(out_bf16)
    assert out_bf16.dtype == jnp.bfloat16
    assert bool(jnp.all(jnp.isfinite(out_bf16.astype(jnp.float32))))

    print("KERNEL_OK")
</pallas_src>

<mosaic_0001>
module attributes {stable_mosaic.version = 11 : i64} {
  func.func @_encoder_layer_kernel(%arg0: i32, %arg1: memref<2x16x128xf32, #tpu.memory_space<vmem>>, %arg2: memref<2x8x128xf32, #tpu.memory_space<vmem>>, %arg3: memref<2x1x16xf32, #tpu.memory_space<vmem>>, %arg4: memref<2x1x8xf32, #tpu.memory_space<vmem>>, %arg5: memref<6x128xf32, #tpu.memory_space<vmem>>, %arg6: memref<1x1280xf32, #tpu.memory_space<vmem>>, %arg7: memref<128x512xbf16, #tpu.memory_space<vmem>>, %arg8: memref<128x256xbf16, #tpu.memory_space<vmem>>, %arg9: memref<256x128xbf16, #tpu.memory_space<vmem>>, %arg10: memref<128x256xbf16, #tpu.memory_space<vmem>>, %arg11: memref<256x128xbf16, #tpu.memory_space<vmem>>, %arg12: memref<2x16x128xf32, #tpu.memory_space<vmem>>, %arg13: memref<32x256xf32, #tpu.memory_space<vmem>>) attributes {dimension_semantics = [#tpu.dimension_semantics<parallel>], iteration_bounds = array<i64: 1>, scalar_prefetch = 0 : i64, scratch_operands = 1 : i64, tpu.core_type = #tpu.core_type<tc>, window_params = [{transform_indices = @transform_0, window_bounds = array<i64: 2, 16, 128>}, {transform_indices = @transform_1, window_bounds = array<i64: 2, 8, 128>}, {transform_indices = @transform_2, window_bounds = array<i64: 2, 1, 16>}, {transform_indices = @transform_3, window_bounds = array<i64: 2, 1, 8>}, {pipeline_mode = #tpu.pipeline_mode<synchronous>, transform_indices = @transform_4, window_bounds = array<i64: 6, 128>}, {pipeline_mode = #tpu.pipeline_mode<synchronous>, transform_indices = @transform_5, window_bounds = array<i64: 1, 1280>}, {pipeline_mode = #tpu.pipeline_mode<synchronous>, transform_indices = @transform_6, window_bounds = array<i64: 128, 512>}, {pipeline_mode = #tpu.pipeline_mode<synchronous>, transform_indices = @transform_7, window_bounds = array<i64: 128, 256>}, {pipeline_mode = #tpu.pipeline_mode<synchronous>, transform_indices = @transform_8, window_bounds = array<i64: 256, 128>}, {pipeline_mode = #tpu.pipeline_mode<synchronous>, transform_indices = @transform_9, window_bounds = array<i64: 128, 256>}, {pipeline_mode = #tpu.pipeline_mode<synchronous>, transform_indices = @transform_10, window_bounds = array<i64: 256, 128>}, {transform_indices = @transform_11, window_bounds = array<i64: 2, 16, 128>}]} {
    %c0 = arith.constant 0 : index
    %c0_0 = arith.constant 0 : index
    %c0_1 = arith.constant 0 : index
    %0 = vector.load %arg1[%c0, %c0_0, %c0_1] : memref<2x16x128xf32, #tpu.memory_space<vmem>>, vector<2x16x128xf32>
    %1 = vector.shape_cast %0 : vector<2x16x128xf32> to vector<32x128xf32>
    %c0_2 = arith.constant 0 : index
    %c0_3 = arith.constant 0 : index
    %c0_4 = arith.constant 0 : index
    %2 = vector.load %arg2[%c0_2, %c0_3, %c0_4] : memref<2x8x128xf32, #tpu.memory_space<vmem>>, vector<2x8x128xf32>
    %3 = vector.shape_cast %2 : vector<2x8x128xf32> to vector<16x128xf32>
    %c0_5 = arith.constant 0 : index
    %c0_6 = arith.constant 0 : index
    %4 = vector.load %arg5[%c0_5, %c0_6] : memref<6x128xf32, #tpu.memory_space<vmem>>, vector<1x128xf32>
    %5 = vector.shape_cast %4 : vector<1x128xf32> to vector<128xf32>
    %c1 = arith.constant 1 : index
    %c0_7 = arith.constant 0 : index
    %6 = vector.load %arg5[%c1, %c0_7] : memref<6x128xf32, #tpu.memory_space<vmem>>, vector<1x128xf32>
    %7 = vector.shape_cast %6 : vector<1x128xf32> to vector<128xf32>
    %c2 = arith.constant 2 : index
    %c0_8 = arith.constant 0 : index
    %8 = vector.load %arg5[%c2, %c0_8] : memref<6x128xf32, #tpu.memory_space<vmem>>, vector<1x128xf32>
    %9 = vector.shape_cast %8 : vector<1x128xf32> to vector<128xf32>
    %c3 = arith.constant 3 : index
    %c0_9 = arith.constant 0 : index
    %10 = vector.load %arg5[%c3, %c0_9] : memref<6x128xf32, #tpu.memory_space<vmem>>, vector<1x128xf32>
    %11 = vector.shape_cast %10 : vector<1x128xf32> to vector<128xf32>
    %c4 = arith.constant 4 : index
    %c0_10 = arith.constant 0 : index
    %12 = vector.load %arg5[%c4, %c0_10] : memref<6x128xf32, #tpu.memory_space<vmem>>, vector<1x128xf32>
    %13 = vector.shape_cast %12 : vector<1x128xf32> to vector<128xf32>
    %c5 = arith.constant 5 : index
    %c0_11 = arith.constant 0 : index
    %14 = vector.load %arg5[%c5, %c0_11] : memref<6x128xf32, #tpu.memory_space<vmem>>, vector<1x128xf32>
    %15 = vector.shape_cast %14 : vector<1x128xf32> to vector<128xf32>
    %c0_12 = arith.constant 0 : index
    %c0_13 = arith.constant 0 : index
    %16 = vector.load %arg6[%c0_12, %c0_13] : memref<1x1280xf32, #tpu.memory_space<vmem>>, vector<1x1280xf32>
    %17 = vector.shape_cast %16 : vector<1x1280xf32> to vector<1280xf32>
    %18 = vector.extract_strided_slice %17 {offsets = [0], sizes = [512], strides = [1]} : vector<1280xf32> to vector<512xf32>
    %19 = vector.extract_strided_slice %17 {offsets = [512], sizes = [256], strides = [1]} : vector<1280xf32> to vector<256xf32>
    %20 = vector.extract_strided_slice %17 {offsets = [768], sizes = [128], strides = [1]} : vector<1280xf32> to vector<128xf32>
    %21 = vector.extract_strided_slice %17 {offsets = [896], sizes = [256], strides = [1]} : vector<1280xf32> to vector<256xf32>
    %22 = vector.extract_strided_slice %17 {offsets = [1152], sizes = [128], strides = [1]} : vector<1280xf32> to vector<128xf32>
    %cst = arith.constant dense<0.000000e+00> : vector<32xf32>
    %23 = vector.multi_reduction <add>, %1, %cst [1] : vector<32x128xf32> to vector<32xf32>
    %24 = vector.shape_cast %23 : vector<32xf32> to vector<32x1xf32>
    %cst_14 = arith.constant 1.280000e+02 : f32
    %25 = vector.broadcast %cst_14 : f32 to vector<32x1xf32>
    %26 = arith.divf %24, %25 : vector<32x1xf32>
    %27 = vector.broadcast %26 : vector<32x1xf32> to vector<32x128xf32>
    %28 = arith.subf %1, %27 : vector<32x128xf32>
    %29 = arith.mulf %28, %28 : vector<32x128xf32>
    %cst_15 = arith.constant dense<0.000000e+00> : vector<32xf32>
    %30 = vector.multi_reduction <add>, %29, %cst_15 [1] : vector<32x128xf32> to vector<32xf32>
    %31 = vector.shape_cast %30 : vector<32xf32> to vector<32x1xf32>
    %cst_16 = arith.constant 0.00787401571 : f32
    %32 = vector.broadcast %cst_16 : f32 to vector<32x1xf32>
    %33 = arith.mulf %31, %32 : vector<32x1xf32>
    %34 = math.sqrt %33 : vector<32x1xf32>
    %cst_17 = arith.constant 9.99999997E-7 : f32
    %35 = vector.broadcast %cst_17 : f32 to vector<32x1xf32>
    %36 = arith.addf %34, %35 : vector<32x1xf32>
    %37 = tpu.reciprocal %36 : vector<32x1xf32> -> vector<32x1xf32>
    %38 = vector.broadcast %26 : vector<32x1xf32> to vector<32x128xf32>
    %39 = arith.subf %1, %38 : vector<32x128xf32>
    %40 = vector.shape_cast %9 : vector<128xf32> to vector<1x128xf32>
    %41 = vector.broadcast %40 : vector<1x128xf32> to vector<32x128xf32>
    %42 = arith.mulf %41, %39 : vector<32x128xf32>
    %43 = vector.broadcast %37 : vector<32x1xf32> to vector<32x128xf32>
    %44 = arith.mulf %42, %43 : vector<32x128xf32>
    %45 = vector.shape_cast %11 : vector<128xf32> to vector<1x128xf32>
    %46 = vector.broadcast %45 : vector<1x128xf32> to vector<32x128xf32>
    %47 = arith.addf %44, %46 : vector<32x128xf32>
    %cst_18 = arith.constant dense<0.000000e+00> : vector<16xf32>
    %48 = vector.multi_reduction <add>, %3, %cst_18 [1] : vector<16x128xf32> to vector<16xf32>
    %49 = vector.shape_cast %48 : vector<16xf32> to vector<16x1xf32>
    %cst_19 = arith.constant 1.280000e+02 : f32
    %50 = vector.broadcast %cst_19 : f32 to vector<16x1xf32>
    %51 = arith.divf %49, %50 : vector<16x1xf32>
    %52 = vector.broadcast %51 : vector<16x1xf32> to vector<16x128xf32>
    %53 = arith.subf %3, %52 : vector<16x128xf32>
    %54 = arith.mulf %53, %53 : vector<16x128xf32>
    %cst_20 = arith.constant dense<0.000000e+00> : vector<16xf32>
    %55 = vector.multi_reduction <add>, %54, %cst_20 [1] : vector<16x128xf32> to vector<16xf32>
    %56 = vector.shape_cast %55 : vector<16xf32> to vector<16x1xf32>
    %cst_21 = arith.constant 0.00787401571 : f32
    %57 = vector.broadcast %cst_21 : f32 to vector<16x1xf32>
    %58 = arith.mulf %56, %57 : vector<16x1xf32>
    %59 = math.sqrt %58 : vector<16x1xf32>
    %cst_22 = arith.constant 9.99999997E-7 : f32
    %60 = vector.broadcast %cst_22 : f32 to vector<16x1xf32>
    %61 = arith.addf %59, %60 : vector<16x1xf32>
    %62 = tpu.reciprocal %61 : vector<16x1xf32> -> vector<16x1xf32>
    %63 = vector.broadcast %51 : vector<16x1xf32> to vector<16x128xf32>
    %64 = arith.subf %3, %63 : vector<16x128xf32>
    %65 = vector.shape_cast %5 : vector<128xf32> to vector<1x128xf32>
    %66 = vector.broadcast %65 : vector<1x128xf32> to vector<16x128xf32>
    %67 = arith.mulf %66, %64 : vector<16x128xf32>
    %68 = vector.broadcast %62 : vector<16x1xf32> to vector<16x128xf32>
    %69 = arith.mulf %67, %68 : vector<16x128xf32>
    %70 = vector.shape_cast %7 : vector<128xf32> to vector<1x128xf32>
    %71 = vector.broadcast %70 : vector<1x128xf32> to vector<16x128xf32>
    %72 = arith.addf %69, %71 : vector<16x128xf32>
    %73 = arith.truncf %47 : vector<32x128xf32> to vector<32x128xbf16>
    %c0_23 = arith.constant 0 : index
    %c0_24 = arith.constant 0 : index
    %74 = vector.load %arg7[%c0_23, %c0_24] : memref<128x512xbf16, #tpu.memory_space<vmem>>, vector<128x512xbf16>
    %cst_25 = arith.constant dense<0.000000e+00> : vector<32x512xf32>
    %75 = tpu.matmul %73, %74, %cst_25 {dimension_numbers = #tpu.dot_dimension_numbers<[1], [0], [0], [1], [0, 0, 1, 1], [], []>} : vector<32x128xbf16>, vector<128x512xbf16>, vector<32x512xf32> -> vector<32x512xf32>
    %76 = vector.shape_cast %18 : vector<512xf32> to vector<1x512xf32>
    %77 = vector.broadcast %76 : vector<1x512xf32> to vector<32x512xf32>
    %78 = arith.addf %75, %77 : vector<32x512xf32>
    %79 = arith.truncf %72 : vector<16x128xf32> to vector<16x128xbf16>
    %c0_26 = arith.constant 0 : index
    %c0_27 = arith.constant 0 : index
    %80 = vector.load %arg8[%c0_26, %c0_27] : memref<128x256xbf16, #tpu.memory_space<vmem>>, vector<128x256xbf16>
    %cst_28 = arith.constant dense<0.000000e+00> : vector<16x256xf32>
    %81 = tpu.matmul %79, %80, %cst_28 {dimension_numbers = #tpu.dot_dimension_numbers<[1], [0], [0], [1], [0, 0, 1, 1], [], []>} : vector<16x128xbf16>, vector<128x256xbf16>, vector<16x256xf32> -> vector<16x256xf32>
    %82 = vector.shape_cast %19 : vector<256xf32> to vector<1x256xf32>
    %83 = vector.broadcast %82 : vector<1x256xf32> to vector<16x256xf32>
    %84 = arith.addf %81, %83 : vector<16x256xf32>
    %85 = arith.truncf %78 : vector<32x512xf32> to vector<32x512xbf16>
    %86 = arith.truncf %84 : vector<16x256xf32> to vector<16x256xbf16>
    %87 = vector.extract_strided_slice %85 {offsets = [0, 0], sizes = [16, 128], strides = [1, 1]} : vector<32x512xbf16> to vector<16x128xbf16>
    %88 = vector.extract_strided_slice %85 {offsets = [0, 256], sizes = [16, 128], strides = [1, 1]} : vector<32x512xbf16> to vector<16x128xbf16>
    %89 = vector.extract_strided_slice %85 {offsets = [0, 384], sizes = [16, 128], strides = [1, 1]} : vector<32x512xbf16> to vector<16x128xbf16>
    %90 = vector.extract_strided_slice %86 {offsets = [0, 128], sizes = [8, 128], strides = [1, 1]} : vector<16x256xbf16> to vector<8x128xbf16>
    %91 = vector.extract_strided_slice %78 {offsets = [0, 128], sizes = [16, 128], strides = [1, 1]} : vector<32x512xf32> to vector<16x128xf32>
    %92 = tpu.transpose %91, [1, 0] : vector<16x128xf32> -> vector<128x16xf32>
    %93 = arith.truncf %92 : vector<128x16xf32> to vector<128x16xbf16>
    %94 = vector.extract_strided_slice %84 {offsets = [0, 0], sizes = [8, 128], strides = [1, 1]} : vector<16x256xf32> to vector<8x128xf32>
    %95 = tpu.transpose %94, [1, 0] : vector<8x128xf32> -> vector<128x8xf32>
    %96 = arith.truncf %95 : vector<128x8xf32> to vector<128x8xbf16>
    %c0_29 = arith.constant 0 : index
    %c0_30 = arith.constant 0 : index
    %c0_31 = arith.constant 0 : index
    %97 = vector.load %arg3[%c0_29, %c0_30, %c0_31] : memref<2x1x16xf32, #tpu.memory_space<vmem>>, vector<1x1x16xf32>
    %98 = vector.shape_cast %97 : vector<1x1x16xf32> to vector<1x16xf32>
    %cst_32 = arith.constant 0.000000e+00 : f32
    %99 = vector.broadcast %cst_32 : f32 to vector<1x16xf32>
    %100 = arith.cmpf one, %98, %99 : vector<1x16xf32>
    %cst_33 = arith.constant 0.000000e+00 : f32
    %cst_34 = arith.constant -1.000000e+09 : f32
    %101 = vector.broadcast %cst_33 : f32 to vector<1x16xf32>
    %102 = vector.broadcast %cst_34 : f32 to vector<1x16xf32>
    %103 = arith.select %100, %101, %102 : vector<1x16xi1>, vector<1x16xf32>
    %c0_35 = arith.constant 0 : index
    %c0_36 = arith.constant 0 : index
    %c0_37 = arith.constant 0 : index
    %104 = vector.load %arg4[%c0_35, %c0_36, %c0_37] : memref<2x1x8xf32, #tpu.memory_space<vmem>>, vector<1x1x8xf32>
    %105 = vector.shape_cast %104 : vector<1x1x8xf32> to vector<1x8xf32>
    %cst_38 = arith.constant 0.000000e+00 : f32
    %106 = vector.broadcast %cst_38 : f32 to vector<1x8xf32>
    %107 = arith.cmpf one, %105, %106 : vector<1x8xf32>
    %cst_39 = arith.constant 0.000000e+00 : f32
    %cst_40 = arith.constant -1.000000e+09 : f32
    %108 = vector.broadcast %cst_39 : f32 to vector<1x8xf32>
    %109 = vector.broadcast %cst_40 : f32 to vector<1x8xf32>
    %110 = arith.select %107, %108, %109 : vector<1x8xi1>, vector<1x8xf32>
    %111 = vector.extract_strided_slice %89 {offsets = [0, 0], sizes = [16, 32], strides = [1, 1]} : vector<16x128xbf16> to vector<16x32xbf16>
    %112 = vector.extract_strided_slice %96 {offsets = [0, 0], sizes = [32, 8], strides = [1, 1]} : vector<128x8xbf16> to vector<32x8xbf16>
    %cst_41 = arith.constant dense<0.000000e+00> : vector<16x8xf32>
    %113 = tpu.matmul %111, %112, %cst_41 {dimension_numbers = #tpu.dot_dimension_numbers<[1], [0], [0], [1], [0, 0, 1, 1], [], []>} : vector<16x32xbf16>, vector<32x8xbf16>, vector<16x8xf32> -> vector<16x8xf32>
    %114 = vector.broadcast %110 : vector<1x8xf32> to vector<16x8xf32>
    %115 = arith.addf %113, %114 : vector<16x8xf32>
    %cst_42 = arith.constant dense<0xFF800000> : vector<16xf32>
    %116 = vector.multi_reduction <maximumf>, %115, %cst_42 [1] : vector<16x8xf32> to vector<16xf32>
    %117 = vector.shape_cast %116 : vector<16xf32> to vector<16x1xf32>
    %118 = vector.broadcast %117 : vector<16x1xf32> to vector<16x8xf32>
    %119 = arith.subf %115, %118 : vector<16x8xf32>
    %120 = math.exp %119 : vector<16x8xf32>
    %cst_43 = arith.constant dense<0.000000e+00> : vector<16xf32>
    %121 = vector.multi_reduction <add>, %120, %cst_43 [1] : vector<16x8xf32> to vector<16xf32>
    %122 = vector.shape_cast %121 : vector<16xf32> to vector<16x1xf32>
    %123 = tpu.reciprocal %122 {approx = true} : vector<16x1xf32> -> vector<16x1xf32>
    %124 = vector.broadcast %123 : vector<16x1xf32> to vector<16x8xf32>
    %125 = arith.mulf %120, %124 : vector<16x8xf32>
    %126 = arith.truncf %125 : vector<16x8xf32> to vector<16x8xbf16>
    %127 = vector.extract_strided_slice %90 {offsets = [0, 0], sizes = [8, 32], strides = [1, 1]} : vector<8x128xbf16> to vector<8x32xbf16>
    %cst_44 = arith.constant dense<0.000000e+00> : vector<16x32xf32>
    %128 = tpu.matmul %126, %127, %cst_44 {dimension_numbers = #tpu.dot_dimension_numbers<[1], [0], [0], [1], [0, 0, 1, 1], [], []>} : vector<16x8xbf16>, vector<8x32xbf16>, vector<16x32xf32> -> vector<16x32xf32>
    %c0_45 = arith.constant 0 : index
    %c0_46 = arith.constant 0 : index
    %129 = vector.load %arg13[%c0_45, %c0_46] : memref<32x256xf32, #tpu.memory_space<vmem>>, vector<16x32xf32>
    tpu.vector_store %arg13[%c0_45, %c0_46], %128 {strides = array<i32>} : memref<32x256xf32, #tpu.memory_space<vmem>>, vector<16x32xf32>,
    %130 = vector.extract_strided_slice %87 {offsets = [0, 0], sizes = [16, 32], strides = [1, 1]} : vector<16x128xbf16> to vector<16x32xbf16>
    %131 = vector.extract_strided_slice %93 {offsets = [0, 0], sizes = [32, 16], strides = [1, 1]} : vector<128x16xbf16> to vector<32x16xbf16>
    %cst_47 = arith.constant dense<0.000000e+00> : vector<16x16xf32>
    %132 = tpu.matmul %130, %131, %cst_47 {dimension_numbers = #tpu.dot_dimension_numbers<[1], [0], [0], [1], [0, 0, 1, 1], [], []>} : vector<16x32xbf16>, vector<32x16xbf16>, vector<16x16xf32> -> vector<16x16xf32>
    %133 = vector.broadcast %103 : vector<1x16xf32> to vector<16x16xf32>
    %134 = arith.addf %132, %133 : vector<16x16xf32>
    %cst_48 = arith.constant dense<0xFF800000> : vector<16xf32>
    %135 = vector.multi_reduction <maximumf>, %134, %cst_48 [1] : vector<16x16xf32> to vector<16xf32>
    %136 = vector.shape_cast %135 : vector<16xf32> to vector<16x1xf32>
    %137 = vector.broadcast %136 : vector<16x1xf32> to vector<16x16xf32>
    %138 = arith.subf %134, %137 : vector<16x16xf32>
    %139 = math.exp %138 : vector<16x16xf32>
    %cst_49 = arith.constant dense<0.000000e+00> : vector<16xf32>
    %140 = vector.multi_reduction <add>, %139, %cst_49 [1] : vector<16x16xf32> to vector<16xf32>
    %141 = vector.shape_cast %140 : vector<16xf32> to vector<16x1xf32>
    %142 = tpu.reciprocal %141 {approx = true} : vector<16x1xf32> -> vector<16x1xf32>
    %143 = vector.broadcast %142 : vector<16x1xf32> to vector<16x16xf32>
    %144 = arith.mulf %139, %143 : vector<16x16xf32>
    %145 = arith.truncf %144 : vector<16x16xf32> to vector<16x16xbf16>
    %146 = vector.extract_strided_slice %88 {offsets = [0, 0], sizes = [16, 32], strides = [1, 1]} : vector<16x128xbf16> to vector<16x32xbf16>
    %cst_50 = arith.constant dense<0.000000e+00> : vector<16x32xf32>
    %147 = tpu.matmul %145, %146, %cst_50 {dimension_numbers = #tpu.dot_dimension_numbers<[1], [0], [0], [1], [0, 0, 1, 1], [], []>} : vector<16x16xbf16>, vector<16x32xbf16>, vector<16x32xf32> -> vector<16x32xf32>
    %c0_51 = arith.constant 0 : index
    %c128 = arith.constant 128 : index
    %148 = vector.load %arg13[%c0_51, %c128] : memref<32x256xf32, #tpu.memory_space<vmem>>, vector<16x32xf32>
    tpu.vector_store %arg13[%c0_51, %c128], %147 {strides = array<i32>} : memref<32x256xf32, #tpu.memory_space<vmem>>, vector<16x32xf32>,
    %149 = vector.extract_strided_slice %89 {offsets = [0, 32], sizes = [16, 32], strides = [1, 1]} : vector<16x128xbf16> to vector<16x32xbf16>
    %150 = vector.extract_strided_slice %96 {offsets = [32, 0], sizes = [32, 8], strides = [1, 1]} : vector<128x8xbf16> to vector<32x8xbf16>
    %cst_52 = arith.constant dense<0.000000e+00> : vector<16x8xf32>
    %151 = tpu.matmul %149, %150, %cst_52 {dimension_numbers = #tpu.dot_dimension_numbers<[1], [0], [0], [1], [0, 0, 1, 1], [], []>} : vector<16x32xbf16>, vector<32x8xbf16>, vector<16x8xf32> -> vector<16x8xf32>
    %152 = vector.broadcast %110 : vector<1x8xf32> to vector<16x8xf32>
    %153 = arith.addf %151, %152 : vector<16x8xf32>
    %cst_53 = arith.constant dense<0xFF800000> : vector<16xf32>
    %154 = vector.multi_reduction <maximumf>, %153, %cst_53 [1] : vector<16x8xf32> to vector<16xf32>
    %155 = vector.shape_cast %154 : vector<16xf32> to vector<16x1xf32>
    %156 = vector.broadcast %155 : vector<16x1xf32> to vector<16x8xf32>
    %157 = arith.subf %153, %156 : vector<16x8xf32>
    %158 = math.exp %157 : vector<16x8xf32>
    %cst_54 = arith.constant dense<0.000000e+00> : vector<16xf32>
    %159 = vector.multi_reduction <add>, %158, %cst_54 [1] : vector<16x8xf32> to vector<16xf32>
    %160 = vector.shape_cast %159 : vector<16xf32> to vector<16x1xf32>
    %161 = tpu.reciprocal %160 {approx = true} : vector<16x1xf32> -> vector<16x1xf32>
    %162 = vector.broadcast %161 : vector<16x1xf32> to vector<16x8xf32>
    %163 = arith.mulf %158, %162 : vector<16x8xf32>
    %164 = arith.truncf %163 : vector<16x8xf32> to vector<16x8xbf16>
    %165 = vector.extract_strided_slice %90 {offsets = [0, 32], sizes = [8, 32], strides = [1, 1]} : vector<8x128xbf16> to vector<8x32xbf16>
    %cst_55 = arith.constant dense<0.000000e+00> : vector<16x32xf32>
    %166 = tpu.matmul %164, %165, %cst_55 {dimension_numbers = #tpu.dot_dimension_numbers<[1], [0], [0], [1], [0, 0, 1, 1], [], []>} : vector<16x8xbf16>, vector<8x32xbf16>, vector<16x32xf32> -> vector<16x32xf32>
    %c0_56 = arith.constant 0 : index
    %c32 = arith.constant 32 : index
    %167 = vector.load %arg13[%c0_56, %c32] : memref<32x256xf32, #tpu.memory_space<vmem>>, vector<16x32xf32>
    tpu.vector_store %arg13[%c0_56, %c32], %166 {strides = array<i32>} : memref<32x256xf32, #tpu.memory_space<vmem>>, vector<16x32xf32>,
    %168 = vector.extract_strided_slice %87 {offsets = [0, 32], sizes = [16, 32], strides = [1, 1]} : vector<16x128xbf16> to vector<16x32xbf16>
    %169 = vector.extract_strided_slice %93 {offsets = [32, 0], sizes = [32, 16], strides = [1, 1]} : vector<128x16xbf16> to vector<32x16xbf16>
    %cst_57 = arith.constant dense<0.000000e+00> : vector<16x16xf32>
    %170 = tpu.matmul %168, %169, %cst_57 {dimension_numbers = #tpu.dot_dimension_numbers<[1], [0], [0], [1], [0, 0, 1, 1], [], []>} : vector<16x32xbf16>, vector<32x16xbf16>, vector<16x16xf32> -> vector<16x16xf32>
    %171 = vector.broadcast %103 : vector<1x16xf32> to vector<16x16xf32>
    %172 = arith.addf %170, %171 : vector<16x16xf32>
    %cst_58 = arith.constant dense<0xFF800000> : vector<16xf32>
    %173 = vector.multi_reduction <maximumf>, %172, %cst_58 [1] : vector<16x16xf32> to vector<16xf32>
    %174 = vector.shape_cast %173 : vector<16xf32> to vector<16x1xf32>
    %175 = vector.broadcast %174 : vector<16x1xf32> to vector<16x16xf32>
    %176 = arith.subf %172, %175 : vector<16x16xf32>
    %177 = math.exp %176 : vector<16x16xf32>
    %cst_59 = arith.constant dense<0.000000e+00> : vector<16xf32>
    %178 = vector.multi_reduction <add>, %177, %cst_59 [1] : vector<16x16xf32> to vector<16xf32>
    %179 = vector.shape_cast %178 : vector<16xf32> to vector<16x1xf32>
    %180 = tpu.reciprocal %179 {approx = true} : vector<16x1xf32> -> vector<16x1xf32>
    %181 = vector.broadcast %180 : vector<16x1xf32> to vector<16x16xf32>
    %182 = arith.mulf %177, %181 : vector<16x16xf32>
    %183 = arith.truncf %182 : vector<16x16xf32> to vector<16x16xbf16>
    %184 = vector.extract_strided_slice %88 {offsets = [0, 32], sizes = [16, 32], strides = [1, 1]} : vector<16x128xbf16> to vector<16x32xbf16>
    %cst_60 = arith.constant dense<0.000000e+00> : vector<16x32xf32>
    %185 = tpu.matmul %183, %184, %cst_60 {dimension_numbers = #tpu.dot_dimension_numbers<[1], [0], [0], [1], [0, 0, 1, 1], [], []>} : vector<16x16xbf16>, vector<16x32xbf16>, vector<16x32xf32> -> vector<16x32xf32>
    %c0_61 = arith.constant 0 : index
    %c160 = arith.constant 160 : index
    %186 = vector.load %arg13[%c0_61, %c160] : memref<32x256xf32, #tpu.memory_space<vmem>>, vector<16x32xf32>
    tpu.vector_store %arg13[%c0_61, %c160], %185 {strides = array<i32>} : memref<32x256xf32, #tpu.memory_space<vmem>>, vector<16x32xf32>,
    %187 = vector.extract_strided_slice %89 {offsets = [0, 64], sizes = [16, 32], strides = [1, 1]} : vector<16x128xbf16> to vector<16x32xbf16>
    %188 = vector.extract_strided_slice %96 {offsets = [64, 0], sizes = [32, 8], strides = [1, 1]} : vector<128x8xbf16> to vector<32x8xbf16>
    %cst_62 = arith.constant dense<0.000000e+00> : vector<16x8xf32>
    %189 = tpu.matmul %187, %188, %cst_62 {dimension_numbers = #tpu.dot_dimension_numbers<[1], [0], [0], [1], [0, 0, 1, 1], [], []>} : vector<16x32xbf16>, vector<32x8xbf16>, vector<16x8xf32> -> vector<16x8xf32>
    %190 = vector.broadcast %110 : vector<1x8xf32> to vector<16x8xf32>
    %191 = arith.addf %189, %190 : vector<16x8xf32>
    %cst_63 = arith.constant dense<0xFF800000> : vector<16xf32>
    %192 = vector.multi_reduction <maximumf>, %191, %cst_63 [1] : vector<16x8xf32> to vector<16xf32>
    %193 = vector.shape_cast %192 : vector<16xf32> to vector<16x1xf32>
    %194 = vector.broadcast %193 : vector<16x1xf32> to vector<16x8xf32>
    %195 = arith.subf %191, %194 : vector<16x8xf32>
    %196 = math.exp %195 : vector<16x8xf32>
    %cst_64 = arith.constant dense<0.000000e+00> : vector<16xf32>
    %197 = vector.multi_reduction <add>, %196, %cst_64 [1] : vector<16x8xf32> to vector<16xf32>
    %198 = vector.shape_cast %197 : vector<16xf32> to vector<16x1xf32>
    %199 = tpu.reciprocal %198 {approx = true} : vector<16x1xf32> -> vector<16x1xf32>
    %200 = vector.broadcast %199 : vector<16x1xf32> to vector<16x8xf32>
    %201 = arith.mulf %196, %200 : vector<16x8xf32>
    %202 = arith.truncf %201 : vector<16x8xf32> to vector<16x8xbf16>
    %203 = vector.extract_strided_slice %90 {offsets = [0, 64], sizes = [8, 32], strides = [1, 1]} : vector<8x128xbf16> to vector<8x32xbf16>
    %cst_65 = arith.constant dense<0.000000e+00> : vector<16x32xf32>
    %204 = tpu.matmul %202, %203, %cst_65 {dimension_numbers = #tpu.dot_dimension_numbers<[1], [0], [0], [1], [0, 0, 1, 1], [], []>} : vector<16x8xbf16>, vector<8x32xbf16>, vector<16x32xf32> -> vector<16x32xf32>
    %c0_66 = arith.constant 0 : index
    %c64 = arith.constant 64 : index
    %205 = vector.load %arg13[%c0_66, %c64] : memref<32x256xf32, #tpu.memory_space<vmem>>, vector<16x32xf32>
    tpu.vector_store %arg13[%c0_66, %c64], %204 {strides = array<i32>} : memref<32x256xf32, #tpu.memory_space<vmem>>, vector<16x32xf32>,
    %206 = vector.extract_strided_slice %87 {offsets = [0, 64], sizes = [16, 32], strides = [1, 1]} : vector<16x128xbf16> to vector<16x32xbf16>
    %207 = vector.extract_strided_slice %93 {offsets = [64, 0], sizes = [32, 16], strides = [1, 1]} : vector<128x16xbf16> to vector<32x16xbf16>
    %cst_67 = arith.constant dense<0.000000e+00> : vector<16x16xf32>
    %208 = tpu.matmul %206, %207, %cst_67 {dimension_numbers = #tpu.dot_dimension_numbers<[1], [0], [0], [1], [0, 0, 1, 1], [], []>} : vector<16x32xbf16>, vector<32x16xbf16>, vector<16x16xf32> -> vector<16x16xf32>
    %209 = vector.broadcast %103 : vector<1x16xf32> to vector<16x16xf32>
    %210 = arith.addf %208, %209 : vector<16x16xf32>
    %cst_68 = arith.constant dense<0xFF800000> : vector<16xf32>
    %211 = vector.multi_reduction <maximumf>, %210, %cst_68 [1] : vector<16x16xf32> to vector<16xf32>
    %212 = vector.shape_cast %211 : vector<16xf32> to vector<16x1xf32>
    %213 = vector.broadcast %212 : vector<16x1xf32> to vector<16x16xf32>
    %214 = arith.subf %210, %213 : vector<16x16xf32>
    %215 = math.exp %214 : vector<16x16xf32>
    %cst_69 = arith.constant dense<0.000000e+00> : vector<16xf32>
    %216 = vector.multi_reduction <add>, %215, %cst_69 [1] : vector<16x16xf32> to vector<16xf32>
    %217 = vector.shape_cast %216 : vector<16xf32> to vector<16x1xf32>
    %218 = tpu.reciprocal %217 {approx = true} : vector<16x1xf32> -> vector<16x1xf32>
    %219 = vector.broadcast %218 : vector<16x1xf32> to vector<16x16xf32>
    %220 = arith.mulf %215, %219 : vector<16x16xf32>
    %221 = arith.truncf %220 : vector<16x16xf32> to vector<16x16xbf16>
    %222 = vector.extract_strided_slice %88 {offsets = [0, 64], sizes = [16, 32], strides = [1, 1]} : vector<16x128xbf16> to vector<16x32xbf16>
    %cst_70 = arith.constant dense<0.000000e+00> : vector<16x32xf32>
    %223 = tpu.matmul %221, %222, %cst_70 {dimension_numbers = #tpu.dot_dimension_numbers<[1], [0], [0], [1], [0, 0, 1, 1], [], []>} : vector<16x16xbf16>, vector<16x32xbf16>, vector<16x32xf32> -> vector<16x32xf32>
    %c0_71 = arith.constant 0 : index
    %c192 = arith.constant 192 : index
    %224 = vector.load %arg13[%c0_71, %c192] : memref<32x256xf32, #tpu.memory_space<vmem>>, vector<16x32xf32>
    tpu.vector_store %arg13[%c0_71, %c192], %223 {strides = array<i32>} : memref<32x256xf32, #tpu.memory_space<vmem>>, vector<16x32xf32>,
    %225 = vector.extract_strided_slice %89 {offsets = [0, 96], sizes = [16, 32], strides = [1, 1]} : vector<16x128xbf16> to vector<16x32xbf16>
    %226 = vector.extract_strided_slice %96 {offsets = [96, 0], sizes = [32, 8], strides = [1, 1]} : vector<128x8xbf16> to vector<32x8xbf16>
    %cst_72 = arith.constant dense<0.000000e+00> : vector<16x8xf32>
    %227 = tpu.matmul %225, %226, %cst_72 {dimension_numbers = #tpu.dot_dimension_numbers<[1], [0], [0], [1], [0, 0, 1, 1], [], []>} : vector<16x32xbf16>, vector<32x8xbf16>, vector<16x8xf32> -> vector<16x8xf32>
    %228 = vector.broadcast %110 : vector<1x8xf32> to vector<16x8xf32>
    %229 = arith.addf %227, %228 : vector<16x8xf32>
    %cst_73 = arith.constant dense<0xFF800000> : vector<16xf32>
    %230 = vector.multi_reduction <maximumf>, %229, %cst_73 [1] : vector<16x8xf32> to vector<16xf32>
    %231 = vector.shape_cast %230 : vector<16xf32> to vector<16x1xf32>
    %232 = vector.broadcast %231 : vector<16x1xf32> to vector<16x8xf32>
    %233 = arith.subf %229, %232 : vector<16x8xf32>
    %234 = math.exp %233 : vector<16x8xf32>
    %cst_74 = arith.constant dense<0.000000e+00> : vector<16xf32>
    %235 = vector.multi_reduction <add>, %234, %cst_74 [1] : vector<16x8xf32> to vector<16xf32>
    %236 = vector.shape_cast %235 : vector<16xf32> to vector<16x1xf32>
    %237 = tpu.reciprocal %236 {approx = true} : vector<16x1xf32> -> vector<16x1xf32>
    %238 = vector.broadcast %237 : vector<16x1xf32> to vector<16x8xf32>
    %239 = arith.mulf %234, %238 : vector<16x8xf32>
    %240 = arith.truncf %239 : vector<16x8xf32> to vector<16x8xbf16>
    %241 = vector.extract_strided_slice %90 {offsets = [0, 96], sizes = [8, 32], strides = [1, 1]} : vector<8x128xbf16> to vector<8x32xbf16>
    %cst_75 = arith.constant dense<0.000000e+00> : vector<16x32xf32>
    %242 = tpu.matmul %240, %241, %cst_75 {dimension_numbers = #tpu.dot_dimension_numbers<[1], [0], [0], [1], [0, 0, 1, 1], [], []>} : vector<16x8xbf16>, vector<8x32xbf16>, vector<16x32xf32> -> vector<16x32xf32>
    %c0_76 = arith.constant 0 : index
    %c96 = arith.constant 96 : index
    %243 = vector.load %arg13[%c0_76, %c96] : memref<32x256xf32, #tpu.memory_space<vmem>>, vector<16x32xf32>
    tpu.vector_store %arg13[%c0_76, %c96], %242 {strides = array<i32>} : memref<32x256xf32, #tpu.memory_space<vmem>>, vector<16x32xf32>,
    %244 = vector.extract_strided_slice %87 {offsets = [0, 96], sizes = [16, 32], strides = [1, 1]} : vector<16x128xbf16> to vector<16x32xbf16>
    %245 = vector.extract_strided_slice %93 {offsets = [96, 0], sizes = [32, 16], strides = [1, 1]} : vector<128x16xbf16> to vector<32x16xbf16>
    %cst_77 = arith.constant dense<0.000000e+00> : vector<16x16xf32>
    %246 = tpu.matmul %244, %245, %cst_77 {dimension_numbers = #tpu.dot_dimension_numbers<[1], [0], [0], [1], [0, 0, 1, 1], [], []>} : vector<16x32xbf16>, vector<32x16xbf16>, vector<16x16xf32> -> vector<16x16xf32>
    %247 = vector.broadcast %103 : vector<1x16xf32> to vector<16x16xf32>
    %248 = arith.addf %246, %247 : vector<16x16xf32>
    %cst_78 = arith.constant dense<0xFF800000> : vector<16xf32>
    %249 = vector.multi_reduction <maximumf>, %248, %cst_78 [1] : vector<16x16xf32> to vector<16xf32>
    %250 = vector.shape_cast %249 : vector<16xf32> to vector<16x1xf32>
    %251 = vector.broadcast %250 : vector<16x1xf32> to vector<16x16xf32>
    %252 = arith.subf %248, %251 : vector<16x16xf32>
    %253 = math.exp %252 : vector<16x16xf32>
    %cst_79 = arith.constant dense<0.000000e+00> : vector<16xf32>
    %254 = vector.multi_reduction <add>, %253, %cst_79 [1] : vector<16x16xf32> to vector<16xf32>
    %255 = vector.shape_cast %254 : vector<16xf32> to vector<16x1xf32>
    %256 = tpu.reciprocal %255 {approx = true} : vector<16x1xf32> -> vector<16x1xf32>
    %257 = vector.broadcast %256 : vector<16x1xf32> to vector<16x16xf32>
    %258 = arith.mulf %253, %257 : vector<16x16xf32>
    %259 = arith.truncf %258 : vector<16x16xf32> to vector<16x16xbf16>
    %260 = vector.extract_strided_slice %88 {offsets = [0, 96], sizes = [16, 32], strides = [1, 1]} : vector<16x128xbf16> to vector<16x32xbf16>
    %cst_80 = arith.constant dense<0.000000e+00> : vector<16x32xf32>
    %261 = tpu.matmul %259, %260, %cst_80 {dimension_numbers = #tpu.dot_dimension_numbers<[1], [0], [0], [1], [0, 0, 1, 1], [], []>} : vector<16x16xbf16>, vector<16x32xbf16>, vector<16x32xf32> -> vector<16x32xf32>
    %c0_81 = arith.constant 0 : index
    %c224 = arith.constant 224 : index
    %262 = vector.load %arg13[%c0_81, %c224] : memref<32x256xf32, #tpu.memory_space<vmem>>, vector<16x32xf32>
    tpu.vector_store %arg13[%c0_81, %c224], %261 {strides = array<i32>} : memref<32x256xf32, #tpu.memory_space<vmem>>, vector<16x32xf32>,
    %263 = vector.extract_strided_slice %85 {offsets = [16, 0], sizes = [16, 128], strides = [1, 1]} : vector<32x512xbf16> to vector<16x128xbf16>
    %264 = vector.extract_strided_slice %85 {offsets = [16, 256], sizes = [16, 128], strides = [1, 1]} : vector<32x512xbf16> to vector<16x128xbf16>
    %265 = vector.extract_strided_slice %85 {offsets = [16, 384], sizes = [16, 128], strides = [1, 1]} : vector<32x512xbf16> to vector<16x128xbf16>
    %266 = vector.extract_strided_slice %86 {offsets = [8, 128], sizes = [8, 128], strides = [1, 1]} : vector<16x256xbf16> to vector<8x128xbf16>
    %267 = vector.extract_strided_slice %78 {offsets = [16, 128], sizes = [16, 128], strides = [1, 1]} : vector<32x512xf32> to vector<16x128xf32>
    %268 = tpu.transpose %267, [1, 0] : vector<16x128xf32> -> vector<128x16xf32>
    %269 = arith.truncf %268 : vector<128x16xf32> to vector<128x16xbf16>
    %270 = vector.extract_strided_slice %84 {offsets = [8, 0], sizes = [8, 128], strides = [1, 1]} : vector<16x256xf32> to vector<8x128xf32>
    %271 = tpu.transpose %270, [1, 0] : vector<8x128xf32> -> vector<128x8xf32>
    %272 = arith.truncf %271 : vector<128x8xf32> to vector<128x8xbf16>
    %c1_82 = arith.constant 1 : index
    %c0_83 = arith.constant 0 : index
    %c0_84 = arith.constant 0 : index
    %273 = vector.load %arg3[%c1_82, %c0_83, %c0_84] : memref<2x1x16xf32, #tpu.memory_space<vmem>>, vector<1x1x16xf32>
    %274 = vector.shape_cast %273 : vector<1x1x16xf32> to vector<1x16xf32>
    %cst_85 = arith.constant 0.000000e+00 : f32
    %275 = vector.broadcast %cst_85 : f32 to vector<1x16xf32>
    %276 = arith.cmpf one, %274, %275 : vector<1x16xf32>
    %cst_86 = arith.constant 0.000000e+00 : f32
    %cst_87 = arith.constant -1.000000e+09 : f32
    %277 = vector.broadcast %cst_86 : f32 to vector<1x16xf32>
    %278 = vector.broadcast %cst_87 : f32 to vector<1x16xf32>
    %279 = arith.select %276, %277, %278 : vector<1x16xi1>, vector<1x16xf32>
    %c1_88 = arith.constant 1 : index
    %c0_89 = arith.constant 0 : index
    %c0_90 = arith.constant 0 : index
    %280 = vector.load %arg4[%c1_88, %c0_89, %c0_90] : memref<2x1x8xf32, #tpu.memory_space<vmem>>, vector<1x1x8xf32>
    %281 = vector.shape_cast %280 : vector<1x1x8xf32> to vector<1x8xf32>
    %cst_91 = arith.constant 0.000000e+00 : f32
    %282 = vector.broadcast %cst_91 : f32 to vector<1x8xf32>
    %283 = arith.cmpf one, %281, %282 : vector<1x8xf32>
    %cst_92 = arith.constant 0.000000e+00 : f32
    %cst_93 = arith.constant -1.000000e+09 : f32
    %284 = vector.broadcast %cst_92 : f32 to vector<1x8xf32>
    %285 = vector.broadcast %cst_93 : f32 to vector<1x8xf32>
    %286 = arith.select %283, %284, %285 : vector<1x8xi1>, vector<1x8xf32>
    %287 = vector.extract_strided_slice %265 {offsets = [0, 0], sizes = [16, 32], strides = [1, 1]} : vector<16x128xbf16> to vector<16x32xbf16>
    %288 = vector.extract_strided_slice %272 {offsets = [0, 0], sizes = [32, 8], strides = [1, 1]} : vector<128x8xbf16> to vector<32x8xbf16>
    %cst_94 = arith.constant dense<0.000000e+00> : vector<16x8xf32>
    %289 = tpu.matmul %287, %288, %cst_94 {dimension_numbers = #tpu.dot_dimension_numbers<[1], [0], [0], [1], [0, 0, 1, 1], [], []>} : vector<16x32xbf16>, vector<32x8xbf16>, vector<16x8xf32> -> vector<16x8xf32>
    %290 = vector.broadcast %286 : vector<1x8xf32> to vector<16x8xf32>
    %291 = arith.addf %289, %290 : vector<16x8xf32>
    %cst_95 = arith.constant dense<0xFF800000> : vector<16xf32>
    %292 = vector.multi_reduction <maximumf>, %291, %cst_95 [1] : vector<16x8xf32> to vector<16xf32>
    %293 = vector.shape_cast %292 : vector<16xf32> to vector<16x1xf32>
    %294 = vector.broadcast %293 : vector<16x1xf32> to vector<16x8xf32>
    %295 = arith.subf %291, %294 : vector<16x8xf32>
    %296 = math.exp %295 : vector<16x8xf32>
    %cst_96 = arith.constant dense<0.000000e+00> : vector<16xf32>
    %297 = vector.multi_reduction <add>, %296, %cst_96 [1] : vector<16x8xf32> to vector<16xf32>
    %298 = vector.shape_cast %297 : vector<16xf32> to vector<16x1xf32>
    %299 = tpu.reciprocal %298 {approx = true} : vector<16x1xf32> -> vector<16x1xf32>
    %300 = vector.broadcast %299 : vector<16x1xf32> to vector<16x8xf32>
    %301 = arith.mulf %296, %300 : vector<16x8xf32>
    %302 = arith.truncf %301 : vector<16x8xf32> to vector<16x8xbf16>
    %303 = vector.extract_strided_slice %266 {offsets = [0, 0], sizes = [8, 32], strides = [1, 1]} : vector<8x128xbf16> to vector<8x32xbf16>
    %cst_97 = arith.constant dense<0.000000e+00> : vector<16x32xf32>
    %304 = tpu.matmul %302, %303, %cst_97 {dimension_numbers = #tpu.dot_dimension_numbers<[1], [0], [0], [1], [0, 0, 1, 1], [], []>} : vector<16x8xbf16>, vector<8x32xbf16>, vector<16x32xf32> -> vector<16x32xf32>
    %c16 = arith.constant 16 : index
    %c0_98 = arith.constant 0 : index
    %305 = vector.load %arg13[%c16, %c0_98] : memref<32x256xf32, #tpu.memory_space<vmem>>, vector<16x32xf32>
    tpu.vector_store %arg13[%c16, %c0_98], %304 {strides = array<i32>} : memref<32x256xf32, #tpu.memory_space<vmem>>, vector<16x32xf32>,
    %306 = vector.extract_strided_slice %263 {offsets = [0, 0], sizes = [16, 32], strides = [1, 1]} : vector<16x128xbf16> to vector<16x32xbf16>
    %307 = vector.extract_strided_slice %269 {offsets = [0, 0], sizes = [32, 16], strides = [1, 1]} : vector<128x16xbf16> to vector<32x16xbf16>
    %cst_99 = arith.constant dense<0.000000e+00> : vector<16x16xf32>
    %308 = tpu.matmul %306, %307, %cst_99 {dimension_numbers = #tpu.dot_dimension_numbers<[1], [0], [0], [1], [0, 0, 1, 1], [], []>} : vector<16x32xbf16>, vector<32x16xbf16>, vector<16x16xf32> -> vector<16x16xf32>
    %309 = vector.broadcast %279 : vector<1x16xf32> to vector<16x16xf32>
    %310 = arith.addf %308, %309 : vector<16x16xf32>
    %cst_100 = arith.constant dense<0xFF800000> : vector<16xf32>
    %311 = vector.multi_reduction <maximumf>, %310, %cst_100 [1] : vector<16x16xf32> to vector<16xf32>
    %312 = vector.shape_cast %311 : vector<16xf32> to vector<16x1xf32>
    %313 = vector.broadcast %312 : vector<16x1xf32> to vector<16x16xf32>
    %314 = arith.subf %310, %313 : vector<16x16xf32>
    %315 = math.exp %314 : vector<16x16xf32>
    %cst_101 = arith.constant dense<0.000000e+00> : vector<16xf32>
    %316 = vector.multi_reduction <add>, %315, %cst_101 [1] : vector<16x16xf32> to vector<16xf32>
    %317 = vector.shape_cast %316 : vector<16xf32> to vector<16x1xf32>
    %318 = tpu.reciprocal %317 {approx = true} : vector<16x1xf32> -> vector<16x1xf32>
    %319 = vector.broadcast %318 : vector<16x1xf32> to vector<16x16xf32>
    %320 = arith.mulf %315, %319 : vector<16x16xf32>
    %321 = arith.truncf %320 : vector<16x16xf32> to vector<16x16xbf16>
    %322 = vector.extract_strided_slice %264 {offsets = [0, 0], sizes = [16, 32], strides = [1, 1]} : vector<16x128xbf16> to vector<16x32xbf16>
    %cst_102 = arith.constant dense<0.000000e+00> : vector<16x32xf32>
    %323 = tpu.matmul %321, %322, %cst_102 {dimension_numbers = #tpu.dot_dimension_numbers<[1], [0], [0], [1], [0, 0, 1, 1], [], []>} : vector<16x16xbf16>, vector<16x32xbf16>, vector<16x32xf32> -> vector<16x32xf32>
    %c16_103 = arith.constant 16 : index
    %c128_104 = arith.constant 128 : index
    %324 = vector.load %arg13[%c16_103, %c128_104] : memref<32x256xf32, #tpu.memory_space<vmem>>, vector<16x32xf32>
    tpu.vector_store %arg13[%c16_103, %c128_104], %323 {strides = array<i32>} : memref<32x256xf32, #tpu.memory_space<vmem>>, vector<16x32xf32>,
    %325 = vector.extract_strided_slice %265 {offsets = [0, 32], sizes = [16, 32], strides = [1, 1]} : vector<16x128xbf16> to vector<16x32xbf16>
    %326 = vector.extract_strided_slice %272 {offsets = [32, 0], sizes = [32, 8], strides = [1, 1]} : vector<128x8xbf16> to vector<32x8xbf16>
    %cst_105 = arith.constant dense<0.000000e+00> : vector<16x8xf32>
    %327 = tpu.matmul %325, %326, %cst_105 {dimension_numbers = #tpu.dot_dimension_numbers<[1], [0], [0], [1], [0, 0, 1, 1], [], []>} : vector<16x32xbf16>, vector<32x8xbf16>, vector<16x8xf32> -> vector<16x8xf32>
    %328 = vector.broadcast %286 : vector<1x8xf32> to vector<16x8xf32>
    %329 = arith.addf %327, %328 : vector<16x8xf32>
    %cst_106 = arith.constant dense<0xFF800000> : vector<16xf32>
    %330 = vector.multi_reduction <maximumf>, %329, %cst_106 [1] : vector<16x8xf32> to vector<16xf32>
    %331 = vector.shape_cast %330 : vector<16xf32> to vector<16x1xf32>
    %332 = vector.broadcast %331 : vector<16x1xf32> to vector<16x8xf32>
    %333 = arith.subf %329, %332 : vector<16x8xf32>
    %334 = math.exp %333 : vector<16x8xf32>
    %cst_107 = arith.constant dense<0.000000e+00> : vector<16xf32>
    %335 = vector.multi_reduction <add>, %334, %cst_107 [1] : vector<16x8xf32> to vector<16xf32>
    %336 = vector.shape_cast %335 : vector<16xf32> to vector<16x1xf32>
    %337 = tpu.reciprocal %336 {approx = true} : vector<16x1xf32> -> vector<16x1xf32>
    %338 = vector.broadcast %337 : vector<16x1xf32> to vector<16x8xf32>
    %339 = arith.mulf %334, %338 : vector<16x8xf32>
    %340 = arith.truncf %339 : vector<16x8xf32> to vector<16x8xbf16>
    %341 = vector.extract_strided_slice %266 {offsets = [0, 32], sizes = [8, 32], strides = [1, 1]} : vector<8x128xbf16> to vector<8x32xbf16>
    %cst_108 = arith.constant dense<0.000000e+00> : vector<16x32xf32>
    %342 = tpu.matmul %340, %341, %cst_108 {dimension_numbers = #tpu.dot_dimension_numbers<[1], [0], [0], [1], [0, 0, 1, 1], [], []>} : vector<16x8xbf16>, vector<8x32xbf16>, vector<16x32xf32> -> vector<16x32xf32>
    %c16_109 = arith.constant 16 : index
    %c32_110 = arith.constant 32 : index
    %343 = vector.load %arg13[%c16_109, %c32_110] : memref<32x256xf32, #tpu.memory_space<vmem>>, vector<16x32xf32>
    tpu.vector_store %arg13[%c16_109, %c32_110], %342 {strides = array<i32>} : memref<32x256xf32, #tpu.memory_space<vmem>>, vector<16x32xf32>,
    %344 = vector.extract_strided_slice %263 {offsets = [0, 32], sizes = [16, 32], strides = [1, 1]} : vector<16x128xbf16> to vector<16x32xbf16>
    %345 = vector.extract_strided_slice %269 {offsets = [32, 0], sizes = [32, 16], strides = [1, 1]} : vector<128x16xbf16> to vector<32x16xbf16>
    %cst_111 = arith.constant dense<0.000000e+00> : vector<16x16xf32>
    %346 = tpu.matmul %344, %345, %cst_111 {dimension_numbers = #tpu.dot_dimension_numbers<[1], [0], [0], [1], [0, 0, 1, 1], [], []>} : vector<16x32xbf16>, vector<32x16xbf16>, vector<16x16xf32> -> vector<16x16xf32>
    %347 = vector.broadcast %279 : vector<1x16xf32> to vector<16x16xf32>
    %348 = arith.addf %346, %347 : vector<16x16xf32>
    %cst_112 = arith.constant dense<0xFF800000> : vector<16xf32>
    %349 = vector.multi_reduction <maximumf>, %348, %cst_112 [1] : vector<16x16xf32> to vector<16xf32>
    %350 = vector.shape_cast %349 : vector<16xf32> to vector<16x1xf32>
    %351 = vector.broadcast %350 : vector<16x1xf32> to vector<16x16xf32>
    %352 = arith.subf %348, %351 : vector<16x16xf32>
    %353 = math.exp %352 : vector<16x16xf32>
    %cst_113 = arith.constant dense<0.000000e+00> : vector<16xf32>
    %354 = vector.multi_reduction <add>, %353, %cst_113 [1] : vector<16x16xf32> to vector<16xf32>
    %355 = vector.shape_cast %354 : vector<16xf32> to vector<16x1xf32>
    %356 = tpu.reciprocal %355 {approx = true} : vector<16x1xf32> -> vector<16x1xf32>
    %357 = vector.broadcast %356 : vector<16x1xf32> to vector<16x16xf32>
    %358 = arith.mulf %353, %357 : vector<16x16xf32>
    %359 = arith.truncf %358 : vector<16x16xf32> to vector<16x16xbf16>
    %360 = vector.extract_strided_slice %264 {offsets = [0, 32], sizes = [16, 32], strides = [1, 1]} : vector<16x128xbf16> to vector<16x32xbf16>
    %cst_114 = arith.constant dense<0.000000e+00> : vector<16x32xf32>
    %361 = tpu.matmul %359, %360, %cst_114 {dimension_numbers = #tpu.dot_dimension_numbers<[1], [0], [0], [1], [0, 0, 1, 1], [], []>} : vector<16x16xbf16>, vector<16x32xbf16>, vector<16x32xf32> -> vector<16x32xf32>
    %c16_115 = arith.constant 16 : index
    %c160_116 = arith.constant 160 : index
    %362 = vector.load %arg13[%c16_115, %c160_116] : memref<32x256xf32, #tpu.memory_space<vmem>>, vector<16x32xf32>
    tpu.vector_store %arg13[%c16_115, %c160_116], %361 {strides = array<i32>} : memref<32x256xf32, #tpu.memory_space<vmem>>, vector<16x32xf32>,
    %363 = vector.extract_strided_slice %265 {offsets = [0, 64], sizes = [16, 32], strides = [1, 1]} : vector<16x128xbf16> to vector<16x32xbf16>
    %364 = vector.extract_strided_slice %272 {offsets = [64, 0], sizes = [32, 8], strides = [1, 1]} : vector<128x8xbf16> to vector<32x8xbf16>
    %cst_117 = arith.constant dense<0.000000e+00> : vector<16x8xf32>
    %365 = tpu.matmul %363, %364, %cst_117 {dimension_numbers = #tpu.dot_dimension_numbers<[1], [0], [0], [1], [0, 0, 1, 1], [], []>} : vector<16x32xbf16>, vector<32x8xbf16>, vector<16x8xf32> -> vector<16x8xf32>
    %366 = vector.broadcast %286 : vector<1x8xf32> to vector<16x8xf32>
    %367 = arith.addf %365, %366 : vector<16x8xf32>
    %cst_118 = arith.constant dense<0xFF800000> : vector<16xf32>
    %368 = vector.multi_reduction <maximumf>, %367, %cst_118 [1] : vector<16x8xf32> to vector<16xf32>
    %369 = vector.shape_cast %368 : vector<16xf32> to vector<16x1xf32>
    %370 = vector.broadcast %369 : vector<16x1xf32> to vector<16x8xf32>
    %371 = arith.subf %367, %370 : vector<16x8xf32>
    %372 = math.exp %371 : vector<16x8xf32>
    %cst_119 = arith.constant dense<0.000000e+00> : vector<16xf32>
    %373 = vector.multi_reduction <add>, %372, %cst_119 [1] : vector<16x8xf32> to vector<16xf32>
    %374 = vector.shape_cast %373 : vector<16xf32> to vector<16x1xf32>
    %375 = tpu.reciprocal %374 {approx = true} : vector<16x1xf32> -> vector<16x1xf32>
    %376 = vector.broadcast %375 : vector<16x1xf32> to vector<16x8xf32>
    %377 = arith.mulf %372, %376 : vector<16x8xf32>
    %378 = arith.truncf %377 : vector<16x8xf32> to vector<16x8xbf16>
    %379 = vector.extract_strided_slice %266 {offsets = [0, 64], sizes = [8, 32], strides = [1, 1]} : vector<8x128xbf16> to vector<8x32xbf16>
    %cst_120 = arith.constant dense<0.000000e+00> : vector<16x32xf32>
    %380 = tpu.matmul %378, %379, %cst_120 {dimension_numbers = #tpu.dot_dimension_numbers<[1], [0], [0], [1], [0, 0, 1, 1], [], []>} : vector<16x8xbf16>, vector<8x32xbf16>, vector<16x32xf32> -> vector<16x32xf32>
    %c16_121 = arith.constant 16 : index
    %c64_122 = arith.constant 64 : index
    %381 = vector.load %arg13[%c16_121, %c64_122] : memref<32x256xf32, #tpu.memory_space<vmem>>, vector<16x32xf32>
    tpu.vector_store %arg13[%c16_121, %c64_122], %380 {strides = array<i32>} : memref<32x256xf32, #tpu.memory_space<vmem>>, vector<16x32xf32>,
    %382 = vector.extract_strided_slice %263 {offsets = [0, 64], sizes = [16, 32], strides = [1, 1]} : vector<16x128xbf16> to vector<16x32xbf16>
    %383 = vector.extract_strided_slice %269 {offsets = [64, 0], sizes = [32, 16], strides = [1, 1]} : vector<128x16xbf16> to vector<32x16xbf16>
    %cst_123 = arith.constant dense<0.000000e+00> : vector<16x16xf32>
    %384 = tpu.matmul %382, %383, %cst_123 {dimension_numbers = #tpu.dot_dimension_numbers<[1], [0], [0], [1], [0, 0, 1, 1], [], []>} : vector<16x32xbf16>, vector<32x16xbf16>, vector<16x16xf32> -> vector<16x16xf32>
    %385 = vector.broadcast %279 : vector<1x16xf32> to vector<16x16xf32>
    %386 = arith.addf %384, %385 : vector<16x16xf32>
    %cst_124 = arith.constant dense<0xFF800000> : vector<16xf32>
    %387 = vector.multi_reduction <maximumf>, %386, %cst_124 [1] : vector<16x16xf32> to vector<16xf32>
    %388 = vector.shape_cast %387 : vector<16xf32> to vector<16x1xf32>
    %389 = vector.broadcast %388 : vector<16x1xf32> to vector<16x16xf32>
    %390 = arith.subf %386, %389 : vector<16x16xf32>
    %391 = math.exp %390 : vector<16x16xf32>
    %cst_125 = arith.constant dense<0.000000e+00> : vector<16xf32>
    %392 = vector.multi_reduction <add>, %391, %cst_125 [1] : vector<16x16xf32> to vector<16xf32>
    %393 = vector.shape_cast %392 : vector<16xf32> to vector<16x1xf32>
    %394 = tpu.reciprocal %393 {approx = true} : vector<16x1xf32> -> vector<16x1xf32>
    %395 = vector.broadcast %394 : vector<16x1xf32> to vector<16x16xf32>
    %396 = arith.mulf %391, %395 : vector<16x16xf32>
    %397 = arith.truncf %396 : vector<16x16xf32> to vector<16x16xbf16>
    %398 = vector.extract_strided_slice %264 {offsets = [0, 64], sizes = [16, 32], strides = [1, 1]} : vector<16x128xbf16> to vector<16x32xbf16>
    %cst_126 = arith.constant dense<0.000000e+00> : vector<16x32xf32>
    %399 = tpu.matmul %397, %398, %cst_126 {dimension_numbers = #tpu.dot_dimension_numbers<[1], [0], [0], [1], [0, 0, 1, 1], [], []>} : vector<16x16xbf16>, vector<16x32xbf16>, vector<16x32xf32> -> vector<16x32xf32>
    %c16_127 = arith.constant 16 : index
    %c192_128 = arith.constant 192 : index
    %400 = vector.load %arg13[%c16_127, %c192_128] : memref<32x256xf32, #tpu.memory_space<vmem>>, vector<16x32xf32>
    tpu.vector_store %arg13[%c16_127, %c192_128], %399 {strides = array<i32>} : memref<32x256xf32, #tpu.memory_space<vmem>>, vector<16x32xf32>,
    %401 = vector.extract_strided_slice %265 {offsets = [0, 96], sizes = [16, 32], strides = [1, 1]} : vector<16x128xbf16> to vector<16x32xbf16>
    %402 = vector.extract_strided_slice %272 {offsets = [96, 0], sizes = [32, 8], strides = [1, 1]} : vector<128x8xbf16> to vector<32x8xbf16>
    %cst_129 = arith.constant dense<0.000000e+00> : vector<16x8xf32>
    %403 = tpu.matmul %401, %402, %cst_129 {dimension_numbers = #tpu.dot_dimension_numbers<[1], [0], [0], [1], [0, 0, 1, 1], [], []>} : vector<16x32xbf16>, vector<32x8xbf16>, vector<16x8xf32> -> vector<16x8xf32>
    %404 = vector.broadcast %286 : vector<1x8xf32> to vector<16x8xf32>
    %405 = arith.addf %403, %404 : vector<16x8xf32>
    %cst_130 = arith.constant dense<0xFF800000> : vector<16xf32>
    %406 = vector.multi_reduction <maximumf>, %405, %cst_130 [1] : vector<16x8xf32> to vector<16xf32>
    %407 = vector.shape_cast %406 : vector<16xf32> to vector<16x1xf32>
    %408 = vector.broadcast %407 : vector<16x1xf32> to vector<16x8xf32>
    %409 = arith.subf %405, %408 : vector<16x8xf32>
    %410 = math.exp %409 : vector<16x8xf32>
    %cst_131 = arith.constant dense<0.000000e+00> : vector<16xf32>
    %411 = vector.multi_reduction <add>, %410, %cst_131 [1] : vector<16x8xf32> to vector<16xf32>
    %412 = vector.shape_cast %411 : vector<16xf32> to vector<16x1xf32>
    %413 = tpu.reciprocal %412 {approx = true} : vector<16x1xf32> -> vector<16x1xf32>
    %414 = vector.broadcast %413 : vector<16x1xf32> to vector<16x8xf32>
    %415 = arith.mulf %410, %414 : vector<16x8xf32>
    %416 = arith.truncf %415 : vector<16x8xf32> to vector<16x8xbf16>
    %417 = vector.extract_strided_slice %266 {offsets = [0, 96], sizes = [8, 32], strides = [1, 1]} : vector<8x128xbf16> to vector<8x32xbf16>
    %cst_132 = arith.constant dense<0.000000e+00> : vector<16x32xf32>
    %418 = tpu.matmul %416, %417, %cst_132 {dimension_numbers = #tpu.dot_dimension_numbers<[1], [0], [0], [1], [0, 0, 1, 1], [], []>} : vector<16x8xbf16>, vector<8x32xbf16>, vector<16x32xf32> -> vector<16x32xf32>
    %c16_133 = arith.constant 16 : index
    %c96_134 = arith.constant 96 : index
    %419 = vector.load %arg13[%c16_133, %c96_134] : memref<32x256xf32, #tpu.memory_space<vmem>>, vector<16x32xf32>
    tpu.vector_store %arg13[%c16_133, %c96_134], %418 {strides = array<i32>} : memref<32x256xf32, #tpu.memory_space<vmem>>, vector<16x32xf32>,
    %420 = vector.extract_strided_slice %263 {offsets = [0, 96], sizes = [16, 32], strides = [1, 1]} : vector<16x128xbf16> to vector<16x32xbf16>
    %421 = vector.extract_strided_slice %269 {offsets = [96, 0], sizes = [32, 16], strides = [1, 1]} : vector<128x16xbf16> to vector<32x16xbf16>
    %cst_135 = arith.constant dense<0.000000e+00> : vector<16x16xf32>
    %422 = tpu.matmul %420, %421, %cst_135 {dimension_numbers = #tpu.dot_dimension_numbers<[1], [0], [0], [1], [0, 0, 1, 1], [], []>} : vector<16x32xbf16>, vector<32x16xbf16>, vector<16x16xf32> -> vector<16x16xf32>
    %423 = vector.broadcast %279 : vector<1x16xf32> to vector<16x16xf32>
    %424 = arith.addf %422, %423 : vector<16x16xf32>
    %cst_136 = arith.constant dense<0xFF800000> : vector<16xf32>
    %425 = vector.multi_reduction <maximumf>, %424, %cst_136 [1] : vector<16x16xf32> to vector<16xf32>
    %426 = vector.shape_cast %425 : vector<16xf32> to vector<16x1xf32>
    %427 = vector.broadcast %426 : vector<16x1xf32> to vector<16x16xf32>
    %428 = arith.subf %424, %427 : vector<16x16xf32>
    %429 = math.exp %428 : vector<16x16xf32>
    %cst_137 = arith.constant dense<0.000000e+00> : vector<16xf32>
    %430 = vector.multi_reduction <add>, %429, %cst_137 [1] : vector<16x16xf32> to vector<16xf32>
    %431 = vector.shape_cast %430 : vector<16xf32> to vector<16x1xf32>
    %432 = tpu.reciprocal %431 {approx = true} : vector<16x1xf32> -> vector<16x1xf32>
    %433 = vector.broadcast %432 : vector<16x1xf32> to vector<16x16xf32>
    %434 = arith.mulf %429, %433 : vector<16x16xf32>
    %435 = arith.truncf %434 : vector<16x16xf32> to vector<16x16xbf16>
    %436 = vector.extract_strided_slice %264 {offsets = [0, 96], sizes = [16, 32], strides = [1, 1]} : vector<16x128xbf16> to vector<16x32xbf16>
    %cst_138 = arith.constant dense<0.000000e+00> : vector<16x32xf32>
    %437 = tpu.matmul %435, %436, %cst_138 {dimension_numbers = #tpu.dot_dimension_numbers<[1], [0], [0], [1], [0, 0, 1, 1], [], []>} : vector<16x16xbf16>, vector<16x32xbf16>, vector<16x32xf32> -> vector<16x32xf32>
    %c16_139 = arith.constant 16 : index
    %c224_140 = arith.constant 224 : index
    %438 = vector.load %arg13[%c16_139, %c224_140] : memref<32x256xf32, #tpu.memory_space<vmem>>, vector<16x32xf32>
    tpu.vector_store %arg13[%c16_139, %c224_140], %437 {strides = array<i32>} : memref<32x256xf32, #tpu.memory_space<vmem>>, vector<16x32xf32>,
    %c0_141 = arith.constant 0 : index
    %c0_142 = arith.constant 0 : index
    %439 = vector.load %arg13[%c0_141, %c0_142] : memref<32x256xf32, #tpu.memory_space<vmem>>, vector<32x256xf32>
    %440 = arith.truncf %439 : vector<32x256xf32> to vector<32x256xbf16>
    %c0_143 = arith.constant 0 : index
    %c0_144 = arith.constant 0 : index
    %441 = vector.load %arg9[%c0_143, %c0_144] : memref<256x128xbf16, #tpu.memory_space<vmem>>, vector<256x128xbf16>
    %cst_145 = arith.constant dense<0.000000e+00> : vector<32x128xf32>
    %442 = tpu.matmul %440, %441, %cst_145 {dimension_numbers = #tpu.dot_dimension_numbers<[1], [0], [0], [1], [0, 0, 1, 1], [], []>} : vector<32x256xbf16>, vector<256x128xbf16>, vector<32x128xf32> -> vector<32x128xf32>
    %443 = vector.shape_cast %20 : vector<128xf32> to vector<1x128xf32>
    %444 = vector.broadcast %443 : vector<1x128xf32> to vector<32x128xf32>
    %445 = arith.addf %442, %444 : vector<32x128xf32>
    %446 = arith.addf %1, %445 : vector<32x128xf32>
    %cst_146 = arith.constant dense<0.000000e+00> : vector<32xf32>
    %447 = vector.multi_reduction <add>, %446, %cst_146 [1] : vector<32x128xf32> to vector<32xf32>
    %448 = vector.shape_cast %447 : vector<32xf32> to vector<32x1xf32>
    %cst_147 = arith.constant 1.280000e+02 : f32
    %449 = vector.broadcast %cst_147 : f32 to vector<32x1xf32>
    %450 = arith.divf %448, %449 : vector<32x1xf32>
    %451 = vector.broadcast %450 : vector<32x1xf32> to vector<32x128xf32>
    %452 = arith.subf %446, %451 : vector<32x128xf32>
    %453 = arith.mulf %452, %452 : vector<32x128xf32>
    %cst_148 = arith.constant dense<0.000000e+00> : vector<32xf32>
    %454 = vector.multi_reduction <add>, %453, %cst_148 [1] : vector<32x128xf32> to vector<32xf32>
    %455 = vector.shape_cast %454 : vector<32xf32> to vector<32x1xf32>
    %cst_149 = arith.constant 0.00787401571 : f32
    %456 = vector.broadcast %cst_149 : f32 to vector<32x1xf32>
    %457 = arith.mulf %455, %456 : vector<32x1xf32>
    %458 = math.sqrt %457 : vector<32x1xf32>
    %cst_150 = arith.constant 9.99999997E-7 : f32
    %459 = vector.broadcast %cst_150 : f32 to vector<32x1xf32>
    %460 = arith.addf %458, %459 : vector<32x1xf32>
    %461 = tpu.reciprocal %460 : vector<32x1xf32> -> vector<32x1xf32>
    %462 = vector.broadcast %450 : vector<32x1xf32> to vector<32x128xf32>
    %463 = arith.subf %446, %462 : vector<32x128xf32>
    %464 = vector.shape_cast %13 : vector<128xf32> to vector<1x128xf32>
    %465 = vector.broadcast %464 : vector<1x128xf32> to vector<32x128xf32>
    %466 = arith.mulf %465, %463 : vector<32x128xf32>
    %467 = vector.broadcast %461 : vector<32x1xf32> to vector<32x128xf32>
    %468 = arith.mulf %466, %467 : vector<32x128xf32>
    %469 = vector.shape_cast %15 : vector<128xf32> to vector<1x128xf32>
    %470 = vector.broadcast %469 : vector<1x128xf32> to vector<32x128xf32>
    %471 = arith.addf %468, %470 : vector<32x128xf32>
    %472 = arith.truncf %471 : vector<32x128xf32> to vector<32x128xbf16>
    %c0_151 = arith.constant 0 : index
    %c0_152 = arith.constant 0 : index
    %473 = vector.load %arg10[%c0_151, %c0_152] : memref<128x256xbf16, #tpu.memory_space<vmem>>, vector<128x256xbf16>
    %cst_153 = arith.constant dense<0.000000e+00> : vector<32x256xf32>
    %474 = tpu.matmul %472, %473, %cst_153 {dimension_numbers = #tpu.dot_dimension_numbers<[1], [0], [0], [1], [0, 0, 1, 1], [], []>} : vector<32x128xbf16>, vector<128x256xbf16>, vector<32x256xf32> -> vector<32x256xf32>
    %475 = vector.shape_cast %21 : vector<256xf32> to vector<1x256xf32>
    %476 = vector.broadcast %475 : vector<1x256xf32> to vector<32x256xf32>
    %477 = arith.addf %474, %476 : vector<32x256xf32>
    %cst_154 = arith.constant 0.000000e+00 : f32
    %478 = vector.broadcast %cst_154 : f32 to vector<32x256xf32>
    %479 = arith.maximumf %477, %478 : vector<32x256xf32>
    %480 = arith.truncf %479 : vector<32x256xf32> to vector<32x256xbf16>
    %c0_155 = arith.constant 0 : index
    %c0_156 = arith.constant 0 : index
    %481 = vector.load %arg11[%c0_155, %c0_156] : memref<256x128xbf16, #tpu.memory_space<vmem>>, vector<256x128xbf16>
    %cst_157 = arith.constant dense<0.000000e+00> : vector<32x128xf32>
    %482 = tpu.matmul %480, %481, %cst_157 {dimension_numbers = #tpu.dot_dimension_numbers<[1], [0], [0], [1], [0, 0, 1, 1], [], []>} : vector<32x256xbf16>, vector<256x128xbf16>, vector<32x128xf32> -> vector<32x128xf32>
    %483 = vector.shape_cast %22 : vector<128xf32> to vector<1x128xf32>
    %484 = vector.broadcast %483 : vector<1x128xf32> to vector<32x128xf32>
    %485 = arith.addf %482, %484 : vector<32x128xf32>
    %486 = arith.addf %446, %485 : vector<32x128xf32>
    %487 = vector.shape_cast %486 : vector<32x128xf32> to vector<2x16x128xf32>
    %c0_158 = arith.constant 0 : index
    %c0_159 = arith.constant 0 : index
    %c0_160 = arith.constant 0 : index
    %488 = vector.load %arg12[%c0_158, %c0_159, %c0_160] : memref<2x16x128xf32, #tpu.memory_space<vmem>>, vector<2x16x128xf32>
    tpu.vector_store %arg12[%c0_158, %c0_159, %c0_160], %487 {strides = array<i32>} : memref<2x16x128xf32, #tpu.memory_space<vmem>>, vector<2x16x128xf32>,
    return
  }
  func.func @transform_0(%arg0: i32) -> (i32, i32, i32) {
    %c0_i32 = arith.constant 0 : i32
    %c0_i32_0 = arith.constant 0 : i32
    %c0_i32_1 = arith.constant 0 : i32
    return %arg0, %c0_i32, %c0_i32_0 : i32, i32, i32
  }
  func.func @transform_1(%arg0: i32) -> (i32, i32, i32) {
    %c0_i32 = arith.constant 0 : i32
    %c0_i32_0 = arith.constant 0 : i32
    %c0_i32_1 = arith.constant 0 : i32
    return %arg0, %c0_i32, %c0_i32_0 : i32, i32, i32
  }
  func.func @transform_2(%arg0: i32) -> (i32, i32, i32) {
    %c0_i32 = arith.constant 0 : i32
    %c0_i32_0 = arith.constant 0 : i32
    %c0_i32_1 = arith.constant 0 : i32
    return %arg0, %c0_i32, %c0_i32_0 : i32, i32, i32
  }
  func.func @transform_3(%arg0: i32) -> (i32, i32, i32) {
    %c0_i32 = arith.constant 0 : i32
    %c0_i32_0 = arith.constant 0 : i32
    %c0_i32_1 = arith.constant 0 : i32
    return %arg0, %c0_i32, %c0_i32_0 : i32, i32, i32
  }
  func.func @transform_4(%arg0: i32) -> (i32, i32) {
    %c0_i32 = arith.constant 0 : i32
    %c0_i32_0 = arith.constant 0 : i32
    %c0_i32_1 = arith.constant 0 : i32
    return %c0_i32, %c0_i32_0 : i32, i32
  }
  func.func @transform_5(%arg0: i32) -> (i32, i32) {
    %c0_i32 = arith.constant 0 : i32
    %c0_i32_0 = arith.constant 0 : i32
    %c0_i32_1 = arith.constant 0 : i32
    return %c0_i32, %c0_i32_0 : i32, i32
  }
  func.func @transform_6(%arg0: i32) -> (i32, i32) {
    %c0_i32 = arith.constant 0 : i32
    %c0_i32_0 = arith.constant 0 : i32
    %c0_i32_1 = arith.constant 0 : i32
    return %c0_i32, %c0_i32_0 : i32, i32
  }
  func.func @transform_7(%arg0: i32) -> (i32, i32) {
    %c0_i32 = arith.constant 0 : i32
    %c0_i32_0 = arith.constant 0 : i32
    %c0_i32_1 = arith.constant 0 : i32
    return %c0_i32, %c0_i32_0 : i32, i32
  }
  func.func @transform_8(%arg0: i32) -> (i32, i32) {
    %c0_i32 = arith.constant 0 : i32
    %c0_i32_0 = arith.constant 0 : i32
    %c0_i32_1 = arith.constant 0 : i32
    return %c0_i32, %c0_i32_0 : i32, i32
  }
  func.func @transform_9(%arg0: i32) -> (i32, i32) {
    %c0_i32 = arith.constant 0 : i32
    %c0_i32_0 = arith.constant 0 : i32
    %c0_i32_1 = arith.constant 0 : i32
    return %c0_i32, %c0_i32_0 : i32, i32
  }
  func.func @transform_10(%arg0: i32) -> (i32, i32) {
    %c0_i32 = arith.constant 0 : i32
    %c0_i32_0 = arith.constant 0 : i32
    %c0_i32_1 = arith.constant 0 : i32
    return %c0_i32, %c0_i32_0 : i32, i32
  }
  func.func @transform_11(%arg0: i32) -> (i32, i32, i32) {
    %c0_i32 = arith.constant 0 : i32
    %c0_i32_0 = arith.constant 0 : i32
    %c0_i32_1 = arith.constant 0 : i32
    return %arg0, %c0_i32, %c0_i32_0 : i32, i32, i32
  }
}

</mosaic_0001>

<llo_original>
// kernel: encoder_layer_forward.1
$region0: #{encoder_layer_forward.1}
  #allocation0 [shape = 'u32[]', space=smem, size = 0x4, offset = 0x4, fixed_abs, tag = 'smem constant byte address 0x4 - core index']
  #allocation1 [shape = 'u32[144,128]{1,0:T(1,128)}', space=vmem, size = 0x12000, scoped, tag = 'internal scratch']
  #allocation2 [shape = 'f32[32,256]{1,0:T(8,128)}', space=vmem, size = 0x8000, scoped, tag = 'scratch operand']
  %s0 = inlined_call_operand.hbm [shape: f32[2,16,128], index: 0, kind: input, shape index: {}]
  %s1 = inlined_call_operand.vmem [shape: f32[2,8,128], index: 1, kind: input, shape index: {}]
  %s2 = inlined_call_operand.vmem [shape: f32[2,1,16], index: 2, kind: input, shape index: {}]
  %s3 = inlined_call_operand.vmem [shape: f32[2,1,8], index: 3, kind: input, shape index: {}]
  %s4 = inlined_call_operand.hbm [shape: f32[6,128], index: 4, kind: input, shape index: {}]
  %s5 = inlined_call_operand.hbm [shape: f32[1,1280], index: 5, kind: input, shape index: {}]
  %s6 = inlined_call_operand.hbm [shape: bf16[128,512], index: 6, kind: input, shape index: {}]
  %s7 = inlined_call_operand.hbm [shape: bf16[128,256], index: 7, kind: input, shape index: {}]
  %s8 = inlined_call_operand.hbm [shape: bf16[256,128], index: 8, kind: input, shape index: {}]
  %s9 = inlined_call_operand.hbm [shape: bf16[128,256], index: 9, kind: input, shape index: {}]
  %s10 = inlined_call_operand.hbm [shape: bf16[256,128], index: 10, kind: input, shape index: {}]
  %s11 = inlined_call_operand.hbm [shape: f32[2,16,128], index: 11, kind: output, shape index: {}]
  %s12 = sld [smem:[#allocation0]]
  $region86: #{encoder_layer_forward.1} parent=0
    _
  %s14 = ssub.s32 1, %s12
  %s15 = scalar_select 0, %s14, %s12
  $region1: #{encoder_layer_forward.1} parent=0
    #allocation3 [shape = 'u8[16384]{0}', space=vmem, size = 0x4000, scoped, tag = 'input window, operand 0, single buffered']
    #allocation4 [shape = 's32[1]{0}', space=sflag, size = 0x4, scoped, tag = 'scoped memory for encoder_layer_forward.1']
    #allocation5 [shape = 's32[1]{0}', space=sflag, size = 0x4, scoped, tag = 'scoped memory for encoder_layer_forward.1']
    #allocation6 [shape = 'u8[4096]{0}', space=vmem, size = 0x1000, scoped, tag = 'input window, operand 4, single buffered']
    #allocation7 [shape = 's32[1]{0}', space=sflag, size = 0x4, scoped, tag = 'scoped memory for encoder_layer_forward.1']
    #allocation8 [shape = 'u8[5120]{0}', space=vmem, size = 0x1400, scoped, tag = 'input window, operand 5, single buffered']
    #allocation9 [shape = 'u8[131072]{0}', space=vmem, size = 0x20000, scoped, tag = 'input window, operand 6, single buffered']
    #allocation10 [shape = 's32[1]{0}', space=sflag, size = 0x4, scoped, tag = 'scoped memory for encoder_layer_forward.1']
    #allocation11 [shape = 'u8[65536]{0}', space=vmem, size = 0x10000, scoped, tag = 'input window, operand 7, single buffered']
    #allocation12 [shape = 'u8[65536]{0}', space=vmem, size = 0x10000, scoped, tag = 'input window, operand 8, single buffered']
    #allocation13 [shape = 's32[1]{0}', space=sflag, size = 0x4, scoped, tag = 'scoped memory for encoder_layer_forward.1']
    #allocation14 [shape = 'u8[65536]{0}', space=vmem, size = 0x10000, scoped, tag = 'input window, operand 9, single buffered']
    #allocation15 [shape = 'u8[65536]{0}', space=vmem, size = 0x10000, scoped, tag = 'input window, operand 10, single buffered']
    #allocation16 [shape = 's32[1]{0}', space=sflag, size = 0x4, scoped, tag = 'scoped memory for encoder_layer_forward.1']
    #allocation17 [shape = 'u8[16384]{0}', space=vmem, size = 0x4000, scoped, tag = 'output window, operand 0, single buffered']
    %16 = vsyncpa [#allocation4], 0
    %17 = vsyncpa [#allocation7], 0
    %18 = vsyncpa [#allocation10], 0
    %19 = vsyncpa [#allocation13], 0
    %20 = vsyncpa [#allocation16], 0
    %21 = vsyncpa [#allocation5], 0
    // Predicated region
    $region2: #{encoder_layer_forward.1} parent=1 // pred_check
      _
    $region3: #{encoder_layer_forward.1} parent=1 // pred_check_branch
      %23 = sbr.rel (0) target = $region5
    $region4: #{encoder_layer_forward.1} parent=1 // pred_region
      %s25 = ssub.s32 512, 512
      %26 = vsyncadd [#allocation4], %s25
      %s27 = sshll.u32 [#allocation3], 4
      %s28 = int_to_ptr.vmem [resolvable:$true] %s27
      %33 = dma.hbm_to_vmem [thread:$0]  %s0, 512, %s28, [#allocation4], 128, 128, 8
    $region5: #{encoder_layer_forward.1} parent=1 // pred_fallthru
      _
    // Predicated region
    $region6: #{encoder_layer_forward.1} parent=1 // pred_check
      _
    $region7: #{encoder_layer_forward.1} parent=1 // pred_check_branch
      %35 = sbr.rel (0) target = $region9
    $region8: #{encoder_layer_forward.1} parent=1 // pred_region
      _
    $region9: #{encoder_layer_forward.1} parent=1 // pred_fallthru
      _
    // Predicated region
    $region10: #{encoder_layer_forward.1} parent=1 // pred_check
      _
    $region11: #{encoder_layer_forward.1} parent=1 // pred_check_branch
      %37 = sbr.rel (0) target = $region13
    $region12: #{encoder_layer_forward.1} parent=1 // pred_region
      _
    $region13: #{encoder_layer_forward.1} parent=1 // pred_fallthru
      _
    // Predicated region
    $region14: #{encoder_layer_forward.1} parent=1 // pred_check
      _
    $region15: #{encoder_layer_forward.1} parent=1 // pred_check_branch
      %39 = sbr.rel (0) target = $region17
    $region16: #{encoder_layer_forward.1} parent=1 // pred_region
      _
    $region17: #{encoder_layer_forward.1} parent=1 // pred_fallthru
      _
    // Predicated region
    $region18: #{encoder_layer_forward.1} parent=1 // pred_check
      _
    $region19: #{encoder_layer_forward.1} parent=1 // pred_check_branch
      %41 = sbr.rel (0) target = $region21
    $region20: #{encoder_layer_forward.1} parent=1 // pred_region
      %s43 = ssub.s32 128, 128
      %44 = vsyncadd [#allocation7], %s43
      %s46 = sshll.u32 [#allocation6], 4
      %s47 = int_to_ptr.vmem [resolvable:$true] %s46
      %49 = dma.hbm_to_vmem [thread:$0]  %s4, 128, %s47, [#allocation7]
    $region21: #{encoder_layer_forward.1} parent=1 // pred_fallthru
      _
    // Predicated region
    $region22: #{encoder_layer_forward.1} parent=1 // pred_check
      _
    $region23: #{encoder_layer_forward.1} parent=1 // pred_check_branch
      %51 = sbr.rel (0) target = $region25
    $region24: #{encoder_layer_forward.1} parent=1 // pred_region
      %s53 = ssub.s32 160, 160
      %54 = vsyncadd [#allocation7], %s53
      %s56 = sshll.u32 [#allocation8], 4
      %s57 = int_to_ptr.vmem [resolvable:$true] %s56
      %59 = dma.hbm_to_vmem [thread:$0]  %s5, 160, %s57, [#allocation7]
    $region25: #{encoder_layer_forward.1} parent=1 // pred_fallthru
      _
    // Predicated region
    $region26: #{encoder_layer_forward.1} parent=1 // pred_check
      _
    $region27: #{encoder_layer_forward.1} parent=1 // pred_check_branch
      %61 = sbr.rel (0) target = $region29
    $region28: #{encoder_layer_forward.1} parent=1 // pred_region
      %s63 = ssub.s32 4096, 4096
      %64 = vsyncadd [#allocation10], %s63
      %s65 = sshll.u32 [#allocation9], 4
      %s66 = int_to_ptr.vmem [resolvable:$true] %s65
      %71 = dma.hbm_to_vmem [thread:$0]  %s6, 4096, %s66, [#allocation10], 256, 256, 16
    $region29: #{encoder_layer_forward.1} parent=1 // pred_fallthru
      _
    // Predicated region
    $region30: #{encoder_layer_forward.1} parent=1 // pred_check
      _
    $region31: #{encoder_layer_forward.1} parent=1 // pred_check_branch
      %73 = sbr.rel (0) target = $region33
    $region32: #{encoder_layer_forward.1} parent=1 // pred_region
      %s75 = ssub.s32 2048, 2048
      %76 = vsyncadd [#allocation10], %s75
      %s77 = sshll.u32 [#allocation11], 4
      %s78 = int_to_ptr.vmem [resolvable:$true] %s77
      %83 = dma.hbm_to_vmem [thread:$0]  %s7, 2048, %s78, [#allocation10], 128, 128, 8
    $region33: #{encoder_layer_forward.1} parent=1 // pred_fallthru
      _
    // Predicated region
    $region34: #{encoder_layer_forward.1} parent=1 // pred_check
      _
    $region35: #{encoder_layer_forward.1} parent=1 // pred_check_branch
      %85 = sbr.rel (0) target = $region37
    $region36: #{encoder_layer_forward.1} parent=1 // pred_region
      %s87 = ssub.s32 2048, 2048
      %88 = vsyncadd [#allocation13], %s87
      %s89 = sshll.u32 [#allocation12], 4
      %s90 = int_to_ptr.vmem [resolvable:$true] %s89
      %95 = dma.hbm_to_vmem [thread:$0]  %s8, 2048, %s90, [#allocation13], 64, 64, 4
    $region37: #{encoder_layer_forward.1} parent=1 // pred_fallthru
      _
    // Predicated region
    $region38: #{encoder_layer_forward.1} parent=1 // pred_check
      _
    $region39: #{encoder_layer_forward.1} parent=1 // pred_check_branch
      %97 = sbr.rel (0) target = $region41
    $region40: #{encoder_layer_forward.1} parent=1 // pred_region
      %s99 = ssub.s32 2048, 2048
      %100 = vsyncadd [#allocation13], %s99
      %s101 = sshll.u32 [#allocation14], 4
      %s102 = int_to_ptr.vmem [resolvable:$true] %s101
      %107 = dma.hbm_to_vmem [thread:$0]  %s9, 2048, %s102, [#allocation13], 128, 128, 8
    $region41: #{encoder_layer_forward.1} parent=1 // pred_fallthru
      _
    // Predicated region
    $region42: #{encoder_layer_forward.1} parent=1 // pred_check
      _
    $region43: #{encoder_layer_forward.1} parent=1 // pred_check_branch
      %109 = sbr.rel (0) target = $region45
    $region44: #{encoder_layer_forward.1} parent=1 // pred_region
      %s111 = ssub.s32 2048, 2048
      %112 = vsyncadd [#allocation16], %s111
      %s113 = sshll.u32 [#allocation15], 4
      %s114 = int_to_ptr.vmem [resolvable:$true] %s113
      %119 = dma.hbm_to_vmem [thread:$0]  %s10, 2048, %s114, [#allocation16], 64, 64, 4
    $region45: #{encoder_layer_forward.1} parent=1 // pred_fallthru
      _
    // Predicated region
    $region46: #{encoder_layer_forward.1} parent=1 // pred_check
      _
    $region47: #{encoder_layer_forward.1} parent=1 // pred_check_branch
      %121 = sbr.rel (0) target = $region49
    $region48: #{encoder_layer_forward.1} parent=1 // pred_region
      %122 = dma.done [#allocation4], 512
    $region49: #{encoder_layer_forward.1} parent=1 // pred_fallthru
      _
    // Predicated region
    $region50: #{encoder_layer_forward.1} parent=1 // pred_check
      _
    $region51: #{encoder_layer_forward.1} parent=1 // pred_check_branch
      %124 = sbr.rel (0) target = $region53
    $region52: #{encoder_layer_forward.1} parent=1 // pred_region
      %125 = dma.done [#allocation7], 128
    $region53: #{encoder_layer_forward.1} parent=1 // pred_fallthru
      _
    // Predicated region
    $region54: #{encoder_layer_forward.1} parent=1 // pred_check
      _
    $region55: #{encoder_layer_forward.1} parent=1 // pred_check_branch
      %127 = sbr.rel (0) target = $region57
    $region56: #{encoder_layer_forward.1} parent=1 // pred_region
      %128 = dma.done [#allocation7], 160
    $region57: #{encoder_layer_forward.1} parent=1 // pred_fallthru
      _
    // Predicated region
    $region58: #{encoder_layer_forward.1} parent=1 // pred_check
      _
    $region59: #{encoder_layer_forward.1} parent=1 // pred_check_branch
      %130 = sbr.rel (0) target = $region61
    $region60: #{encoder_layer_forward.1} parent=1 // pred_region
      %131 = dma.done [#allocation10], 4096
    $region61: #{encoder_layer_forward.1} parent=1 // pred_fallthru
      _
    // Predicated region
    $region62: #{encoder_layer_forward.1} parent=1 // pred_check
      _
    $region63: #{encoder_layer_forward.1} parent=1 // pred_check_branch
      %133 = sbr.rel (0) target = $region65
    $region64: #{encoder_layer_forward.1} parent=1 // pred_region
      %134 = dma.done [#allocation10], 2048
    $region65: #{encoder_layer_forward.1} parent=1 // pred_fallthru
      _
    // Predicated region
    $region66: #{encoder_layer_forward.1} parent=1 // pred_check
      _
    $region67: #{encoder_layer_forward.1} parent=1 // pred_check_branch
      %136 = sbr.rel (0) target = $region69
    $region68: #{encoder_layer_forward.1} parent=1 // pred_region
      %137 = dma.done [#allocation13], 2048
    $region69: #{encoder_layer_forward.1} parent=1 // pred_fallthru
      _
    // Predicated region
    $region70: #{encoder_layer_forward.1} parent=1 // pred_check
      _
    $region71: #{encoder_layer_forward.1} parent=1 // pred_check_branch
      %139 = sbr.rel (0) target = $region73
    $region72: #{encoder_layer_forward.1} parent=1 // pred_region
      %140 = dma.done [#allocation13], 2048
    $region73: #{encoder_layer_forward.1} parent=1 // pred_fallthru
      _
    // Predicated region
    $region74: #{encoder_layer_forward.1} parent=1 // pred_check
      _
    $region75: #{encoder_layer_forward.1} parent=1 // pred_check_branch
      %142 = sbr.rel (0) target = $region77
    $region76: #{encoder_layer_forward.1} parent=1 // pred_region
      %143 = dma.done [#allocation16], 2048
    $region77: #{encoder_layer_forward.1} parent=1 // pred_fallthru
      _
    %v145 = vld [vmem:[#allocation3] sm:$0xff]
    %v146 = vld [vmem:[#allocation3 + $0x8] sm:$0xff]
    %v147 = vld [vmem:[#allocation3 + $0x10] sm:$0xff]
    %v148 = vld [vmem:[#allocation3 + $0x18] sm:$0xff]
    %v149 = vld [vmem:[%s1] sm:$0xff]
    %v150 = vld [vmem:[%s1 + $0x8] sm:$0xff]
    %v151 = vld [vmem:[#allocation6] sm:$0x1]
    %v152 = vld [vmem:[#allocation6 + $0x1] sm:$0x1]
    %v153 = vld [vmem:[#allocation6 + $0x2] sm:$0x1]
    %v154 = vld [vmem:[#allocation6 + $0x3] sm:$0x1]
    %v155 = vld [vmem:[#allocation6 + $0x4] sm:$0x1]
    %v156 = vld [vmem:[#allocation6 + $0x5] sm:$0x1]
    %v157 = vld [vmem:[#allocation8] sm:$0xff]
    %v158 = vld [vmem:[#allocation8 + $0x8] sm:$0x3]
    %159 = vadd.xlane.f32.xlu0 %v145
    %v160 = vpop.xlane.xlu0 %159
    %161 = vadd.xlane.f32.xlu0 %v146
    %v162 = vpop.xlane.xlu0 %161
    %163 = vadd.xlane.f32.xlu0 %v147
    %v164 = vpop.xlane.xlu0 %163
    %165 = vadd.xlane.f32.xlu0 %v148
    %v166 = vpop.xlane.xlu0 %165
    %v167 = vrcp.pop 128.0
    %v168 = vmul.f32 %v160, %v167
    %v169 = vmul.f32 %v162, %v167
    %v170 = vmul.f32 %v164, %v167
    %v171 = vmul.f32 %v166, %v167
    %v172 = vsub.f32 %v145, %v168
    %v173 = vsub.f32 %v146, %v169
    %v174 = vsub.f32 %v147, %v170
    %v175 = vsub.f32 %v148, %v171
    %v176 = vmul.f32 %v172, %v172
    %v177 = vmul.f32 %v173, %v173
    %v178 = vmul.f32 %v174, %v174
    %v179 = vmul.f32 %v175, %v175
    %180 = vadd.xlane.f32.xlu0 %v176
    %v181 = vpop.xlane.xlu0 %180
    %182 = vadd.xlane.f32.xlu0 %v177
    %v183 = vpop.xlane.xlu0 %182
    %184 = vadd.xlane.f32.xlu0 %v178
    %v185 = vpop.xlane.xlu0 %184
    %186 = vadd.xlane.f32.xlu0 %v179
    %v187 = vpop.xlane.xlu0 %186
    %v188 = vmul.f32 %v181, 0.007874016
    %v189 = vmul.f32 %v183, 0.007874016
    %v190 = vmul.f32 %v185, 0.007874016
    %v191 = vmul.f32 %v187, 0.007874016
    %v192 = vrsqrt.pop %v188
    %v193 = vmul.f32 %v188, %v192
    %vm194 = vcmp.eq.f32.partialorder %v188, inf
    %v195 = vsel %vm194, %v188, %v193
    %vm196 = vcmp.eq.f32.partialorder %v188, 0.0
    %v197 = vand.u32 %v188, 2147483648
    %v198 = vsel %vm196, %v197, %v195
    %v199 = vrsqrt.pop %v189
    %v200 = vmul.f32 %v189, %v199
    %vm201 = vcmp.eq.f32.partialorder %v189, inf
    %v202 = vsel %vm201, %v189, %v200
    %vm203 = vcmp.eq.f32.partialorder %v189, 0.0
    %v204 = vand.u32 %v189, 2147483648
    %v205 = vsel %vm203, %v204, %v202
    %v206 = vrsqrt.pop %v190
    %v207 = vmul.f32 %v190, %v206
    %vm208 = vcmp.eq.f32.partialorder %v190, inf
    %v209 = vsel %vm208, %v190, %v207
    %vm210 = vcmp.eq.f32.partialorder %v190, 0.0
    %v211 = vand.u32 %v190, 2147483648
    %v212 = vsel %vm210, %v211, %v209
    %v213 = vrsqrt.pop %v191
    %v214 = vmul.f32 %v191, %v213
    %vm215 = vcmp.eq.f32.partialorder %v191, inf
    %v216 = vsel %vm215, %v191, %v214
    %vm217 = vcmp.eq.f32.partialorder %v191, 0.0
    %v218 = vand.u32 %v191, 2147483648
    %v219 = vsel %vm217, %v218, %v216
    %v220 = vadd.f32 %v198, 1e-06
    %v221 = vadd.f32 %v205, 1e-06
    %v222 = vadd.f32 %v212, 1e-06
    %v223 = vadd.f32 %v219, 1e-06
    %v224 = vrcp.pop %v220
    %v225 = vrcp.pop %v221
    %v226 = vrcp.pop %v222
    %v227 = vrcp.pop %v223
    %v228 = vlaneseq
    %v229 = vshrl.u32 %v228, 7
    %v230 = vsub.s32 0, %v229
    %v231 = vrot.slane %v153, %v230
    %v232 = vmul.f32 %v231, %v172
    %v233 = vmul.f32 %v231, %v173
    %v234 = vmul.f32 %v231, %v174
    %v235 = vmul.f32 %v231, %v175
    %v236 = vmul.f32 %v232, %v224
    %v237 = vmul.f32 %v233, %v225
    %v238 = vmul.f32 %v234, %v226
    %v239 = vmul.f32 %v235, %v227
    %v240 = vlaneseq
    %v241 = vshrl.u32 %v240, 7
    %v242 = vsub.s32 0, %v241
    %v243 = vrot.slane %v154, %v242
    %v244 = vadd.f32 %v236, %v243
    %v245 = vadd.f32 %v237, %v243
    %v246 = vadd.f32 %v238, %v243
    %v247 = vadd.f32 %v239, %v243
    %248 = vadd.xlane.f32.xlu0 %v149
    %v249 = vpop.xlane.xlu0 %248
    %250 = vadd.xlane.f32.xlu0 %v150
    %v251 = vpop.xlane.xlu0 %250
    %v252 = vmul.f32 %v249, %v167
    %v253 = vmul.f32 %v251, %v167
    %v254 = vsub.f32 %v149, %v252
    %v255 = vsub.f32 %v150, %v253
    %v256 = vmul.f32 %v254, %v254
    %v257 = vmul.f32 %v255, %v255
    %258 = vadd.xlane.f32.xlu0 %v256
    %v259 = vpop.xlane.xlu0 %258
    %260 = vadd.xlane.f32.xlu0 %v257
    %v261 = vpop.xlane.xlu0 %260
    %v262 = vmul.f32 %v259, 0.007874016
    %v263 = vmul.f32 %v261, 0.007874016
    %v264 = vrsqrt.pop %v262
    %v265 = vmul.f32 %v262, %v264
    %vm266 = vcmp.eq.f32.partialorder %v262, inf
    %v267 = vsel %vm266, %v262, %v265
    %vm268 = vcmp.eq.f32.partialorder %v262, 0.0
    %v269 = vand.u32 %v262, 2147483648
    %v270 = vsel %vm268, %v269, %v267
    %v271 = vrsqrt.pop %v263
    %v272 = vmul.f32 %v263, %v271
    %vm273 = vcmp.eq.f32.partialorder %v263, inf
    %v274 = vsel %vm273, %v263, %v272
    %vm275 = vcmp.eq.f32.partialorder %v263, 0.0
    %v276 = vand.u32 %v263, 2147483648
    %v277 = vsel %vm275, %v276, %v274
    %v278 = vadd.f32 %v270, 1e-06
    %v279 = vadd.f32 %v277, 1e-06
    %v280 = vrcp.pop %v278
    %v281 = vrcp.pop %v279
    %v282 = vlaneseq
    %v283 = vshrl.u32 %v282, 7
    %v284 = vsub.s32 0, %v283
    %v285 = vrot.slane %v151, %v284
    %v286 = vmul.f32 %v285, %v254
    %v287 = vmul.f32 %v285, %v255
    %v288 = vmul.f32 %v286, %v280
    %v289 = vmul.f32 %v287, %v281
    %v290 = vlaneseq
    %v291 = vshrl.u32 %v290, 7
    %v292 = vsub.s32 0, %v291
    %v293 = vrot.slane %v152, %v292
    %v294 = vadd.f32 %v288, %v293
    %v295 = vadd.f32 %v289, %v293
    %v296 = vpack.c.bf16 %v245, %v244
    %v297 = vpack.c.bf16 %v247, %v246
    %v298 = vld [vmem:[#allocation9] sm:$0xff]
    %v299 = vld [vmem:[#allocation9 + $0x8] sm:$0xff]
    %v300 = vld [vmem:[#allocation9 + $0x10] sm:$0xff]
    %v301 = vld [vmem:[#allocation9 + $0x18] sm:$0xff]
    %v302 = vld [vmem:[#allocation9 + $0x20] sm:$0xff]
    %v303 = vld [vmem:[#allocation9 + $0x28] sm:$0xff]
    %v304 = vld [vmem:[#allocation9 + $0x30] sm:$0xff]
    %v305 = vld [vmem:[#allocation9 + $0x38] sm:$0xff]
    %v306 = vld [vmem:[#allocation9 + $0x40] sm:$0xff]
    %v307 = vld [vmem:[#allocation9 + $0x48] sm:$0xff]
    %v308 = vld [vmem:[#allocation9 + $0x50] sm:$0xff]
    %v309 = vld [vmem:[#allocation9 + $0x58] sm:$0xff]
    %v310 = vld [vmem:[#allocation9 + $0x60] sm:$0xff]
    %v311 = vld [vmem:[#allocation9 + $0x68] sm:$0xff]
    %v312 = vld [vmem:[#allocation9 + $0x70] sm:$0xff]
    %v313 = vld [vmem:[#allocation9 + $0x78] sm:$0xff]
    %v314 = vld [vmem:[#allocation9 + $0x80] sm:$0xff]
    %v315 = vld [vmem:[#allocation9 + $0x88] sm:$0xff]
    %v316 = vld [vmem:[#allocation9 + $0x90] sm:$0xff]
    %v317 = vld [vmem:[#allocation9 + $0x98] sm:$0xff]
    %v318 = vld [vmem:[#allocation9 + $0xa0] sm:$0xff]
    %v319 = vld [vmem:[#allocation9 + $0xa8] sm:$0xff]
    %v320 = vld [vmem:[#allocation9 + $0xb0] sm:$0xff]
    %v321 = vld [vmem:[#allocation9 + $0xb8] sm:$0xff]
    %v322 = vld [vmem:[#allocation9 + $0xc0] sm:$0xff]
    %v323 = vld [vmem:[#allocation9 + $0xc8] sm:$0xff]
    %v324 = vld [vmem:[#allocation9 + $0xd0] sm:$0xff]
    %v325 = vld [vmem:[#allocation9 + $0xd8] sm:$0xff]
    %v326 = vld [vmem:[#allocation9 + $0xe0] sm:$0xff]
    %v327 = vld [vmem:[#allocation9 + $0xe8] sm:$0xff]
    %v328 = vld [vmem:[#allocation9 + $0xf0] sm:$0xff]
    %v329 = vld [vmem:[#allocation9 + $0xf8] sm:$0xff]
    %v331 = vlaneseq
    %v332 = vshrl.u32 %v331, 7
    %v333 = vsub.s32 0, %v332
    %v334 = vrot.slane %v157, %v333
    %v335 = vlaneseq
    %v336 = vshrl.u32 %v335, 7
    %v337 = vsub.s32 1, %v336
    %v338 = vrot.slane %v157, %v337
    %v339 = vlaneseq
    %v340 = vshrl.u32 %v339, 7
    %v341 = vsub.s32 2, %v340
    %v342 = vrot.slane %v157, %v341
    %v343 = vlaneseq
    %v344 = vshrl.u32 %v343, 7
    %v345 = vsub.s32 3, %v344
    %v346 = vrot.slane %v157, %v345
    %v383 = vunpack.c.l.b16 %v298
    %v384 = vunpack.c.h.b16 %v298
    %v385 = vunpack.c.l.b16 %v299
    %v386 = vunpack.c.h.b16 %v299
    %v387 = vunpack.c.l.b16 %v300
    %v388 = vunpack.c.h.b16 %v300
    %v389 = vunpack.c.l.b16 %v301
    %v390 = vunpack.c.h.b16 %v301
    %v391 = vunpack.c.l.b16 %v302
    %v392 = vunpack.c.h.b16 %v302
    %v393 = vunpack.c.l.b16 %v303
    %v394 = vunpack.c.h.b16 %v303
    %v395 = vunpack.c.l.b16 %v304
    %v396 = vunpack.c.h.b16 %v304
    %v397 = vunpack.c.l.b16 %v305
    %v398 = vunpack.c.h.b16 %v305
    %v399 = vunpack.c.l.b16 %v306
    %v400 = vunpack.c.h.b16 %v306
    %v401 = vunpack.c.l.b16 %v307
    %v402 = vunpack.c.h.b16 %v307
    %v403 = vunpack.c.l.b16 %v308
    %v404 = vunpack.c.h.b16 %v308
    %v405 = vunpack.c.l.b16 %v309
    %v406 = vunpack.c.h.b16 %v309
    %v407 = vunpack.c.l.b16 %v310
    %v408 = vunpack.c.h.b16 %v310
    %v409 = vunpack.c.l.b16 %v311
    %v410 = vunpack.c.h.b16 %v311
    %v411 = vunpack.c.l.b16 %v312
    %v412 = vunpack.c.h.b16 %v312
    %v413 = vunpack.c.l.b16 %v313
    %v414 = vunpack.c.h.b16 %v313
    %v415 = vunpack.c.l.b16 %v314
    %v416 = vunpack.c.h.b16 %v314
    %v417 = vunpack.c.l.b16 %v315
    %v418 = vunpack.c.h.b16 %v315
    %v419 = vunpack.c.l.b16 %v316
    %v420 = vunpack.c.h.b16 %v316
    %v421 = vunpack.c.l.b16 %v317
    %v422 = vunpack.c.h.b16 %v317
    %v423 = vunpack.c.l.b16 %v318
    %v424 = vunpack.c.h.b16 %v318
    %v425 = vunpack.c.l.b16 %v319
    %v426 = vunpack.c.h.b16 %v319
    %v427 = vunpack.c.l.b16 %v320
    %v428 = vunpack.c.h.b16 %v320
    %v429 = vunpack.c.l.b16 %v321
    %v430 = vunpack.c.h.b16 %v321
    %v431 = vunpack.c.l.b16 %v322
    %v432 = vunpack.c.h.b16 %v322
    %v433 = vunpack.c.l.b16 %v323
    %v434 = vunpack.c.h.b16 %v323
    %v435 = vunpack.c.l.b16 %v324
    %v436 = vunpack.c.h.b16 %v324
    %v437 = vunpack.c.l.b16 %v325
    %v438 = vunpack.c.h.b16 %v325
    %v439 = vunpack.c.l.b16 %v326
    %v440 = vunpack.c.h.b16 %v326
    %v441 = vunpack.c.l.b16 %v327
    %v442 = vunpack.c.h.b16 %v327
    %v443 = vunpack.c.l.b16 %v328
    %v444 = vunpack.c.h.b16 %v328
    %v445 = vunpack.c.l.b16 %v329
    %v446 = vunpack.c.h.b16 %v329
    %v447 = vpack.c.b16 %v387, %v383
    %v448 = vpack.c.b16 %v388, %v384
    %v449 = vpack.c.b16 %v389, %v385
    %v450 = vpack.c.b16 %v390, %v386
    %v451 = vpack.c.b16 %v395, %v391
    %v452 = vpack.c.b16 %v396, %v392
    %v453 = vpack.c.b16 %v397, %v393
    %v454 = vpack.c.b16 %v398, %v394
    %v455 = vpack.c.b16 %v403, %v399
    %v456 = vpack.c.b16 %v404, %v400
    %v457 = vpack.c.b16 %v405, %v401
    %v458 = vpack.c.b16 %v406, %v402
    %v459 = vpack.c.b16 %v411, %v407
    %v460 = vpack.c.b16 %v412, %v408
    %v461 = vpack.c.b16 %v413, %v409
    %v462 = vpack.c.b16 %v414, %v410
    %v463 = vpack.c.b16 %v419, %v415
    %v464 = vpack.c.b16 %v420, %v416
    %v465 = vpack.c.b16 %v421, %v417
    %v466 = vpack.c.b16 %v422, %v418
    %v467 = vpack.c.b16 %v427, %v423
    %v468 = vpack.c.b16 %v428, %v424
    %v469 = vpack.c.b16 %v429, %v425
    %v470 = vpack.c.b16 %v430, %v426
    %v471 = vpack.c.b16 %v435, %v431
    %v472 = vpack.c.b16 %v436, %v432
    %v473 = vpack.c.b16 %v437, %v433
    %v474 = vpack.c.b16 %v438, %v434
    %v475 = vpack.c.b16 %v443, %v439
    %v476 = vpack.c.b16 %v444, %v440
    %v477 = vpack.c.b16 %v445, %v441
    %v478 = vpack.c.b16 %v446, %v442
    %511 = vmatprep.subr.bf16.mxu0 %v448
    %512 = vmatpush1.bf16.msra.mxu0 %v447
    %513 = vmatprep.subr.bf16.mxu0 %v452
    %514 = vmatpush1.bf16.msra.mxu0 %v451
    %515 = vmatprep.subr.bf16.mxu0 %v456
    %516 = vmatpush1.bf16.msra.mxu0 %v455
    %517 = vmatprep.subr.bf16.mxu0 %v460
    %518 = vmatpush1.bf16.msra.mxu0 %v459
    %519 = vmatprep.subr.bf16.mxu0 %v464
    %520 = vmatpush1.bf16.msra.mxu0 %v463
    %521 = vmatprep.subr.bf16.mxu0 %v468
    %522 = vmatpush1.bf16.msra.mxu0 %v467
    %523 = vmatprep.subr.bf16.mxu0 %v472
    %524 = vmatpush1.bf16.msra.mxu0 %v471
    %525 = vmatprep.subr.bf16.mxu0 %v476
    %526 = vmatpush1.bf16.msra.mxu0 %v475
    %527 = vmatprep.subr.bf16.mxu0 0
    %528 = vmatpush1.bf16.msra.mxu0 0
    %529 = vmatprep.subr.bf16.mxu0 0
    %530 = vmatpush1.bf16.msra.mxu0 0
    %531 = vmatprep.subr.bf16.mxu0 0
    %532 = vmatpush1.bf16.msra.mxu0 0
    %533 = vmatprep.subr.bf16.mxu0 0
    %534 = vmatpush1.bf16.msra.mxu0 0
    %535 = vmatprep.subr.bf16.mxu0 0
    %536 = vmatpush1.bf16.msra.mxu0 0
    %537 = vmatprep.subr.bf16.mxu0 0
    %538 = vmatpush1.bf16.msra.mxu0 0
    %539 = vmatprep.subr.bf16.mxu0 0
    %540 = vmatpush1.bf16.msra.mxu0 0
    %541 = vmatprep.subr.bf16.mxu0 0
    %542 = vmatpush1.bf16.msra.mxu0 0
    %543 = vmatprep.mubr.bf16.mxu0 0
    %544 = vmatmul.mubr.bf16.gmra.mrb[0].mxu0 %v296
    %v545 = vpop.f32.mrb[0].mxu0
    %v546 = vadd.f32 %v334, %v545
    %v547 = vpop.f32.mrb[0].mxu0
    %v548 = vadd.f32 %v338, %v547
    %v549 = vpop.f32.mrb[0].mxu0
    %v550 = vadd.f32 %v334, %v549
    %v551 = vpop.f32.mrb[0].mxu0
    %v552 = vadd.f32 %v338, %v551
    %553 = vmatprep.mubr.bf16.mxu0 0
    %554 = vmatmul.mubr.bf16.gmra.mrb[0].mxu0 %v297
    %v555 = vpop.f32.mrb[0].mxu0
    %v556 = vadd.f32 %v334, %v555
    %v557 = vpop.f32.mrb[0].mxu0
    %v558 = vadd.f32 %v338, %v557
    %v559 = vpop.f32.mrb[0].mxu0
    %v560 = vadd.f32 %v334, %v559
    %v561 = vpop.f32.mrb[0].mxu0
    %v562 = vadd.f32 %v338, %v561
    %563 = vdwg.mxu0
    %564 = vmatprep.subr.bf16.mxu0 %v450
    %565 = vmatpush1.bf16.msra.mxu0 %v449
    %566 = vmatprep.subr.bf16.mxu0 %v454
    %567 = vmatpush1.bf16.msra.mxu0 %v453
    %568 = vmatprep.subr.bf16.mxu0 %v458
    %569 = vmatpush1.bf16.msra.mxu0 %v457
    %570 = vmatprep.subr.bf16.mxu0 %v462
    %571 = vmatpush1.bf16.msra.mxu0 %v461
    %572 = vmatprep.subr.bf16.mxu0 %v466
    %573 = vmatpush1.bf16.msra.mxu0 %v465
    %574 = vmatprep.subr.bf16.mxu0 %v470
    %575 = vmatpush1.bf16.msra.mxu0 %v469
    %576 = vmatprep.subr.bf16.mxu0 %v474
    %577 = vmatpush1.bf16.msra.mxu0 %v473
    %578 = vmatprep.subr.bf16.mxu0 %v478
    %579 = vmatpush1.bf16.msra.mxu0 %v477
    %580 = vmatprep.subr.bf16.mxu0 0
    %581 = vmatpush1.bf16.msra.mxu0 0
    %582 = vmatprep.subr.bf16.mxu0 0
    %583 = vmatpush1.bf16.msra.mxu0 0
    %584 = vmatprep.subr.bf16.mxu0 0
    %585 = vmatpush1.bf16.msra.mxu0 0
    %586 = vmatprep.subr.bf16.mxu0 0
    %587 = vmatpush1.bf16.msra.mxu0 0
    %588 = vmatprep.subr.bf16.mxu0 0
    %589 = vmatpush1.bf16.msra.mxu0 0
    %590 = vmatprep.subr.bf16.mxu0 0
    %591 = vmatpush1.bf16.msra.mxu0 0
    %592 = vmatprep.subr.bf16.mxu0 0
    %593 = vmatpush1.bf16.msra.mxu0 0
    %594 = vmatprep.subr.bf16.mxu0 0
    %595 = vmatpush1.bf16.msra.mxu0 0
    %596 = vmatprep.mubr.bf16.mxu0 0
    %597 = vmatmul.mubr.bf16.gmra.mrb[0].mxu0 %v296
    %v598 = vpop.f32.mrb[0].mxu0
    %v599 = vadd.f32 %v342, %v598
    %v600 = vpop.f32.mrb[0].mxu0
    %v601 = vadd.f32 %v346, %v600
    %v602 = vpop.f32.mrb[0].mxu0
    %v603 = vadd.f32 %v342, %v602
    %v604 = vpop.f32.mrb[0].mxu0
    %v605 = vadd.f32 %v346, %v604
    %606 = vmatprep.mubr.bf16.mxu0 0
    %607 = vmatmul.mubr.bf16.gmra.mrb[0].mxu0 %v297
    %v608 = vpop.f32.mrb[0].mxu0
    %v609 = vadd.f32 %v342, %v608
    %v610 = vpop.f32.mrb[0].mxu0
    %v611 = vadd.f32 %v346, %v610
    %v612 = vpop.f32.mrb[0].mxu0
    %v613 = vadd.f32 %v342, %v612
    %v614 = vpop.f32.mrb[0].mxu0
    %v615 = vadd.f32 %v346, %v614
    %616 = vdwg.mxu0
    %v617 = vpack.c.bf16 %v295, %v294
    %v618 = vld [vmem:[#allocation11] sm:$0xff]
    %v619 = vld [vmem:[#allocation11 + $0x8] sm:$0xff]
    %v620 = vld [vmem:[#allocation11 + $0x10] sm:$0xff]
    %v621 = vld [vmem:[#allocation11 + $0x18] sm:$0xff]
    %v622 = vld [vmem:[#allocation11 + $0x20] sm:$0xff]
    %v623 = vld [vmem:[#allocation11 + $0x28] sm:$0xff]
    %v624 = vld [vmem:[#allocation11 + $0x30] sm:$0xff]
    %v625 = vld [vmem:[#allocation11 + $0x38] sm:$0xff]
    %v626 = vld [vmem:[#allocation11 + $0x40] sm:$0xff]
    %v627 = vld [vmem:[#allocation11 + $0x48] sm:$0xff]
    %v628 = vld [vmem:[#allocation11 + $0x50] sm:$0xff]
    %v629 = vld [vmem:[#allocation11 + $0x58] sm:$0xff]
    %v630 = vld [vmem:[#allocation11 + $0x60] sm:$0xff]
    %v631 = vld [vmem:[#allocation11 + $0x68] sm:$0xff]
    %v632 = vld [vmem:[#allocation11 + $0x70] sm:$0xff]
    %v633 = vld [vmem:[#allocation11 + $0x78] sm:$0xff]
    %v634 = vrot.slane %v157, 4
    %v635 = vlaneseq
    %v636 = vshrl.u32 %v635, 7
    %v637 = vsub.s32 0, %v636
    %v638 = vrot.slane %v634, %v637
    %v639 = vlaneseq
    %v640 = vshrl.u32 %v639, 7
    %v641 = vsub.s32 1, %v640
    %v642 = vrot.slane %v634, %v641
    %v661 = vunpack.c.l.b16 %v618
    %v662 = vunpack.c.h.b16 %v618
    %v663 = vunpack.c.l.b16 %v619
    %v664 = vunpack.c.h.b16 %v619
    %v665 = vunpack.c.l.b16 %v620
    %v666 = vunpack.c.h.b16 %v620
    %v667 = vunpack.c.l.b16 %v621
    %v668 = vunpack.c.h.b16 %v621
    %v669 = vunpack.c.l.b16 %v622
    %v670 = vunpack.c.h.b16 %v622
    %v671 = vunpack.c.l.b16 %v623
    %v672 = vunpack.c.h.b16 %v623
    %v673 = vunpack.c.l.b16 %v624
    %v674 = vunpack.c.h.b16 %v624
    %v675 = vunpack.c.l.b16 %v625
    %v676 = vunpack.c.h.b16 %v625
    %v677 = vunpack.c.l.b16 %v626
    %v678 = vunpack.c.h.b16 %v626
    %v679 = vunpack.c.l.b16 %v627
    %v680 = vunpack.c.h.b16 %v627
    %v681 = vunpack.c.l.b16 %v628
    %v682 = vunpack.c.h.b16 %v628
    %v683 = vunpack.c.l.b16 %v629
    %v684 = vunpack.c.h.b16 %v629
    %v685 = vunpack.c.l.b16 %v630
    %v686 = vunpack.c.h.b16 %v630
    %v687 = vunpack.c.l.b16 %v631
    %v688 = vunpack.c.h.b16 %v631
    %v689 = vunpack.c.l.b16 %v632
    %v690 = vunpack.c.h.b16 %v632
    %v691 = vunpack.c.l.b16 %v633
    %v692 = vunpack.c.h.b16 %v633
    %v693 = vpack.c.b16 %v663, %v661
    %v694 = vpack.c.b16 %v664, %v662
    %v695 = vpack.c.b16 %v667, %v665
    %v696 = vpack.c.b16 %v668, %v666
    %v697 = vpack.c.b16 %v671, %v669
    %v698 = vpack.c.b16 %v672, %v670
    %v699 = vpack.c.b16 %v675, %v673
    %v700 = vpack.c.b16 %v676, %v674
    %v701 = vpack.c.b16 %v679, %v677
    %v702 = vpack.c.b16 %v680, %v678
    %v703 = vpack.c.b16 %v683, %v681
    %v704 = vpack.c.b16 %v684, %v682
    %v705 = vpack.c.b16 %v687, %v685
    %v706 = vpack.c.b16 %v688, %v686
    %v707 = vpack.c.b16 %v691, %v689
    %v708 = vpack.c.b16 %v692, %v690
    %725 = vmatprep.subr.bf16.mxu0 %v694
    %726 = vmatpush1.bf16.msra.mxu0 %v693
    %727 = vmatprep.subr.bf16.mxu0 %v696
    %728 = vmatpush1.bf16.msra.mxu0 %v695
    %729 = vmatprep.subr.bf16.mxu0 %v698
    %730 = vmatpush1.bf16.msra.mxu0 %v697
    %731 = vmatprep.subr.bf16.mxu0 %v700
    %732 = vmatpush1.bf16.msra.mxu0 %v699
    %733 = vmatprep.subr.bf16.mxu0 %v702
    %734 = vmatpush1.bf16.msra.mxu0 %v701
    %735 = vmatprep.subr.bf16.mxu0 %v704
    %736 = vmatpush1.bf16.msra.mxu0 %v703
    %737 = vmatprep.subr.bf16.mxu0 %v706
    %738 = vmatpush1.bf16.msra.mxu0 %v705
    %739 = vmatprep.subr.bf16.mxu0 %v708
    %740 = vmatpush1.bf16.msra.mxu0 %v707
    %741 = vmatprep.subr.bf16.mxu0 0
    %742 = vmatpush1.bf16.msra.mxu0 0
    %743 = vmatprep.subr.bf16.mxu0 0
    %744 = vmatpush1.bf16.msra.mxu0 0
    %745 = vmatprep.subr.bf16.mxu0 0
    %746 = vmatpush1.bf16.msra.mxu0 0
    %747 = vmatprep.subr.bf16.mxu0 0
    %748 = vmatpush1.bf16.msra.mxu0 0
    %749 = vmatprep.subr.bf16.mxu0 0
    %750 = vmatpush1.bf16.msra.mxu0 0
    %751 = vmatprep.subr.bf16.mxu0 0
    %752 = vmatpush1.bf16.msra.mxu0 0
    %753 = vmatprep.subr.bf16.mxu0 0
    %754 = vmatpush1.bf16.msra.mxu0 0
    %755 = vmatprep.subr.bf16.mxu0 0
    %756 = vmatpush1.bf16.msra.mxu0 0
    %757 = vmatprep.mubr.bf16.mxu0 0
    %758 = vmatmul.mubr.bf16.gmra.mrb[0].mxu0 %v617
    %v759 = vpop.f32.mrb[0].mxu0
    %v760 = vadd.f32 %v638, %v759
    %v761 = vpop.f32.mrb[0].mxu0
    %v762 = vadd.f32 %v642, %v761
    %v763 = vpop.f32.mrb[0].mxu0
    %v764 = vadd.f32 %v638, %v763
    %v765 = vpop.f32.mrb[0].mxu0
    %v766 = vadd.f32 %v642, %v765
    %767 = vdwg.mxu0
    %v768 = vpack.c.bf16 %v550, %v546
    %v769 = vpack.c.bf16 %v603, %v599
    %v770 = vpack.c.bf16 %v605, %v601
    %v771 = vpack.c.bf16 %v560, %v556
    %v772 = vpack.c.bf16 %v613, %v609
    %v773 = vpack.c.bf16 %v615, %v611
    %v774 = vpack.c.bf16 %v766, %v762
    %775 = vxpose.xlu0.b32.start [1/16] %v548, 128
    %776 = vxpose.xlu0.b32.cont [2/16] %v552, 128
    %777 = vxpose.xlu0.b32.cont [3/16] 0.0, 128
    %778 = vxpose.xlu0.b32.cont [4/16] 0.0, 128
    %779 = vxpose.xlu0.b32.cont [5/16] 0.0, 128
    %780 = vxpose.xlu0.b32.cont [6/16] 0.0, 128
    %781 = vxpose.xlu0.b32.cont [7/16] 0.0, 128
    %782 = vxpose.xlu0.b32.cont [8/16] 0.0, 128
    %783 = vxpose.xlu0.b32.cont [9/16] 0.0, 128
    %784 = vxpose.xlu0.b32.cont [10/16] 0.0, 128
    %785 = vxpose.xlu0.b32.cont [11/16] 0.0, 128
    %786 = vxpose.xlu0.b32.cont [12/16] 0.0, 128
    %787 = vxpose.xlu0.b32.cont [13/16] 0.0, 128
    %788 = vxpose.xlu0.b32.cont [14/16] 0.0, 128
    %789 = vxpose.xlu0.b32.cont [15/16] 0.0, 128
    %790 = vxpose.xlu0.b32.end [16/16] 0.0, 128
    %v791 = vpop.trf.xlu0
    %v792 = vpop.trf.xlu0
    %v793 = vpop.trf.xlu0
    %v794 = vpop.trf.xlu0
    %v795 = vpop.trf.xlu0
    %v796 = vpop.trf.xlu0
    %v797 = vpop.trf.xlu0
    %v798 = vpop.trf.xlu0
    %v799 = vpop.trf.xlu0
    %v800 = vpop.trf.xlu0
    %v801 = vpop.trf.xlu0
    %v802 = vpop.trf.xlu0
    %v803 = vpop.trf.xlu0
    %v804 = vpop.trf.xlu0
    %v805 = vpop.trf.xlu0
    %v806 = vpop.trf.xlu0
    %v807 = vpack.c.bf16 %v792, %v791
    %v808 = vpack.c.bf16 %v794, %v793
    %v809 = vpack.c.bf16 %v796, %v795
    %v810 = vpack.c.bf16 %v798, %v797
    %v811 = vpack.c.bf16 %v800, %v799
    %v812 = vpack.c.bf16 %v802, %v801
    %v813 = vpack.c.bf16 %v804, %v803
    %v814 = vpack.c.bf16 %v806, %v805
    %815 = vxpose.xlu0.b32.start [1/16] %v760, 128
    %816 = vxpose.xlu0.b32.cont [2/16] 0.0, 128
    %817 = vxpose.xlu0.b32.cont [3/16] 0.0, 128
    %818 = vxpose.xlu0.b32.cont [4/16] 0.0, 128
    %819 = vxpose.xlu0.b32.cont [5/16] 0.0, 128
    %820 = vxpose.xlu0.b32.cont [6/16] 0.0, 128
    %821 = vxpose.xlu0.b32.cont [7/16] 0.0, 128
    %822 = vxpose.xlu0.b32.cont [8/16] 0.0, 128
    %823 = vxpose.xlu0.b32.cont [9/16] 0.0, 128
    %824 = vxpose.xlu0.b32.cont [10/16] 0.0, 128
    %825 = vxpose.xlu0.b32.cont [11/16] 0.0, 128
    %826 = vxpose.xlu0.b32.cont [12/16] 0.0, 128
    %827 = vxpose.xlu0.b32.cont [13/16] 0.0, 128
    %828 = vxpose.xlu0.b32.cont [14/16] 0.0, 128
    %829 = vxpose.xlu0.b32.cont [15/16] 0.0, 128
    %830 = vxpose.xlu0.b32.end [16/16] 0.0, 128
    %v831 = vpop.trf.xlu0
    %v832 = vpop.trf.xlu0
    %v833 = vpop.trf.xlu0
    %v834 = vpop.trf.xlu0
    %v835 = vpop.trf.xlu0
    %v836 = vpop.trf.xlu0
    %v837 = vpop.trf.xlu0
    %v838 = vpop.trf.xlu0
    %v839 = vpop.trf.xlu0
    %v840 = vpop.trf.xlu0
    %v841 = vpop.trf.xlu0
    %v842 = vpop.trf.xlu0
    %v843 = vpop.trf.xlu0
    %v844 = vpop.trf.xlu0
    %v845 = vpop.trf.xlu0
    %v846 = vpop.trf.xlu0
    %v847 = vpack.c.bf16 %v832, %v831
    %v848 = vpack.c.bf16 %v834, %v833
    %v849 = vpack.c.bf16 %v836, %v835
    %v850 = vpack.c.bf16 %v838, %v837
    %v851 = vpack.c.bf16 %v840, %v839
    %v852 = vpack.c.bf16 %v842, %v841
    %v853 = vpack.c.bf16 %v844, %v843
    %v854 = vpack.c.bf16 %v846, %v845
    %v855 = vld [vmem:[%s2] sm:$0x1]
    %vm856 = vcmp.ne.f32.partialorder %v855, 0.0
    %v857 = vsel %vm856, 0.0, -1e+09
    %v858 = vld [vmem:[%s3] sm:$0x1]
    %vm859 = vcmp.ne.f32.partialorder %v858, 0.0
    %v860 = vsel %vm859, 0.0, -1e+09
    %v862 = vlaneseq
    %v863 = vshrl.u32 %v862, 7
    %v864 = vsub.s32 0, %v863
    %v865 = vrot.slane %v860, %v864
    %vm867 = vcmask 261120
    %v869 = vsel %vm867, %v770, 0
    %871 = vmatprep.subr.bf16.mxu0 0
    %872 = vmatpush1.bf16.msra.mxu0 %v847
    %873 = vmatprep.subr.bf16.mxu0 0
    %874 = vmatpush1.bf16.msra.mxu0 %v848
    %875 = vmatprep.subr.bf16.mxu0 0
    %876 = vmatpush1.bf16.msra.mxu0 0
    %877 = vmatprep.subr.bf16.mxu0 0
    %878 = vmatpush1.bf16.msra.mxu0 0
    %879 = vmatprep.subr.bf16.mxu0 0
    %880 = vmatpush1.bf16.msra.mxu0 0
    %881 = vmatprep.subr.bf16.mxu0 0
    %882 = vmatpush1.bf16.msra.mxu0 0
    %883 = vmatprep.subr.bf16.mxu0 0
    %884 = vmatpush1.bf16.msra.mxu0 0
    %885 = vmatprep.subr.bf16.mxu0 0
    %886 = vmatpush1.bf16.msra.mxu0 0
    %887 = vmatprep.subr.bf16.mxu0 0
    %888 = vmatpush1.bf16.msra.mxu0 0
    %889 = vmatprep.subr.bf16.mxu0 0
    %890 = vmatpush1.bf16.msra.mxu0 0
    %891 = vmatprep.subr.bf16.mxu0 0
    %892 = vmatpush1.bf16.msra.mxu0 0
    %893 = vmatprep.subr.bf16.mxu0 0
    %894 = vmatpush1.bf16.msra.mxu0 0
    %895 = vmatprep.subr.bf16.mxu0 0
    %896 = vmatpush1.bf16.msra.mxu0 0
    %897 = vmatprep.subr.bf16.mxu0 0
    %898 = vmatpush1.bf16.msra.mxu0 0
    %899 = vmatprep.subr.bf16.mxu0 0
    %900 = vmatpush1.bf16.msra.mxu0 0
    %901 = vmatprep.subr.bf16.mxu0 0
    %902 = vmatpush1.bf16.msra.mxu0 0
    %903 = vmatprep.mubr.bf16.mxu0 0
    %904 = vmatmul.mubr.bf16.gmra.mrb[0].mxu0 %v869
    %v905 = vpop.f32.mrb[0].mxu0
    %v906 = vadd.f32 %v865, %v905
    %v907 = vpop.f32.mrb[0].mxu0
    %v908 = vpop.f32.mrb[0].mxu0
    %v909 = vadd.f32 %v865, %v908
    %v910 = vpop.f32.mrb[0].mxu0
    %911 = vdwg.mxu0
    %vm912 = vcmask 64512
    %v913 = vsel %vm912, %v906, -inf
    %914 = vmax.xlane.f32.xlu0 %v913
    %v915 = vpop.xlane.xlu0 %914
    %v916 = vsel %vm912, %v909, -inf
    %917 = vmax.xlane.f32.xlu0 %v916
    %v918 = vpop.xlane.xlu0 %917
    %v919 = vsub.f32 %v906, %v915
    %v920 = vsub.f32 %v909, %v918
    %v921 = vmul.f32 %v919, 1.442695
    %v922 = vpow.pop %v921
    %v923 = vmul.f32 %v920, 1.442695
    %v924 = vpow.pop %v923
    %v925 = vsel %vm912, %v922, 0.0
    %926 = vadd.xlane.f32.xlu0 %v925
    %v927 = vpop.xlane.xlu0 %926
    %v928 = vsel %vm912, %v924, 0.0
    %929 = vadd.xlane.f32.xlu0 %v928
    %v930 = vpop.xlane.xlu0 %929
    %v931 = vrcp.pop %v927
    %v932 = vrcp.pop %v930
    %v933 = vmul.f32 %v922, %v931
    %v934 = vmul.f32 %v924, %v932
    %v935 = vpack.c.bf16 %v934, %v933
    %v937 = vsel %vm912, %v935, 0
    %vm939 = vcmask 1043456
    %v941 = vsel %vm939, %v774, 0
    %943 = vmatprep.subr.bf16.mxu0 0
    %944 = vmatpush1.bf16.msra.mxu0 %v941
    %945 = vmatprep.subr.bf16.mxu0 0
    %946 = vmatpush1.bf16.msra.mxu0 0
    %947 = vmatprep.subr.bf16.mxu0 0
    %948 = vmatpush1.bf16.msra.mxu0 0
    %949 = vmatprep.subr.bf16.mxu0 0
    %950 = vmatpush1.bf16.msra.mxu0 0
    %951 = vmatprep.subr.bf16.mxu0 0
    %952 = vmatpush1.bf16.msra.mxu0 0
    %953 = vmatprep.subr.bf16.mxu0 0
    %954 = vmatpush1.bf16.msra.mxu0 0
    %955 = vmatprep.subr.bf16.mxu0 0
    %956 = vmatpush1.bf16.msra.mxu0 0
    %957 = vmatprep.subr.bf16.mxu0 0
    %958 = vmatpush1.bf16.msra.mxu0 0
    %959 = vmatprep.subr.bf16.mxu0 0
    %960 = vmatpush1.bf16.msra.mxu0 0
    %961 = vmatprep.subr.bf16.mxu0 0
    %962 = vmatpush1.bf16.msra.mxu0 0
    %963 = vmatprep.subr.bf16.mxu0 0
    %964 = vmatpush1.bf16.msra.mxu0 0
    %965 = vmatprep.subr.bf16.mxu0 0
    %966 = vmatpush1.bf16.msra.mxu0 0
    %967 = vmatprep.subr.bf16.mxu0 0
    %968 = vmatpush1.bf16.msra.mxu0 0
    %969 = vmatprep.subr.bf16.mxu0 0
    %970 = vmatpush1.bf16.msra.mxu0 0
    %971 = vmatprep.subr.bf16.mxu0 0
    %972 = vmatpush1.bf16.msra.mxu0 0
    %973 = vmatprep.subr.bf16.mxu0 0
    %974 = vmatpush1.bf16.msra.mxu0 0
    %975 = vmatprep.mubr.bf16.mxu0 0
    %976 = vmatmul.mubr.bf16.gmra.mrb[0].mxu0 %v937
    %v977 = vpop.f32.mrb[0].mxu0
    %v978 = vadd.f32 0.0, %v977
    %v979 = vpop.f32.mrb[0].mxu0
    %v980 = vpop.f32.mrb[0].mxu0
    %v981 = vadd.f32 0.0, %v980
    %v982 = vpop.f32.mrb[0].mxu0
    %983 = vdwg.mxu0
    %984 = vst.msk [vmem:[#allocation2] sm:$0xff] %vm867, %v978
    %985 = vst.msk [vmem:[#allocation2 + $0x10] sm:$0xff] %vm867, %v981
    %v987 = vlaneseq
    %v988 = vshrl.u32 %v987, 7
    %v989 = vsub.s32 0, %v988
    %v990 = vrot.slane %v857, %v989
    %v993 = vsel %vm867, %v768, 0
    %995 = vmatprep.subr.bf16.mxu0 0
    %996 = vmatpush1.bf16.msra.mxu0 %v807
    %997 = vmatprep.subr.bf16.mxu0 0
    %998 = vmatpush1.bf16.msra.mxu0 %v808
    %999 = vmatprep.subr.bf16.mxu0 0
    %1000 = vmatpush1.bf16.msra.mxu0 0
    %1001 = vmatprep.subr.bf16.mxu0 0
    %1002 = vmatpush1.bf16.msra.mxu0 0
    %1003 = vmatprep.subr.bf16.mxu0 0
    %1004 = vmatpush1.bf16.msra.mxu0 0
    %1005 = vmatprep.subr.bf16.mxu0 0
    %1006 = vmatpush1.bf16.msra.mxu0 0
    %1007 = vmatprep.subr.bf16.mxu0 0
    %1008 = vmatpush1.bf16.msra.mxu0 0
    %1009 = vmatprep.subr.bf16.mxu0 0
    %1010 = vmatpush1.bf16.msra.mxu0 0
    %1011 = vmatprep.subr.bf16.mxu0 0
    %1012 = vmatpush1.bf16.msra.mxu0 0
    %1013 = vmatprep.subr.bf16.mxu0 0
    %1014 = vmatpush1.bf16.msra.mxu0 0
    %1015 = vmatprep.subr.bf16.mxu0 0
    %1016 = vmatpush1.bf16.msra.mxu0 0
    %1017 = vmatprep.subr.bf16.mxu0 0
    %1018 = vmatpush1.bf16.msra.mxu0 0
    %1019 = vmatprep.subr.bf16.mxu0 0
    %1020 = vmatpush1.bf16.msra.mxu0 0
    %1021 = vmatprep.subr.bf16.mxu0 0
    %1022 = vmatpush1.bf16.msra.mxu0 0
    %1023 = vmatprep.subr.bf16.mxu0 0
    %1024 = vmatpush1.bf16.msra.mxu0 0
    %1025 = vmatprep.subr.bf16.mxu0 0
    %1026 = vmatpush1.bf16.msra.mxu0 0
    %1027 = vmatprep.mubr.bf16.mxu0 0
    %1028 = vmatmul.mubr.bf16.gmra.mrb[0].mxu0 %v993
    %v1029 = vpop.f32.mrb[0].mxu0
    %v1030 = vadd.f32 %v990, %v1029
    %v1031 = vpop.f32.mrb[0].mxu0
    %v1032 = vpop.f32.mrb[0].mxu0
    %v1033 = vadd.f32 %v990, %v1032
    %v1034 = vpop.f32.mrb[0].mxu0
    %1035 = vdwg.mxu0
    %vm1036 = vcmask 130048
    %v1037 = vsel %vm1036, %v1030, -inf
    %1038 = vmax.xlane.f32.xlu0 %v1037
    %v1039 = vpop.xlane.xlu0 %1038
    %v1040 = vsel %vm1036, %v1033, -inf
    %1041 = vmax.xlane.f32.xlu0 %v1040
    %v1042 = vpop.xlane.xlu0 %1041
    %v1043 = vsub.f32 %v1030, %v1039
    %v1044 = vsub.f32 %v1033, %v1042
    %v1045 = vmul.f32 %v1043, 1.442695
    %v1046 = vpow.pop %v1045
    %v1047 = vmul.f32 %v1044, 1.442695
    %v1048 = vpow.pop %v1047
    %v1049 = vsel %vm1036, %v1046, 0.0
    %1050 = vadd.xlane.f32.xlu0 %v1049
    %v1051 = vpop.xlane.xlu0 %1050
    %v1052 = vsel %vm1036, %v1048, 0.0
    %1053 = vadd.xlane.f32.xlu0 %v1052
    %v1054 = vpop.xlane.xlu0 %1053
    %v1055 = vrcp.pop %v1051
    %v1056 = vrcp.pop %v1054
    %v1057 = vmul.f32 %v1046, %v1055
    %v1058 = vmul.f32 %v1048, %v1056
    %v1059 = vpack.c.bf16 %v1058, %v1057
    %v1061 = vsel %vm1036, %v1059, 0
    %1063 = vmatprep.subr.bf16.mxu0 0
    %1064 = vmatpush1.bf16.msra.mxu0 %v769
    %1065 = vmatprep.subr.bf16.mxu0 0
    %1066 = vmatpush1.bf16.msra.mxu0 0
    %1067 = vmatprep.subr.bf16.mxu0 0
    %1068 = vmatpush1.bf16.msra.mxu0 0
    %1069 = vmatprep.subr.bf16.mxu0 0
    %1070 = vmatpush1.bf16.msra.mxu0 0
    %1071 = vmatprep.subr.bf16.mxu0 0
    %1072 = vmatpush1.bf16.msra.mxu0 0
    %1073 = vmatprep.subr.bf16.mxu0 0
    %1074 = vmatpush1.bf16.msra.mxu0 0
    %1075 = vmatprep.subr.bf16.mxu0 0
    %1076 = vmatpush1.bf16.msra.mxu0 0
    %1077 = vmatprep.subr.bf16.mxu0 0
    %1078 = vmatpush1.bf16.msra.mxu0 0
    %1079 = vmatprep.subr.bf16.mxu0 0
    %1080 = vmatpush1.bf16.msra.mxu0 0
    %1081 = vmatprep.subr.bf16.mxu0 0
    %1082 = vmatpush1.bf16.msra.mxu0 0
    %1083 = vmatprep.subr.bf16.mxu0 0
    %1084 = vmatpush1.bf16.msra.mxu0 0
    %1085 = vmatprep.subr.bf16.mxu0 0
    %1086 = vmatpush1.bf16.msra.mxu0 0
    %1087 = vmatprep.subr.bf16.mxu0 0
    %1088 = vmatpush1.bf16.msra.mxu0 0
    %1089 = vmatprep.subr.bf16.mxu0 0
    %1090 = vmatpush1.bf16.msra.mxu0 0
    %1091 = vmatprep.subr.bf16.mxu0 0
    %1092 = vmatpush1.bf16.msra.mxu0 0
    %1093 = vmatprep.subr.bf16.mxu0 0
    %1094 = vmatpush1.bf16.msra.mxu0 0
    %1095 = vmatprep.mubr.bf16.mxu0 0
    %1096 = vmatmul.mubr.bf16.gmra.mrb[0].mxu0 %v1061
    %v1097 = vpop.f32.mrb[0].mxu0
    %v1098 = vadd.f32 0.0, %v1097
    %v1099 = vpop.f32.mrb[0].mxu0
    %v1100 = vpop.f32.mrb[0].mxu0
    %v1101 = vadd.f32 0.0, %v1100
    %v1102 = vpop.f32.mrb[0].mxu0
    %1103 = vdwg.mxu0
    %1104 = vst.msk [vmem:[#allocation2 + $0x8] sm:$0xff] %vm867, %v1098
    %1105 = vst.msk [vmem:[#allocation2 + $0x18] sm:$0xff] %vm867, %v1101
    %1107 = vrot.lane.b32.xlu0 %v770, 96
    %v1108 = vpop.permute.xlu0 %1107
    %v1110 = vsel %vm867, %v1108, 0
    %1112 = vmatprep.subr.bf16.mxu0 0
    %1113 = vmatpush1.bf16.msra.mxu0 %v849
    %1114 = vmatprep.subr.bf16.mxu0 0
    %1115 = vmatpush1.bf16.msra.mxu0 %v850
    %1116 = vmatprep.subr.bf16.mxu0 0
    %1117 = vmatpush1.bf16.msra.mxu0 0
    %1118 = vmatprep.subr.bf16.mxu0 0
    %1119 = vmatpush1.bf16.msra.mxu0 0
    %1120 = vmatprep.subr.bf16.mxu0 0
    %1121 = vmatpush1.bf16.msra.mxu0 0
    %1122 = vmatprep.subr.bf16.mxu0 0
    %1123 = vmatpush1.bf16.msra.mxu0 0
    %1124 = vmatprep.subr.bf16.mxu0 0
    %1125 = vmatpush1.bf16.msra.mxu0 0
    %1126 = vmatprep.subr.bf16.mxu0 0
    %1127 = vmatpush1.bf16.msra.mxu0 0
    %1128 = vmatprep.subr.bf16.mxu0 0
    %1129 = vmatpush1.bf16.msra.mxu0 0
    %1130 = vmatprep.subr.bf16.mxu0 0
    %1131 = vmatpush1.bf16.msra.mxu0 0
    %1132 = vmatprep.subr.bf16.mxu0 0
    %1133 = vmatpush1.bf16.msra.mxu0 0
    %1134 = vmatprep.subr.bf16.mxu0 0
    %1135 = vmatpush1.bf16.msra.mxu0 0
    %1136 = vmatprep.subr.bf16.mxu0 0
    %1137 = vmatpush1.bf16.msra.mxu0 0
    %1138 = vmatprep.subr.bf16.mxu0 0
    %1139 = vmatpush1.bf16.msra.mxu0 0
    %1140 = vmatprep.subr.bf16.mxu0 0
    %1141 = vmatpush1.bf16.msra.mxu0 0
    %1142 = vmatprep.subr.bf16.mxu0 0
    %1143 = vmatpush1.bf16.msra.mxu0 0
    %1144 = vmatprep.mubr.bf16.mxu0 0
    %1145 = vmatmul.mubr.bf16.gmra.mrb[0].mxu0 %v1110
    %v1146 = vpop.f32.mrb[0].mxu0
    %v1147 = vadd.f32 %v865, %v1146
    %v1148 = vpop.f32.mrb[0].mxu0
    %v1149 = vpop.f32.mrb[0].mxu0
    %v1150 = vadd.f32 %v865, %v1149
    %v1151 = vpop.f32.mrb[0].mxu0
    %1152 = vdwg.mxu0
    %v1153 = vsel %vm912, %v1147, -inf
    %1154 = vmax.xlane.f32.xlu0 %v1153
    %v1155 = vpop.xlane.xlu0 %1154
    %v1156 = vsel %vm912, %v1150, -inf
    %1157 = vmax.xlane.f32.xlu0 %v1156
    %v1158 = vpop.xlane.xlu0 %1157
    %v1159 = vsub.f32 %v1147, %v1155
    %v1160 = vsub.f32 %v1150, %v1158
    %v1161 = vmul.f32 %v1159, 1.442695
    %v1162 = vpow.pop %v1161
    %v1163 = vmul.f32 %v1160, 1.442695
    %v1164 = vpow.pop %v1163
    %v1165 = vsel %vm912, %v1162, 0.0
    %1166 = vadd.xlane.f32.xlu0 %v1165
    %v1167 = vpop.xlane.xlu0 %1166
    %v1168 = vsel %vm912, %v1164, 0.0
    %1169 = vadd.xlane.f32.xlu0 %v1168
    %v1170 = vpop.xlane.xlu0 %1169
    %v1171 = vrcp.pop %v1167
    %v1172 = vrcp.pop %v1170
    %v1173 = vmul.f32 %v1162, %v1171
    %v1174 = vmul.f32 %v1164, %v1172
    %v1175 = vpack.c.bf16 %v1174, %v1173
    %1177 = vrot.lane.b32.xlu0 %v774, 96
    %v1178 = vpop.permute.xlu0 %1177
    %v1180 = vsel %vm912, %v1175, 0
    %v1183 = vsel %vm939, %v1178, 0
    %1185 = vmatprep.subr.bf16.mxu0 0
    %1186 = vmatpush1.bf16.msra.mxu0 %v1183
    %1187 = vmatprep.subr.bf16.mxu0 0
    %1188 = vmatpush1.bf16.msra.mxu0 0
    %1189 = vmatprep.subr.bf16.mxu0 0
    %1190 = vmatpush1.bf16.msra.mxu0 0
    %1191 = vmatprep.subr.bf16.mxu0 0
    %1192 = vmatpush1.bf16.msra.mxu0 0
    %1193 = vmatprep.subr.bf16.mxu0 0
    %1194 = vmatpush1.bf16.msra.mxu0 0
    %1195 = vmatprep.subr.bf16.mxu0 0
    %1196 = vmatpush1.bf16.msra.mxu0 0
    %1197 = vmatprep.subr.bf16.mxu0 0
    %1198 = vmatpush1.bf16.msra.mxu0 0
    %1199 = vmatprep.subr.bf16.mxu0 0
    %1200 = vmatpush1.bf16.msra.mxu0 0
    %1201 = vmatprep.subr.bf16.mxu0 0
    %1202 = vmatpush1.bf16.msra.mxu0 0
    %1203 = vmatprep.subr.bf16.mxu0 0
    %1204 = vmatpush1.bf16.msra.mxu0 0
    %1205 = vmatprep.subr.bf16.mxu0 0
    %1206 = vmatpush1.bf16.msra.mxu0 0
    %1207 = vmatprep.subr.bf16.mxu0 0
    %1208 = vmatpush1.bf16.msra.mxu0 0
    %1209 = vmatprep.subr.bf16.mxu0 0
    %1210 = vmatpush1.bf16.msra.mxu0 0
    %1211 = vmatprep.subr.bf16.mxu0 0
    %1212 = vmatpush1.bf16.msra.mxu0 0
    %1213 = vmatprep.subr.bf16.mxu0 0
    %1214 = vmatpush1.bf16.msra.mxu0 0
    %1215 = vmatprep.subr.bf16.mxu0 0
    %1216 = vmatpush1.bf16.msra.mxu0 0
    %1217 = vmatprep.mubr.bf16.mxu0 0
    %1218 = vmatmul.mubr.bf16.gmra.mrb[0].mxu0 %v1180
    %v1219 = vpop.f32.mrb[0].mxu0
    %v1220 = vadd.f32 0.0, %v1219
    %v1221 = vpop.f32.mrb[0].mxu0
    %v1222 = vpop.f32.mrb[0].mxu0
    %v1223 = vadd.f32 0.0, %v1222
    %v1224 = vpop.f32.mrb[0].mxu0
    %1225 = vdwg.mxu0
    %1228 = vrot.lane.b32.xlu0 %v1220, 32
    %v1229 = vpop.permute.xlu0 %1228
    %1230 = vrot.lane.b32.xlu0 %v1223, 32
    %v1231 = vpop.permute.xlu0 %1230
    %vm1234 = vcmask 523520
    %1235 = vst.msk [vmem:[#allocation2] sm:$0xff] %vm1234, %v1229
    %1236 = vst.msk [vmem:[#allocation2 + $0x10] sm:$0xff] %vm1234, %v1231
    %1238 = vrot.lane.b32.xlu0 %v768, 96
    %v1239 = vpop.permute.xlu0 %1238
    %v1241 = vsel %vm867, %v1239, 0
    %1243 = vmatprep.subr.bf16.mxu0 0
    %1244 = vmatpush1.bf16.msra.mxu0 %v809
    %1245 = vmatprep.subr.bf16.mxu0 0
    %1246 = vmatpush1.bf16.msra.mxu0 %v810
    %1247 = vmatprep.subr.bf16.mxu0 0
    %1248 = vmatpush1.bf16.msra.mxu0 0
    %1249 = vmatprep.subr.bf16.mxu0 0
    %1250 = vmatpush1.bf16.msra.mxu0 0
    %1251 = vmatprep.subr.bf16.mxu0 0
    %1252 = vmatpush1.bf16.msra.mxu0 0
    %1253 = vmatprep.subr.bf16.mxu0 0
    %1254 = vmatpush1.bf16.msra.mxu0 0
    %1255 = vmatprep.subr.bf16.mxu0 0
    %1256 = vmatpush1.bf16.msra.mxu0 0
    %1257 = vmatprep.subr.bf16.mxu0 0
    %1258 = vmatpush1.bf16.msra.mxu0 0
    %1259 = vmatprep.subr.bf16.mxu0 0
    %1260 = vmatpush1.bf16.msra.mxu0 0
    %1261 = vmatprep.subr.bf16.mxu0 0
    %1262 = vmatpush1.bf16.msra.mxu0 0
    %1263 = vmatprep.subr.bf16.mxu0 0
    %1264 = vmatpush1.bf16.msra.mxu0 0
    %1265 = vmatprep.subr.bf16.mxu0 0
    %1266 = vmatpush1.bf16.msra.mxu0 0
    %1267 = vmatprep.subr.bf16.mxu0 0
    %1268 = vmatpush1.bf16.msra.mxu0 0
    %1269 = vmatprep.subr.bf16.mxu0 0
    %1270 = vmatpush1.bf16.msra.mxu0 0
    %1271 = vmatprep.subr.bf16.mxu0 0
    %1272 = vmatpush1.bf16.msra.mxu0 0
    %1273 = vmatprep.subr.bf16.mxu0 0
    %1274 = vmatpush1.bf16.msra.mxu0 0
    %1275 = vmatprep.mubr.bf16.mxu0 0
    %1276 = vmatmul.mubr.bf16.gmra.mrb[0].mxu0 %v1241
    %v1277 = vpop.f32.mrb[0].mxu0
    %v1278 = vadd.f32 %v990, %v1277
    %v1279 = vpop.f32.mrb[0].mxu0
    %v1280 = vpop.f32.mrb[0].mxu0
    %v1281 = vadd.f32 %v990, %v1280
    %v1282 = vpop.f32.mrb[0].mxu0
    %1283 = vdwg.mxu0
    %v1284 = vsel %vm1036, %v1278, -inf
    %1285 = vmax.xlane.f32.xlu0 %v1284
    %v1286 = vpop.xlane.xlu0 %1285
    %v1287 = vsel %vm1036, %v1281, -inf
    %1288 = vmax.xlane.f32.xlu0 %v1287
    %v1289 = vpop.xlane.xlu0 %1288
    %v1290 = vsub.f32 %v1278, %v1286
    %v1291 = vsub.f32 %v1281, %v1289
    %v1292 = vmul.f32 %v1290, 1.442695
    %v1293 = vpow.pop %v1292
    %v1294 = vmul.f32 %v1291, 1.442695
    %v1295 = vpow.pop %v1294
    %v1296 = vsel %vm1036, %v1293, 0.0
    %1297 = vadd.xlane.f32.xlu0 %v1296
    %v1298 = vpop.xlane.xlu0 %1297
    %v1299 = vsel %vm1036, %v1295, 0.0
    %1300 = vadd.xlane.f32.xlu0 %v1299
    %v1301 = vpop.xlane.xlu0 %1300
    %v1302 = vrcp.pop %v1298
    %v1303 = vrcp.pop %v1301
    %v1304 = vmul.f32 %v1293, %v1302
    %v1305 = vmul.f32 %v1295, %v1303
    %v1306 = vpack.c.bf16 %v1305, %v1304
    %1308 = vrot.lane.b32.xlu0 %v769, 96
    %v1309 = vpop.permute.xlu0 %1308
    %v1312 = vsel %vm1036, %v1306, 0
    %1314 = vmatprep.subr.bf16.mxu0 0
    %1315 = vmatpush1.bf16.msra.mxu0 %v1309
    %1316 = vmatprep.subr.bf16.mxu0 0
    %1317 = vmatpush1.bf16.msra.mxu0 0
    %1318 = vmatprep.subr.bf16.mxu0 0
    %1319 = vmatpush1.bf16.msra.mxu0 0
    %1320 = vmatprep.subr.bf16.mxu0 0
    %1321 = vmatpush1.bf16.msra.mxu0 0
    %1322 = vmatprep.subr.bf16.mxu0 0
    %1323 = vmatpush1.bf16.msra.mxu0 0
    %1324 = vmatprep.subr.bf16.mxu0 0
    %1325 = vmatpush1.bf16.msra.mxu0 0
    %1326 = vmatprep.subr.bf16.mxu0 0
    %1327 = vmatpush1.bf16.msra.mxu0 0
    %1328 = vmatprep.subr.bf16.mxu0 0
    %1329 = vmatpush1.bf16.msra.mxu0 0
    %1330 = vmatprep.subr.bf16.mxu0 0
    %1331 = vmatpush1.bf16.msra.mxu0 0
    %1332 = vmatprep.subr.bf16.mxu0 0
    %1333 = vmatpush1.bf16.msra.mxu0 0
    %1334 = vmatprep.subr.bf16.mxu0 0
    %1335 = vmatpush1.bf16.msra.mxu0 0
    %1336 = vmatprep.subr.bf16.mxu0 0
    %1337 = vmatpush1.bf16.msra.mxu0 0
    %1338 = vmatprep.subr.bf16.mxu0 0
    %1339 = vmatpush1.bf16.msra.mxu0 0
    %1340 = vmatprep.subr.bf16.mxu0 0
    %1341 = vmatpush1.bf16.msra.mxu0 0
    %1342 = vmatprep.subr.bf16.mxu0 0
    %1343 = vmatpush1.bf16.msra.mxu0 0
    %1344 = vmatprep.subr.bf16.mxu0 0
    %1345 = vmatpush1.bf16.msra.mxu0 0
    %1346 = vmatprep.mubr.bf16.mxu0 0
    %1347 = vmatmul.mubr.bf16.gmra.mrb[0].mxu0 %v1312
    %v1348 = vpop.f32.mrb[0].mxu0
    %v1349 = vadd.f32 0.0, %v1348
    %v1350 = vpop.f32.mrb[0].mxu0
    %v1351 = vpop.f32.mrb[0].mxu0
    %v1352 = vadd.f32 0.0, %v1351
    %v1353 = vpop.f32.mrb[0].mxu0
    %1354 = vdwg.mxu0
    %1357 = vrot.lane.b32.xlu0 %v1349, 32
    %v1358 = vpop.permute.xlu0 %1357
    %1359 = vrot.lane.b32.xlu0 %v1352, 32
    %v1360 = vpop.permute.xlu0 %1359
    %1363 = vst.msk [vmem:[#allocation2 + $0x8] sm:$0xff] %vm1234, %v1358
    %1364 = vst.msk [vmem:[#allocation2 + $0x18] sm:$0xff] %vm1234, %v1360
    %1365 = vrot.lane.b32.xlu0 %v770, 64
    %v1366 = vpop.permute.xlu0 %1365
    %v1368 = vsel %vm867, %v1366, 0
    %1370 = vmatprep.subr.bf16.mxu0 0
    %1371 = vmatpush1.bf16.msra.mxu0 %v851
    %1372 = vmatprep.subr.bf16.mxu0 0
    %1373 = vmatpush1.bf16.msra.mxu0 %v852
    %1374 = vmatprep.subr.bf16.mxu0 0
    %1375 = vmatpush1.bf16.msra.mxu0 0
    %1376 = vmatprep.subr.bf16.mxu0 0
    %1377 = vmatpush1.bf16.msra.mxu0 0
    %1378 = vmatprep.subr.bf16.mxu0 0
    %1379 = vmatpush1.bf16.msra.mxu0 0
    %1380 = vmatprep.subr.bf16.mxu0 0
    %1381 = vmatpush1.bf16.msra.mxu0 0
    %1382 = vmatprep.subr.bf16.mxu0 0
    %1383 = vmatpush1.bf16.msra.mxu0 0
    %1384 = vmatprep.subr.bf16.mxu0 0
    %1385 = vmatpush1.bf16.msra.mxu0 0
    %1386 = vmatprep.subr.bf16.mxu0 0
    %1387 = vmatpush1.bf16.msra.mxu0 0
    %1388 = vmatprep.subr.bf16.mxu0 0
    %1389 = vmatpush1.bf16.msra.mxu0 0
    %1390 = vmatprep.subr.bf16.mxu0 0
    %1391 = vmatpush1.bf16.msra.mxu0 0
    %1392 = vmatprep.subr.bf16.mxu0 0
    %1393 = vmatpush1.bf16.msra.mxu0 0
    %1394 = vmatprep.subr.bf16.mxu0 0
    %1395 = vmatpush1.bf16.msra.mxu0 0
    %1396 = vmatprep.subr.bf16.mxu0 0
    %1397 = vmatpush1.bf16.msra.mxu0 0
    %1398 = vmatprep.subr.bf16.mxu0 0
    %1399 = vmatpush1.bf16.msra.mxu0 0
    %1400 = vmatprep.subr.bf16.mxu0 0
    %1401 = vmatpush1.bf16.msra.mxu0 0
    %1402 = vmatprep.mubr.bf16.mxu0 0
    %1403 = vmatmul.mubr.bf16.gmra.mrb[0].mxu0 %v1368
    %v1404 = vpop.f32.mrb[0].mxu0
    %v1405 = vadd.f32 %v865, %v1404
    %v1406 = vpop.f32.mrb[0].mxu0
    %v1407 = vpop.f32.mrb[0].mxu0
    %v1408 = vadd.f32 %v865, %v1407
    %v1409 = vpop.f32.mrb[0].mxu0
    %1410 = vdwg.mxu0
    %v1411 = vsel %vm912, %v1405, -inf
    %1412 = vmax.xlane.f32.xlu0 %v1411
    %v1413 = vpop.xlane.xlu0 %1412
    %v1414 = vsel %vm912, %v1408, -inf
    %1415 = vmax.xlane.f32.xlu0 %v1414
    %v1416 = vpop.xlane.xlu0 %1415
    %v1417 = vsub.f32 %v1405, %v1413
    %v1418 = vsub.f32 %v1408, %v1416
    %v1419 = vmul.f32 %v1417, 1.442695
    %v1420 = vpow.pop %v1419
    %v1421 = vmul.f32 %v1418, 1.442695
    %v1422 = vpow.pop %v1421
    %v1423 = vsel %vm912, %v1420, 0.0
    %1424 = vadd.xlane.f32.xlu0 %v1423
    %v1425 = vpop.xlane.xlu0 %1424
    %v1426 = vsel %vm912, %v1422, 0.0
    %1427 = vadd.xlane.f32.xlu0 %v1426
    %v1428 = vpop.xlane.xlu0 %1427
    %v1429 = vrcp.pop %v1425
    %v1430 = vrcp.pop %v1428
    %v1431 = vmul.f32 %v1420, %v1429
    %v1432 = vmul.f32 %v1422, %v1430
    %v1433 = vpack.c.bf16 %v1432, %v1431
    %1434 = vrot.lane.b32.xlu0 %v774, 64
    %v1435 = vpop.permute.xlu0 %1434
    %v1437 = vsel %vm912, %v1433, 0
    %v1440 = vsel %vm939, %v1435, 0
    %1442 = vmatprep.subr.bf16.mxu0 0
    %1443 = vmatpush1.bf16.msra.mxu0 %v1440
    %1444 = vmatprep.subr.bf16.mxu0 0
    %1445 = vmatpush1.bf16.msra.mxu0 0
    %1446 = vmatprep.subr.bf16.mxu0 0
    %1447 = vmatpush1.bf16.msra.mxu0 0
    %1448 = vmatprep.subr.bf16.mxu0 0
    %1449 = vmatpush1.bf16.msra.mxu0 0
    %1450 = vmatprep.subr.bf16.mxu0 0
    %1451 = vmatpush1.bf16.msra.mxu0 0
    %1452 = vmatprep.subr.bf16.mxu0 0
    %1453 = vmatpush1.bf16.msra.mxu0 0
    %1454 = vmatprep.subr.bf16.mxu0 0
    %1455 = vmatpush1.bf16.msra.mxu0 0
    %1456 = vmatprep.subr.bf16.mxu0 0
    %1457 = vmatpush1.bf16.msra.mxu0 0
    %1458 = vmatprep.subr.bf16.mxu0 0
    %1459 = vmatpush1.bf16.msra.mxu0 0
    %1460 = vmatprep.subr.bf16.mxu0 0
    %1461 = vmatpush1.bf16.msra.mxu0 0
    %1462 = vmatprep.subr.bf16.mxu0 0
    %1463 = vmatpush1.bf16.msra.mxu0 0
    %1464 = vmatprep.subr.bf16.mxu0 0
    %1465 = vmatpush1.bf16.msra.mxu0 0
    %1466 = vmatprep.subr.bf16.mxu0 0
    %1467 = vmatpush1.bf16.msra.mxu0 0
    %1468 = vmatprep.subr.bf16.mxu0 0
    %1469 = vmatpush1.bf16.msra.mxu0 0
    %1470 = vmatprep.subr.bf16.mxu0 0
    %1471 = vmatpush1.bf16.msra.mxu0 0
    %1472 = vmatprep.subr.bf16.mxu0 0
    %1473 = vmatpush1.bf16.msra.mxu0 0
    %1474 = vmatprep.mubr.bf16.mxu0 0
    %1475 = vmatmul.mubr.bf16.gmra.mrb[0].mxu0 %v1437
    %v1476 = vpop.f32.mrb[0].mxu0
    %v1477 = vadd.f32 0.0, %v1476
    %v1478 = vpop.f32.mrb[0].mxu0
    %v1479 = vpop.f32.mrb[0].mxu0
    %v1480 = vadd.f32 0.0, %v1479
    %v1481 = vpop.f32.mrb[0].mxu0
    %1482 = vdwg.mxu0
    %1485 = vrot.lane.b32.xlu0 %v1477, 64
    %v1486 = vpop.permute.xlu0 %1485
    %1487 = vrot.lane.b32.xlu0 %v1480, 64
    %v1488 = vpop.permute.xlu0 %1487
    %vm1491 = vcmask 785920
    %1492 = vst.msk [vmem:[#allocation2] sm:$0xff] %vm1491, %v1486
    %1493 = vst.msk [vmem:[#allocation2 + $0x10] sm:$0xff] %vm1491, %v1488
    %1494 = vrot.lane.b32.xlu0 %v768, 64
    %v1495 = vpop.permute.xlu0 %1494
    %v1497 = vsel %vm867, %v1495, 0
    %1499 = vmatprep.subr.bf16.mxu0 0
    %1500 = vmatpush1.bf16.msra.mxu0 %v811
    %1501 = vmatprep.subr.bf16.mxu0 0
    %1502 = vmatpush1.bf16.msra.mxu0 %v812
    %1503 = vmatprep.subr.bf16.mxu0 0
    %1504 = vmatpush1.bf16.msra.mxu0 0
    %1505 = vmatprep.subr.bf16.mxu0 0
    %1506 = vmatpush1.bf16.msra.mxu0 0
    %1507 = vmatprep.subr.bf16.mxu0 0
    %1508 = vmatpush1.bf16.msra.mxu0 0
    %1509 = vmatprep.subr.bf16.mxu0 0
    %1510 = vmatpush1.bf16.msra.mxu0 0
    %1511 = vmatprep.subr.bf16.mxu0 0
    %1512 = vmatpush1.bf16.msra.mxu0 0
    %1513 = vmatprep.subr.bf16.mxu0 0
    %1514 = vmatpush1.bf16.msra.mxu0 0
    %1515 = vmatprep.subr.bf16.mxu0 0
    %1516 = vmatpush1.bf16.msra.mxu0 0
    %1517 = vmatprep.subr.bf16.mxu0 0
    %1518 = vmatpush1.bf16.msra.mxu0 0
    %1519 = vmatprep.subr.bf16.mxu0 0
    %1520 = vmatpush1.bf16.msra.mxu0 0
    %1521 = vmatprep.subr.bf16.mxu0 0
    %1522 = vmatpush1.bf16.msra.mxu0 0
    %1523 = vmatprep.subr.bf16.mxu0 0
    %1524 = vmatpush1.bf16.msra.mxu0 0
    %1525 = vmatprep.subr.bf16.mxu0 0
    %1526 = vmatpush1.bf16.msra.mxu0 0
    %1527 = vmatprep.subr.bf16.mxu0 0
    %1528 = vmatpush1.bf16.msra.mxu0 0
    %1529 = vmatprep.subr.bf16.mxu0 0
    %1530 = vmatpush1.bf16.msra.mxu0 0
    %1531 = vmatprep.mubr.bf16.mxu0 0
    %1532 = vmatmul.mubr.bf16.gmra.mrb[0].mxu0 %v1497
    %v1533 = vpop.f32.mrb[0].mxu0
    %v1534 = vadd.f32 %v990, %v1533
    %v1535 = vpop.f32.mrb[0].mxu0
    %v1536 = vpop.f32.mrb[0].mxu0
    %v1537 = vadd.f32 %v990, %v1536
    %v1538 = vpop.f32.mrb[0].mxu0
    %1539 = vdwg.mxu0
    %v1540 = vsel %vm1036, %v1534, -inf
    %1541 = vmax.xlane.f32.xlu0 %v1540
    %v1542 = vpop.xlane.xlu0 %1541
    %v1543 = vsel %vm1036, %v1537, -inf
    %1544 = vmax.xlane.f32.xlu0 %v1543
    %v1545 = vpop.xlane.xlu0 %1544
    %v1546 = vsub.f32 %v1534, %v1542
    %v1547 = vsub.f32 %v1537, %v1545
    %v1548 = vmul.f32 %v1546, 1.442695
    %v1549 = vpow.pop %v1548
    %v1550 = vmul.f32 %v1547, 1.442695
    %v1551 = vpow.pop %v1550
    %v1552 = vsel %vm1036, %v1549, 0.0
    %1553 = vadd.xlane.f32.xlu0 %v1552
    %v1554 = vpop.xlane.xlu0 %1553
    %v1555 = vsel %vm1036, %v1551, 0.0
    %1556 = vadd.xlane.f32.xlu0 %v1555
    %v1557 = vpop.xlane.xlu0 %1556
    %v1558 = vrcp.pop %v1554
    %v1559 = vrcp.pop %v1557
    %v1560 = vmul.f32 %v1549, %v1558
    %v1561 = vmul.f32 %v1551, %v1559
    %v1562 = vpack.c.bf16 %v1561, %v1560
    %1563 = vrot.lane.b32.xlu0 %v769, 64
    %v1564 = vpop.permute.xlu0 %1563
    %v1567 = vsel %vm1036, %v1562, 0
    %1569 = vmatprep.subr.bf16.mxu0 0
    %1570 = vmatpush1.bf16.msra.mxu0 %v1564
    %1571 = vmatprep.subr.bf16.mxu0 0
    %1572 = vmatpush1.bf16.msra.mxu0 0
    %1573 = vmatprep.subr.bf16.mxu0 0
    %1574 = vmatpush1.bf16.msra.mxu0 0
    %1575 = vmatprep.subr.bf16.mxu0 0
    %1576 = vmatpush1.bf16.msra.mxu0 0
    %1577 = vmatprep.subr.bf16.mxu0 0
    %1578 = vmatpush1.bf16.msra.mxu0 0
    %1579 = vmatprep.subr.bf16.mxu0 0
    %1580 = vmatpush1.bf16.msra.mxu0 0
    %1581 = vmatprep.subr.bf16.mxu0 0
    %1582 = vmatpush1.bf16.msra.mxu0 0
    %1583 = vmatprep.subr.bf16.mxu0 0
    %1584 = vmatpush1.bf16.msra.mxu0 0
    %1585 = vmatprep.subr.bf16.mxu0 0
    %1586 = vmatpush1.bf16.msra.mxu0 0
    %1587 = vmatprep.subr.bf16.mxu0 0
    %1588 = vmatpush1.bf16.msra.mxu0 0
    %1589 = vmatprep.subr.bf16.mxu0 0
    %1590 = vmatpush1.bf16.msra.mxu0 0
    %1591 = vmatprep.subr.bf16.mxu0 0
    %1592 = vmatpush1.bf16.msra.mxu0 0
    %1593 = vmatprep.subr.bf16.mxu0 0
    %1594 = vmatpush1.bf16.msra.mxu0 0
    %1595 = vmatprep.subr.bf16.mxu0 0
    %1596 = vmatpush1.bf16.msra.mxu0 0
    %1597 = vmatprep.subr.bf16.mxu0 0
    %1598 = vmatpush1.bf16.msra.mxu0 0
    %1599 = vmatprep.subr.bf16.mxu0 0
    %1600 = vmatpush1.bf16.msra.mxu0 0
    %1601 = vmatprep.mubr.bf16.mxu0 0
    %1602 = vmatmul.mubr.bf16.gmra.mrb[0].mxu0 %v1567
    %v1603 = vpop.f32.mrb[0].mxu0
    %v1604 = vadd.f32 0.0, %v1603
    %v1605 = vpop.f32.mrb[0].mxu0
    %v1606 = vpop.f32.mrb[0].mxu0
    %v1607 = vadd.f32 0.0, %v1606
    %v1608 = vpop.f32.mrb[0].mxu0
    %1609 = vdwg.mxu0
    %1612 = vrot.lane.b32.xlu0 %v1604, 64
    %v1613 = vpop.permute.xlu0 %1612
    %1614 = vrot.lane.b32.xlu0 %v1607, 64
    %v1615 = vpop.permute.xlu0 %1614
    %1618 = vst.msk [vmem:[#allocation2 + $0x8] sm:$0xff] %vm1491, %v1613
    %1619 = vst.msk [vmem:[#allocation2 + $0x18] sm:$0xff] %vm1491, %v1615
    %1620 = vrot.lane.b32.xlu0 %v770, 32
    %v1621 = vpop.permute.xlu0 %1620
    %v1623 = vsel %vm867, %v1621, 0
    %1625 = vmatprep.subr.bf16.mxu0 0
    %1626 = vmatpush1.bf16.msra.mxu0 %v853
    %1627 = vmatprep.subr.bf16.mxu0 0
    %1628 = vmatpush1.bf16.msra.mxu0 %v854
    %1629 = vmatprep.subr.bf16.mxu0 0
    %1630 = vmatpush1.bf16.msra.mxu0 0
    %1631 = vmatprep.subr.bf16.mxu0 0
    %1632 = vmatpush1.bf16.msra.mxu0 0
    %1633 = vmatprep.subr.bf16.mxu0 0
    %1634 = vmatpush1.bf16.msra.mxu0 0
    %1635 = vmatprep.subr.bf16.mxu0 0
    %1636 = vmatpush1.bf16.msra.mxu0 0
    %1637 = vmatprep.subr.bf16.mxu0 0
    %1638 = vmatpush1.bf16.msra.mxu0 0
    %1639 = vmatprep.subr.bf16.mxu0 0
    %1640 = vmatpush1.bf16.msra.mxu0 0
    %1641 = vmatprep.subr.bf16.mxu0 0
    %1642 = vmatpush1.bf16.msra.mxu0 0
    %1643 = vmatprep.subr.bf16.mxu0 0
    %1644 = vmatpush1.bf16.msra.mxu0 0
    %1645 = vmatprep.subr.bf16.mxu0 0
    %1646 = vmatpush1.bf16.msra.mxu0 0
    %1647 = vmatprep.subr.bf16.mxu0 0
    %1648 = vmatpush1.bf16.msra.mxu0 0
    %1649 = vmatprep.subr.bf16.mxu0 0
    %1650 = vmatpush1.bf16.msra.mxu0 0
    %1651 = vmatprep.subr.bf16.mxu0 0
    %1652 = vmatpush1.bf16.msra.mxu0 0
    %1653 = vmatprep.subr.bf16.mxu0 0
    %1654 = vmatpush1.bf16.msra.mxu0 0
    %1655 = vmatprep.subr.bf16.mxu0 0
    %1656 = vmatpush1.bf16.msra.mxu0 0
    %1657 = vmatprep.mubr.bf16.mxu0 0
    %1658 = vmatmul.mubr.bf16.gmra.mrb[0].mxu0 %v1623
    %v1659 = vpop.f32.mrb[0].mxu0
    %v1660 = vadd.f32 %v865, %v1659
    %v1661 = vpop.f32.mrb[0].mxu0
    %v1662 = vpop.f32.mrb[0].mxu0
    %v1663 = vadd.f32 %v865, %v1662
    %v1664 = vpop.f32.mrb[0].mxu0
    %1665 = vdwg.mxu0
    %v1666 = vsel %vm912, %v1660, -inf
    %1667 = vmax.xlane.f32.xlu0 %v1666
    %v1668 = vpop.xlane.xlu0 %1667
    %v1669 = vsel %vm912, %v1663, -inf
    %1670 = vmax.xlane.f32.xlu0 %v1669
    %v1671 = vpop.xlane.xlu0 %1670
    %v1672 = vsub.f32 %v1660, %v1668
    %v1673 = vsub.f32 %v1663, %v1671
    %v1674 = vmul.f32 %v1672, 1.442695
    %v1675 = vpow.pop %v1674
    %v1676 = vmul.f32 %v1673, 1.442695
    %v1677 = vpow.pop %v1676
    %v1678 = vsel %vm912, %v1675, 0.0
    %1679 = vadd.xlane.f32.xlu0 %v1678
    %v1680 = vpop.xlane.xlu0 %1679
    %v1681 = vsel %vm912, %v1677, 0.0
    %1682 = vadd.xlane.f32.xlu0 %v1681
    %v1683 = vpop.xlane.xlu0 %1682
    %v1684 = vrcp.pop %v1680
    %v1685 = vrcp.pop %v1683
    %v1686 = vmul.f32 %v1675, %v1684
    %v1687 = vmul.f32 %v1677, %v1685
    %v1688 = vpack.c.bf16 %v1687, %v1686
    %1689 = vrot.lane.b32.xlu0 %v774, 32
    %v1690 = vpop.permute.xlu0 %1689
    %v1692 = vsel %vm912, %v1688, 0
    %v1695 = vsel %vm939, %v1690, 0
    %1697 = vmatprep.subr.bf16.mxu0 0
    %1698 = vmatpush1.bf16.msra.mxu0 %v1695
    %1699 = vmatprep.subr.bf16.mxu0 0
    %1700 = vmatpush1.bf16.msra.mxu0 0
    %1701 = vmatprep.subr.bf16.mxu0 0
    %1702 = vmatpush1.bf16.msra.mxu0 0
    %1703 = vmatprep.subr.bf16.mxu0 0
    %1704 = vmatpush1.bf16.msra.mxu0 0
    %1705 = vmatprep.subr.bf16.mxu0 0
    %1706 = vmatpush1.bf16.msra.mxu0 0
    %1707 = vmatprep.subr.bf16.mxu0 0
    %1708 = vmatpush1.bf16.msra.mxu0 0
    %1709 = vmatprep.subr.bf16.mxu0 0
    %1710 = vmatpush1.bf16.msra.mxu0 0
    %1711 = vmatprep.subr.bf16.mxu0 0
    %1712 = vmatpush1.bf16.msra.mxu0 0
    %1713 = vmatprep.subr.bf16.mxu0 0
    %1714 = vmatpush1.bf16.msra.mxu0 0
    %1715 = vmatprep.subr.bf16.mxu0 0
    %1716 = vmatpush1.bf16.msra.mxu0 0
    %1717 = vmatprep.subr.bf16.mxu0 0
    %1718 = vmatpush1.bf16.msra.mxu0 0
    %1719 = vmatprep.subr.bf16.mxu0 0
    %1720 = vmatpush1.bf16.msra.mxu0 0
    %1721 = vmatprep.subr.bf16.mxu0 0
    %1722 = vmatpush1.bf16.msra.mxu0 0
    %1723 = vmatprep.subr.bf16.mxu0 0
    %1724 = vmatpush1.bf16.msra.mxu0 0
    %1725 = vmatprep.subr.bf16.mxu0 0
    %1726 = vmatpush1.bf16.msra.mxu0 0
    %1727 = vmatprep.subr.bf16.mxu0 0
    %1728 = vmatpush1.bf16.msra.mxu0 0
    %1729 = vmatprep.mubr.bf16.mxu0 0
    %1730 = vmatmul.mubr.bf16.gmra.mrb[0].mxu0 %v1692
    %v1731 = vpop.f32.mrb[0].mxu0
    %v1732 = vadd.f32 0.0, %v1731
    %v1733 = vpop.f32.mrb[0].mxu0
    %v1734 = vpop.f32.mrb[0].mxu0
    %v1735 = vadd.f32 0.0, %v1734
    %v1736 = vpop.f32.mrb[0].mxu0
    %1737 = vdwg.mxu0
    %1740 = vrot.lane.b32.xlu0 %v1732, 96
    %v1741 = vpop.permute.xlu0 %1740
    %1742 = vrot.lane.b32.xlu0 %v1735, 96
    %v1743 = vpop.permute.xlu0 %1742
    %vm1746 = vcmask 1048320
    %1747 = vst.msk [vmem:[#allocation2] sm:$0xff] %vm1746, %v1741
    %1748 = vst.msk [vmem:[#allocation2 + $0x10] sm:$0xff] %vm1746, %v1743
    %1749 = vrot.lane.b32.xlu0 %v768, 32
    %v1750 = vpop.permute.xlu0 %1749
    %v1752 = vsel %vm867, %v1750, 0
    %1754 = vmatprep.subr.bf16.mxu0 0
    %1755 = vmatpush1.bf16.msra.mxu0 %v813
    %1756 = vmatprep.subr.bf16.mxu0 0
    %1757 = vmatpush1.bf16.msra.mxu0 %v814
    %1758 = vmatprep.subr.bf16.mxu0 0
    %1759 = vmatpush1.bf16.msra.mxu0 0
    %1760 = vmatprep.subr.bf16.mxu0 0
    %1761 = vmatpush1.bf16.msra.mxu0 0
    %1762 = vmatprep.subr.bf16.mxu0 0
    %1763 = vmatpush1.bf16.msra.mxu0 0
    %1764 = vmatprep.subr.bf16.mxu0 0
    %1765 = vmatpush1.bf16.msra.mxu0 0
    %1766 = vmatprep.subr.bf16.mxu0 0
    %1767 = vmatpush1.bf16.msra.mxu0 0
    %1768 = vmatprep.subr.bf16.mxu0 0
    %1769 = vmatpush1.bf16.msra.mxu0 0
    %1770 = vmatprep.subr.bf16.mxu0 0
    %1771 = vmatpush1.bf16.msra.mxu0 0
    %1772 = vmatprep.subr.bf16.mxu0 0
    %1773 = vmatpush1.bf16.msra.mxu0 0
    %1774 = vmatprep.subr.bf16.mxu0 0
    %1775 = vmatpush1.bf16.msra.mxu0 0
    %1776 = vmatprep.subr.bf16.mxu0 0
    %1777 = vmatpush1.bf16.msra.mxu0 0
    %1778 = vmatprep.subr.bf16.mxu0 0
    %1779 = vmatpush1.bf16.msra.mxu0 0
    %1780 = vmatprep.subr.bf16.mxu0 0
    %1781 = vmatpush1.bf16.msra.mxu0 0
    %1782 = vmatprep.subr.bf16.mxu0 0
    %1783 = vmatpush1.bf16.msra.mxu0 0
    %1784 = vmatprep.subr.bf16.mxu0 0
    %1785 = vmatpush1.bf16.msra.mxu0 0
    %1786 = vmatprep.mubr.bf16.mxu0 0
    %1787 = vmatmul.mubr.bf16.gmra.mrb[0].mxu0 %v1752
    %v1788 = vpop.f32.mrb[0].mxu0
    %v1789 = vadd.f32 %v990, %v1788
    %v1790 = vpop.f32.mrb[0].mxu0
    %v1791 = vpop.f32.mrb[0].mxu0
    %v1792 = vadd.f32 %v990, %v1791
    %v1793 = vpop.f32.mrb[0].mxu0
    %1794 = vdwg.mxu0
    %v1795 = vsel %vm1036, %v1789, -inf
    %1796 = vmax.xlane.f32.xlu0 %v1795
    %v1797 = vpop.xlane.xlu0 %1796
    %v1798 = vsel %vm1036, %v1792, -inf
    %1799 = vmax.xlane.f32.xlu0 %v1798
    %v1800 = vpop.xlane.xlu0 %1799
    %v1801 = vsub.f32 %v1789, %v1797
    %v1802 = vsub.f32 %v1792, %v1800
    %v1803 = vmul.f32 %v1801, 1.442695
    %v1804 = vpow.pop %v1803
    %v1805 = vmul.f32 %v1802, 1.442695
    %v1806 = vpow.pop %v1805
    %v1807 = vsel %vm1036, %v1804, 0.0
    %1808 = vadd.xlane.f32.xlu0 %v1807
    %v1809 = vpop.xlane.xlu0 %1808
    %v1810 = vsel %vm1036, %v1806, 0.0
    %1811 = vadd.xlane.f32.xlu0 %v1810
    %v1812 = vpop.xlane.xlu0 %1811
    %v1813 = vrcp.pop %v1809
    %v1814 = vrcp.pop %v1812
    %v1815 = vmul.f32 %v1804, %v1813
    %v1816 = vmul.f32 %v1806, %v1814
    %v1817 = vpack.c.bf16 %v1816, %v1815
    %1818 = vrot.lane.b32.xlu0 %v769, 32
    %v1819 = vpop.permute.xlu0 %1818
    %v1822 = vsel %vm1036, %v1817, 0
    %1824 = vmatprep.subr.bf16.mxu0 0
    %1825 = vmatpush1.bf16.msra.mxu0 %v1819
    %1826 = vmatprep.subr.bf16.mxu0 0
    %1827 = vmatpush1.bf16.msra.mxu0 0
    %1828 = vmatprep.subr.bf16.mxu0 0
    %1829 = vmatpush1.bf16.msra.mxu0 0
    %1830 = vmatprep.subr.bf16.mxu0 0
    %1831 = vmatpush1.bf16.msra.mxu0 0
    %1832 = vmatprep.subr.bf16.mxu0 0
    %1833 = vmatpush1.bf16.msra.mxu0 0
    %1834 = vmatprep.subr.bf16.mxu0 0
    %1835 = vmatpush1.bf16.msra.mxu0 0
    %1836 = vmatprep.subr.bf16.mxu0 0
    %1837 = vmatpush1.bf16.msra.mxu0 0
    %1838 = vmatprep.subr.bf16.mxu0 0
    %1839 = vmatpush1.bf16.msra.mxu0 0
    %1840 = vmatprep.subr.bf16.mxu0 0
    %1841 = vmatpush1.bf16.msra.mxu0 0
    %1842 = vmatprep.subr.bf16.mxu0 0
    %1843 = vmatpush1.bf16.msra.mxu0 0
    %1844 = vmatprep.subr.bf16.mxu0 0
    %1845 = vmatpush1.bf16.msra.mxu0 0
    %1846 = vmatprep.subr.bf16.mxu0 0
    %1847 = vmatpush1.bf16.msra.mxu0 0
    %1848 = vmatprep.subr.bf16.mxu0 0
    %1849 = vmatpush1.bf16.msra.mxu0 0
    %1850 = vmatprep.subr.bf16.mxu0 0
    %1851 = vmatpush1.bf16.msra.mxu0 0
    %1852 = vmatprep.subr.bf16.mxu0 0
    %1853 = vmatpush1.bf16.msra.mxu0 0
    %1854 = vmatprep.subr.bf16.mxu0 0
    %1855 = vmatpush1.bf16.msra.mxu0 0
    %1856 = vmatprep.mubr.bf16.mxu0 0
    %1857 = vmatmul.mubr.bf16.gmra.mrb[0].mxu0 %v1822
    %v1858 = vpop.f32.mrb[0].mxu0
    %v1859 = vadd.f32 0.0, %v1858
    %v1860 = vpop.f32.mrb[0].mxu0
    %v1861 = vpop.f32.mrb[0].mxu0
    %v1862 = vadd.f32 0.0, %v1861
    %v1863 = vpop.f32.mrb[0].mxu0
    %1864 = vdwg.mxu0
    %1867 = vrot.lane.b32.xlu0 %v1859, 96
    %v1868 = vpop.permute.xlu0 %1867
    %1869 = vrot.lane.b32.xlu0 %v1862, 96
    %v1870 = vpop.permute.xlu0 %1869
    %1873 = vst.msk [vmem:[#allocation2 + $0x8] sm:$0xff] %vm1746, %v1868
    %1874 = vst.msk [vmem:[#allocation2 + $0x18] sm:$0xff] %vm1746, %v1870
    %1875 = vxpose.xlu0.b32.start [1/16] %v558, 128
    %1876 = vxpose.xlu0.b32.cont [2/16] %v562, 128
    %1877 = vxpose.xlu0.b32.cont [3/16] 0.0, 128
    %1878 = vxpose.xlu0.b32.cont [4/16] 0.0, 128
    %1879 = vxpose.xlu0.b32.cont [5/16] 0.0, 128
    %1880 = vxpose.xlu0.b32.cont [6/16] 0.0, 128
    %1881 = vxpose.xlu0.b32.cont [7/16] 0.0, 128
    %1882 = vxpose.xlu0.b32.cont [8/16] 0.0, 128
    %1883 = vxpose.xlu0.b32.cont [9/16] 0.0, 128
    %1884 = vxpose.xlu0.b32.cont [10/16] 0.0, 128
    %1885 = vxpose.xlu0.b32.cont [11/16] 0.0, 128
    %1886 = vxpose.xlu0.b32.cont [12/16] 0.0, 128
    %1887 = vxpose.xlu0.b32.cont [13/16] 0.0, 128
    %1888 = vxpose.xlu0.b32.cont [14/16] 0.0, 128
    %1889 = vxpose.xlu0.b32.cont [15/16] 0.0, 128
    %1890 = vxpose.xlu0.b32.end [16/16] 0.0, 128
    %v1891 = vpop.trf.xlu0
    %v1892 = vpop.trf.xlu0
    %v1893 = vpop.trf.xlu0
    %v1894 = vpop.trf.xlu0
    %v1895 = vpop.trf.xlu0
    %v1896 = vpop.trf.xlu0
    %v1897 = vpop.trf.xlu0
    %v1898 = vpop.trf.xlu0
    %v1899 = vpop.trf.xlu0
    %v1900 = vpop.trf.xlu0
    %v1901 = vpop.trf.xlu0
    %v1902 = vpop.trf.xlu0
    %v1903 = vpop.trf.xlu0
    %v1904 = vpop.trf.xlu0
    %v1905 = vpop.trf.xlu0
    %v1906 = vpop.trf.xlu0
    %v1907 = vpack.c.bf16 %v1892, %v1891
    %v1908 = vpack.c.bf16 %v1894, %v1893
    %v1909 = vpack.c.bf16 %v1896, %v1895
    %v1910 = vpack.c.bf16 %v1898, %v1897
    %v1911 = vpack.c.bf16 %v1900, %v1899
    %v1912 = vpack.c.bf16 %v1902, %v1901
    %v1913 = vpack.c.bf16 %v1904, %v1903
    %v1914 = vpack.c.bf16 %v1906, %v1905
    %1915 = vxpose.xlu0.b32.start [1/16] %v764, 128
    %1916 = vxpose.xlu0.b32.cont [2/16] 0.0, 128
    %1917 = vxpose.xlu0.b32.cont [3/16] 0.0, 128
    %1918 = vxpose.xlu0.b32.cont [4/16] 0.0, 128
    %1919 = vxpose.xlu0.b32.cont [5/16] 0.0, 128
    %1920 = vxpose.xlu0.b32.cont [6/16] 0.0, 128
    %1921 = vxpose.xlu0.b32.cont [7/16] 0.0, 128
    %1922 = vxpose.xlu0.b32.cont [8/16] 0.0, 128
    %1923 = vxpose.xlu0.b32.cont [9/16] 0.0, 128
    %1924 = vxpose.xlu0.b32.cont [10/16] 0.0, 128
    %1925 = vxpose.xlu0.b32.cont [11/16] 0.0, 128
    %1926 = vxpose.xlu0.b32.cont [12/16] 0.0, 128
    %1927 = vxpose.xlu0.b32.cont [13/16] 0.0, 128
    %1928 = vxpose.xlu0.b32.cont [14/16] 0.0, 128
    %1929 = vxpose.xlu0.b32.cont [15/16] 0.0, 128
    %1930 = vxpose.xlu0.b32.end [16/16] 0.0, 128
    %v1931 = vpop.trf.xlu0
    %v1932 = vpop.trf.xlu0
    %v1933 = vpop.trf.xlu0
    %v1934 = vpop.trf.xlu0
    %v1935 = vpop.trf.xlu0
    %v1936 = vpop.trf.xlu0
    %v1937 = vpop.trf.xlu0
    %v1938 = vpop.trf.xlu0
    %v1939 = vpop.trf.xlu0
    %v1940 = vpop.trf.xlu0
    %v1941 = vpop.trf.xlu0
    %v1942 = vpop.trf.xlu0
    %v1943 = vpop.trf.xlu0
    %v1944 = vpop.trf.xlu0
    %v1945 = vpop.trf.xlu0
    %v1946 = vpop.trf.xlu0
    %v1947 = vpack.c.bf16 %v1932, %v1931
    %v1948 = vpack.c.bf16 %v1934, %v1933
    %v1949 = vpack.c.bf16 %v1936, %v1935
    %v1950 = vpack.c.bf16 %v1938, %v1937
    %v1951 = vpack.c.bf16 %v1940, %v1939
    %v1952 = vpack.c.bf16 %v1942, %v1941
    %v1953 = vpack.c.bf16 %v1944, %v1943
    %v1954 = vpack.c.bf16 %v1946, %v1945
    %s1955 = scalar_lea.vmem %s2, 1
    %v1956 = vld [vmem:[%s1955] sm:$0x1]
    %vm1957 = vcmp.ne.f32.partialorder %v1956, 0.0
    %v1958 = vsel %vm1957, 0.0, -1e+09
    %s1959 = scalar_lea.vmem %s3, 1
    %v1960 = vld [vmem:[%s1959] sm:$0x1]
    %vm1961 = vcmp.ne.f32.partialorder %v1960, 0.0
    %v1962 = vsel %vm1961, 0.0, -1e+09
    %v1964 = vlaneseq
    %v1965 = vshrl.u32 %v1964, 7
    %v1966 = vsub.s32 0, %v1965
    %v1967 = vrot.slane %v1962, %v1966
    %v1970 = vsel %vm867, %v773, 0
    %1972 = vmatprep.subr.bf16.mxu0 0
    %1973 = vmatpush1.bf16.msra.mxu0 %v1947
    %1974 = vmatprep.subr.bf16.mxu0 0
    %1975 = vmatpush1.bf16.msra.mxu0 %v1948
    %1976 = vmatprep.subr.bf16.mxu0 0
    %1977 = vmatpush1.bf16.msra.mxu0 0
    %1978 = vmatprep.subr.bf16.mxu0 0
    %1979 = vmatpush1.bf16.msra.mxu0 0
    %1980 = vmatprep.subr.bf16.mxu0 0
    %1981 = vmatpush1.bf16.msra.mxu0 0
    %1982 = vmatprep.subr.bf16.mxu0 0
    %1983 = vmatpush1.bf16.msra.mxu0 0
    %1984 = vmatprep.subr.bf16.mxu0 0
    %1985 = vmatpush1.bf16.msra.mxu0 0
    %1986 = vmatprep.subr.bf16.mxu0 0
    %1987 = vmatpush1.bf16.msra.mxu0 0
    %1988 = vmatprep.subr.bf16.mxu0 0
    %1989 = vmatpush1.bf16.msra.mxu0 0
    %1990 = vmatprep.subr.bf16.mxu0 0
    %1991 = vmatpush1.bf16.msra.mxu0 0
    %1992 = vmatprep.subr.bf16.mxu0 0
    %1993 = vmatpush1.bf16.msra.mxu0 0
    %1994 = vmatprep.subr.bf16.mxu0 0
    %1995 = vmatpush1.bf16.msra.mxu0 0
    %1996 = vmatprep.subr.bf16.mxu0 0
    %1997 = vmatpush1.bf16.msra.mxu0 0
    %1998 = vmatprep.subr.bf16.mxu0 0
    %1999 = vmatpush1.bf16.msra.mxu0 0
    %2000 = vmatprep.subr.bf16.mxu0 0
    %2001 = vmatpush1.bf16.msra.mxu0 0
    %2002 = vmatprep.subr.bf16.mxu0 0
    %2003 = vmatpush1.bf16.msra.mxu0 0
    %2004 = vmatprep.mubr.bf16.mxu0 0
    %2005 = vmatmul.mubr.bf16.gmra.mrb[0].mxu0 %v1970
    %v2006 = vpop.f32.mrb[0].mxu0
    %v2007 = vadd.f32 %v1967, %v2006
    %v2008 = vpop.f32.mrb[0].mxu0
    %v2009 = vpop.f32.mrb[0].mxu0
    %v2010 = vadd.f32 %v1967, %v2009
    %v2011 = vpop.f32.mrb[0].mxu0
    %2012 = vdwg.mxu0
    %v2013 = vsel %vm912, %v2007, -inf
    %2014 = vmax.xlane.f32.xlu0 %v2013
    %v2015 = vpop.xlane.xlu0 %2014
    %v2016 = vsel %vm912, %v2010, -inf
    %2017 = vmax.xlane.f32.xlu0 %v2016
    %v2018 = vpop.xlane.xlu0 %2017
    %v2019 = vsub.f32 %v2007, %v2015
    %v2020 = vsub.f32 %v2010, %v2018
    %v2021 = vmul.f32 %v2019, 1.442695
    %v2022 = vpow.pop %v2021
    %v2023 = vmul.f32 %v2020, 1.442695
    %v2024 = vpow.pop %v2023
    %v2025 = vsel %vm912, %v2022, 0.0
    %2026 = vadd.xlane.f32.xlu0 %v2025
    %v2027 = vpop.xlane.xlu0 %2026
    %v2028 = vsel %vm912, %v2024, 0.0
    %2029 = vadd.xlane.f32.xlu0 %v2028
    %v2030 = vpop.xlane.xlu0 %2029
    %v2031 = vrcp.pop %v2027
    %v2032 = vrcp.pop %v2030
    %v2033 = vmul.f32 %v2022, %v2031
    %v2034 = vmul.f32 %v2024, %v2032
    %v2035 = vpack.c.bf16 %v2034, %v2033
    %v2036 = vrot.slane %v774, 4
    %v2038 = vsel %vm912, %v2035, 0
    %v2041 = vsel %vm939, %v2036, 0
    %2043 = vmatprep.subr.bf16.mxu0 0
    %2044 = vmatpush1.bf16.msra.mxu0 %v2041
    %2045 = vmatprep.subr.bf16.mxu0 0
    %2046 = vmatpush1.bf16.msra.mxu0 0
    %2047 = vmatprep.subr.bf16.mxu0 0
    %2048 = vmatpush1.bf16.msra.mxu0 0
    %2049 = vmatprep.subr.bf16.mxu0 0
    %2050 = vmatpush1.bf16.msra.mxu0 0
    %2051 = vmatprep.subr.bf16.mxu0 0
    %2052 = vmatpush1.bf16.msra.mxu0 0
    %2053 = vmatprep.subr.bf16.mxu0 0
    %2054 = vmatpush1.bf16.msra.mxu0 0
    %2055 = vmatprep.subr.bf16.mxu0 0
    %2056 = vmatpush1.bf16.msra.mxu0 0
    %2057 = vmatprep.subr.bf16.mxu0 0
    %2058 = vmatpush1.bf16.msra.mxu0 0
    %2059 = vmatprep.subr.bf16.mxu0 0
    %2060 = vmatpush1.bf16.msra.mxu0 0
    %2061 = vmatprep.subr.bf16.mxu0 0
    %2062 = vmatpush1.bf16.msra.mxu0 0
    %2063 = vmatprep.subr.bf16.mxu0 0
    %2064 = vmatpush1.bf16.msra.mxu0 0
    %2065 = vmatprep.subr.bf16.mxu0 0
    %2066 = vmatpush1.bf16.msra.mxu0 0
    %2067 = vmatprep.subr.bf16.mxu0 0
    %2068 = vmatpush1.bf16.msra.mxu0 0
    %2069 = vmatprep.subr.bf16.mxu0 0
    %2070 = vmatpush1.bf16.msra.mxu0 0
    %2071 = vmatprep.subr.bf16.mxu0 0
    %2072 = vmatpush1.bf16.msra.mxu0 0
    %2073 = vmatprep.subr.bf16.mxu0 0
    %2074 = vmatpush1.bf16.msra.mxu0 0
    %2075 = vmatprep.mubr.bf16.mxu0 0
    %2076 = vmatmul.mubr.bf16.gmra.mrb[0].mxu0 %v2038
    %v2077 = vpop.f32.mrb[0].mxu0
    %v2078 = vadd.f32 0.0, %v2077
    %v2079 = vpop.f32.mrb[0].mxu0
    %v2080 = vpop.f32.mrb[0].mxu0
    %v2081 = vadd.f32 0.0, %v2080
    %v2082 = vpop.f32.mrb[0].mxu0
    %2083 = vdwg.mxu0
    %2084 = vst.msk [vmem:[#allocation2 + $0x20] sm:$0xff] %vm867, %v2078
    %2085 = vst.msk [vmem:[#allocation2 + $0x30] sm:$0xff] %vm867, %v2081
    %v2087 = vlaneseq
    %v2088 = vshrl.u32 %v2087, 7
    %v2089 = vsub.s32 0, %v2088
    %v2090 = vrot.slane %v1958, %v2089
    %v2093 = vsel %vm867, %v771, 0
    %2095 = vmatprep.subr.bf16.mxu0 0
    %2096 = vmatpush1.bf16.msra.mxu0 %v1907
    %2097 = vmatprep.subr.bf16.mxu0 0
    %2098 = vmatpush1.bf16.msra.mxu0 %v1908
    %2099 = vmatprep.subr.bf16.mxu0 0
    %2100 = vmatpush1.bf16.msra.mxu0 0
    %2101 = vmatprep.subr.bf16.mxu0 0
    %2102 = vmatpush1.bf16.msra.mxu0 0
    %2103 = vmatprep.subr.bf16.mxu0 0
    %2104 = vmatpush1.bf16.msra.mxu0 0
    %2105 = vmatprep.subr.bf16.mxu0 0
    %2106 = vmatpush1.bf16.msra.mxu0 0
    %2107 = vmatprep.subr.bf16.mxu0 0
    %2108 = vmatpush1.bf16.msra.mxu0 0
    %2109 = vmatprep.subr.bf16.mxu0 0
    %2110 = vmatpush1.bf16.msra.mxu0 0
    %2111 = vmatprep.subr.bf16.mxu0 0
    %2112 = vmatpush1.bf16.msra.mxu0 0
    %2113 = vmatprep.subr.bf16.mxu0 0
    %2114 = vmatpush1.bf16.msra.mxu0 0
    %2115 = vmatprep.subr.bf16.mxu0 0
    %2116 = vmatpush1.bf16.msra.mxu0 0
    %2117 = vmatprep.subr.bf16.mxu0 0
    %2118 = vmatpush1.bf16.msra.mxu0 0
    %2119 = vmatprep.subr.bf16.mxu0 0
    %2120 = vmatpush1.bf16.msra.mxu0 0
    %2121 = vmatprep.subr.bf16.mxu0 0
    %2122 = vmatpush1.bf16.msra.mxu0 0
    %2123 = vmatprep.subr.bf16.mxu0 0
    %2124 = vmatpush1.bf16.msra.mxu0 0
    %2125 = vmatprep.subr.bf16.mxu0 0
    %2126 = vmatpush1.bf16.msra.mxu0 0
    %2127 = vmatprep.mubr.bf16.mxu0 0
    %2128 = vmatmul.mubr.bf16.gmra.mrb[0].mxu0 %v2093
    %v2129 = vpop.f32.mrb[0].mxu0
    %v2130 = vadd.f32 %v2090, %v2129
    %v2131 = vpop.f32.mrb[0].mxu0
    %v2132 = vpop.f32.mrb[0].mxu0
    %v2133 = vadd.f32 %v2090, %v2132
    %v2134 = vpop.f32.mrb[0].mxu0
    %2135 = vdwg.mxu0
    %v2136 = vsel %vm1036, %v2130, -inf
    %2137 = vmax.xlane.f32.xlu0 %v2136
    %v2138 = vpop.xlane.xlu0 %2137
    %v2139 = vsel %vm1036, %v2133, -inf
    %2140 = vmax.xlane.f32.xlu0 %v2139
    %v2141 = vpop.xlane.xlu0 %2140
    %v2142 = vsub.f32 %v2130, %v2138
    %v2143 = vsub.f32 %v2133, %v2141
    %v2144 = vmul.f32 %v2142, 1.442695
    %v2145 = vpow.pop %v2144
    %v2146 = vmul.f32 %v2143, 1.442695
    %v2147 = vpow.pop %v2146
    %v2148 = vsel %vm1036, %v2145, 0.0
    %2149 = vadd.xlane.f32.xlu0 %v2148
    %v2150 = vpop.xlane.xlu0 %2149
    %v2151 = vsel %vm1036, %v2147, 0.0
    %2152 = vadd.xlane.f32.xlu0 %v2151
    %v2153 = vpop.xlane.xlu0 %2152
    %v2154 = vrcp.pop %v2150
    %v2155 = vrcp.pop %v2153
    %v2156 = vmul.f32 %v2145, %v2154
    %v2157 = vmul.f32 %v2147, %v2155
    %v2158 = vpack.c.bf16 %v2157, %v2156
    %v2160 = vsel %vm1036, %v2158, 0
    %2162 = vmatprep.subr.bf16.mxu0 0
    %2163 = vmatpush1.bf16.msra.mxu0 %v772
    %2164 = vmatprep.subr.bf16.mxu0 0
    %2165 = vmatpush1.bf16.msra.mxu0 0
    %2166 = vmatprep.subr.bf16.mxu0 0
    %2167 = vmatpush1.bf16.msra.mxu0 0
    %2168 = vmatprep.subr.bf16.mxu0 0
    %2169 = vmatpush1.bf16.msra.mxu0 0
    %2170 = vmatprep.subr.bf16.mxu0 0
    %2171 = vmatpush1.bf16.msra.mxu0 0
    %2172 = vmatprep.subr.bf16.mxu0 0
    %2173 = vmatpush1.bf16.msra.mxu0 0
    %2174 = vmatprep.subr.bf16.mxu0 0
    %2175 = vmatpush1.bf16.msra.mxu0 0
    %2176 = vmatprep.subr.bf16.mxu0 0
    %2177 = vmatpush1.bf16.msra.mxu0 0
    %2178 = vmatprep.subr.bf16.mxu0 0
    %2179 = vmatpush1.bf16.msra.mxu0 0
    %2180 = vmatprep.subr.bf16.mxu0 0
    %2181 = vmatpush1.bf16.msra.mxu0 0
    %2182 = vmatprep.subr.bf16.mxu0 0
    %2183 = vmatpush1.bf16.msra.mxu0 0
    %2184 = vmatprep.subr.bf16.mxu0 0
    %2185 = vmatpush1.bf16.msra.mxu0 0
    %2186 = vmatprep.subr.bf16.mxu0 0
    %2187 = vmatpush1.bf16.msra.mxu0 0
    %2188 = vmatprep.subr.bf16.mxu0 0
    %2189 = vmatpush1.bf16.msra.mxu0 0
    %2190 = vmatprep.subr.bf16.mxu0 0
    %2191 = vmatpush1.bf16.msra.mxu0 0
    %2192 = vmatprep.subr.bf16.mxu0 0
    %2193 = vmatpush1.bf16.msra.mxu0 0
    %2194 = vmatprep.mubr.bf16.mxu0 0
    %2195 = vmatmul.mubr.bf16.gmra.mrb[0].mxu0 %v2160
    %v2196 = vpop.f32.mrb[0].mxu0
    %v2197 = vadd.f32 0.0, %v2196
    %v2198 = vpop.f32.mrb[0].mxu0
    %v2199 = vpop.f32.mrb[0].mxu0
    %v2200 = vadd.f32 0.0, %v2199
    %v2201 = vpop.f32.mrb[0].mxu0
    %2202 = vdwg.mxu0
    %2203 = vst.msk [vmem:[#allocation2 + $0x28] sm:$0xff] %vm867, %v2197
    %2204 = vst.msk [vmem:[#allocation2 + $0x38] sm:$0xff] %vm867, %v2200
    %2206 = vrot.lane.b32.xlu0 %v773, 96
    %v2207 = vpop.permute.xlu0 %2206
    %v2209 = vsel %vm867, %v2207, 0
    %2211 = vmatprep.subr.bf16.mxu0 0
    %2212 = vmatpush1.bf16.msra.mxu0 %v1949
    %2213 = vmatprep.subr.bf16.mxu0 0
    %2214 = vmatpush1.bf16.msra.mxu0 %v1950
    %2215 = vmatprep.subr.bf16.mxu0 0
    %2216 = vmatpush1.bf16.msra.mxu0 0
    %2217 = vmatprep.subr.bf16.mxu0 0
    %2218 = vmatpush1.bf16.msra.mxu0 0
    %2219 = vmatprep.subr.bf16.mxu0 0
    %2220 = vmatpush1.bf16.msra.mxu0 0
    %2221 = vmatprep.subr.bf16.mxu0 0
    %2222 = vmatpush1.bf16.msra.mxu0 0
    %2223 = vmatprep.subr.bf16.mxu0 0
    %2224 = vmatpush1.bf16.msra.mxu0 0
    %2225 = vmatprep.subr.bf16.mxu0 0
    %2226 = vmatpush1.bf16.msra.mxu0 0
    %2227 = vmatprep.subr.bf16.mxu0 0
    %2228 = vmatpush1.bf16.msra.mxu0 0
    %2229 = vmatprep.subr.bf16.mxu0 0
    %2230 = vmatpush1.bf16.msra.mxu0 0
    %2231 = vmatprep.subr.bf16.mxu0 0
    %2232 = vmatpush1.bf16.msra.mxu0 0
    %2233 = vmatprep.subr.bf16.mxu0 0
    %2234 = vmatpush1.bf16.msra.mxu0 0
    %2235 = vmatprep.subr.bf16.mxu0 0
    %2236 = vmatpush1.bf16.msra.mxu0 0
    %2237 = vmatprep.subr.bf16.mxu0 0
    %2238 = vmatpush1.bf16.msra.mxu0 0
    %2239 = vmatprep.subr.bf16.mxu0 0
    %2240 = vmatpush1.bf16.msra.mxu0 0
    %2241 = vmatprep.subr.bf16.mxu0 0
    %2242 = vmatpush1.bf16.msra.mxu0 0
    %2243 = vmatprep.mubr.bf16.mxu0 0
    %2244 = vmatmul.mubr.bf16.gmra.mrb[0].mxu0 %v2209
    %v2245 = vpop.f32.mrb[0].mxu0
    %v2246 = vadd.f32 %v1967, %v2245
    %v2247 = vpop.f32.mrb[0].mxu0
    %v2248 = vpop.f32.mrb[0].mxu0
    %v2249 = vadd.f32 %v1967, %v2248
    %v2250 = vpop.f32.mrb[0].mxu0
    %2251 = vdwg.mxu0
    %v2252 = vsel %vm912, %v2246, -inf
    %2253 = vmax.xlane.f32.xlu0 %v2252
    %v2254 = vpop.xlane.xlu0 %2253
    %v2255 = vsel %vm912, %v2249, -inf
    %2256 = vmax.xlane.f32.xlu0 %v2255
    %v2257 = vpop.xlane.xlu0 %2256
    %v2258 = vsub.f32 %v2246, %v2254
    %v2259 = vsub.f32 %v2249, %v2257
    %v2260 = vmul.f32 %v2258, 1.442695
    %v2261 = vpow.pop %v2260
    %v2262 = vmul.f32 %v2259, 1.442695
    %v2263 = vpow.pop %v2262
    %v2264 = vsel %vm912, %v2261, 0.0
    %2265 = vadd.xlane.f32.xlu0 %v2264
    %v2266 = vpop.xlane.xlu0 %2265
    %v2267 = vsel %vm912, %v2263, 0.0
    %2268 = vadd.xlane.f32.xlu0 %v2267
    %v2269 = vpop.xlane.xlu0 %2268
    %v2270 = vrcp.pop %v2266
    %v2271 = vrcp.pop %v2269
    %v2272 = vmul.f32 %v2261, %v2270
    %v2273 = vmul.f32 %v2263, %v2271
    %v2274 = vpack.c.bf16 %v2273, %v2272
    %2275 = vrot.lane.b32.xlu0 %v2036, 96
    %v2276 = vpop.permute.xlu0 %2275
    %v2278 = vsel %vm912, %v2274, 0
    %v2281 = vsel %vm939, %v2276, 0
    %2283 = vmatprep.subr.bf16.mxu0 0
    %2284 = vmatpush1.bf16.msra.mxu0 %v2281
    %2285 = vmatprep.subr.bf16.mxu0 0
    %2286 = vmatpush1.bf16.msra.mxu0 0
    %2287 = vmatprep.subr.bf16.mxu0 0
    %2288 = vmatpush1.bf16.msra.mxu0 0
    %2289 = vmatprep.subr.bf16.mxu0 0
    %2290 = vmatpush1.bf16.msra.mxu0 0
    %2291 = vmatprep.subr.bf16.mxu0 0
    %2292 = vmatpush1.bf16.msra.mxu0 0
    %2293 = vmatprep.subr.bf16.mxu0 0
    %2294 = vmatpush1.bf16.msra.mxu0 0
    %2295 = vmatprep.subr.bf16.mxu0 0
    %2296 = vmatpush1.bf16.msra.mxu0 0
    %2297 = vmatprep.subr.bf16.mxu0 0
    %2298 = vmatpush1.bf16.msra.mxu0 0
    %2299 = vmatprep.subr.bf16.mxu0 0
    %2300 = vmatpush1.bf16.msra.mxu0 0
    %2301 = vmatprep.subr.bf16.mxu0 0
    %2302 = vmatpush1.bf16.msra.mxu0 0
    %2303 = vmatprep.subr.bf16.mxu0 0
    %2304 = vmatpush1.bf16.msra.mxu0 0
    %2305 = vmatprep.subr.bf16.mxu0 0
    %2306 = vmatpush1.bf16.msra.mxu0 0
    %2307 = vmatprep.subr.bf16.mxu0 0
    %2308 = vmatpush1.bf16.msra.mxu0 0
    %2309 = vmatprep.subr.bf16.mxu0 0
    %2310 = vmatpush1.bf16.msra.mxu0 0
    %2311 = vmatprep.subr.bf16.mxu0 0
    %2312 = vmatpush1.bf16.msra.mxu0 0
    %2313 = vmatprep.subr.bf16.mxu0 0
    %2314 = vmatpush1.bf16.msra.mxu0 0
    %2315 = vmatprep.mubr.bf16.mxu0 0
    %2316 = vmatmul.mubr.bf16.gmra.mrb[0].mxu0 %v2278
    %v2317 = vpop.f32.mrb[0].mxu0
    %v2318 = vadd.f32 0.0, %v2317
    %v2319 = vpop.f32.mrb[0].mxu0
    %v2320 = vpop.f32.mrb[0].mxu0
    %v2321 = vadd.f32 0.0, %v2320
    %v2322 = vpop.f32.mrb[0].mxu0
    %2323 = vdwg.mxu0
    %2326 = vrot.lane.b32.xlu0 %v2318, 32
    %v2327 = vpop.permute.xlu0 %2326
    %2328 = vrot.lane.b32.xlu0 %v2321, 32
    %v2329 = vpop.permute.xlu0 %2328
    %2332 = vst.msk [vmem:[#allocation2 + $0x20] sm:$0xff] %vm1234, %v2327
    %2333 = vst.msk [vmem:[#allocation2 + $0x30] sm:$0xff] %vm1234, %v2329
    %2335 = vrot.lane.b32.xlu0 %v771, 96
    %v2336 = vpop.permute.xlu0 %2335
    %v2338 = vsel %vm867, %v2336, 0
    %2340 = vmatprep.subr.bf16.mxu0 0
    %2341 = vmatpush1.bf16.msra.mxu0 %v1909
    %2342 = vmatprep.subr.bf16.mxu0 0
    %2343 = vmatpush1.bf16.msra.mxu0 %v1910
    %2344 = vmatprep.subr.bf16.mxu0 0
    %2345 = vmatpush1.bf16.msra.mxu0 0
    %2346 = vmatprep.subr.bf16.mxu0 0
    %2347 = vmatpush1.bf16.msra.mxu0 0
    %2348 = vmatprep.subr.bf16.mxu0 0
    %2349 = vmatpush1.bf16.msra.mxu0 0
    %2350 = vmatprep.subr.bf16.mxu0 0
    %2351 = vmatpush1.bf16.msra.mxu0 0
    %2352 = vmatprep.subr.bf16.mxu0 0
    %2353 = vmatpush1.bf16.msra.mxu0 0
    %2354 = vmatprep.subr.bf16.mxu0 0
    %2355 = vmatpush1.bf16.msra.mxu0 0
    %2356 = vmatprep.subr.bf16.mxu0 0
    %2357 = vmatpush1.bf16.msra.mxu0 0
    %2358 = vmatprep.subr.bf16.mxu0 0
    %2359 = vmatpush1.bf16.msra.mxu0 0
    %2360 = vmatprep.subr.bf16.mxu0 0
    %2361 = vmatpush1.bf16.msra.mxu0 0
    %2362 = vmatprep.subr.bf16.mxu0 0
    %2363 = vmatpush1.bf16.msra.mxu0 0
    %2364 = vmatprep.subr.bf16.mxu0 0
    %2365 = vmatpush1.bf16.msra.mxu0 0
    %2366 = vmatprep.subr.bf16.mxu0 0
    %2367 = vmatpush1.bf16.msra.mxu0 0
    %2368 = vmatprep.subr.bf16.mxu0 0
    %2369 = vmatpush1.bf16.msra.mxu0 0
    %2370 = vmatprep.subr.bf16.mxu0 0
    %2371 = vmatpush1.bf16.msra.mxu0 0
    %2372 = vmatprep.mubr.bf16.mxu0 0
    %2373 = vmatmul.mubr.bf16.gmra.mrb[0].mxu0 %v2338
    %v2374 = vpop.f32.mrb[0].mxu0
    %v2375 = vadd.f32 %v2090, %v2374
    %v2376 = vpop.f32.mrb[0].mxu0
    %v2377 = vpop.f32.mrb[0].mxu0
    %v2378 = vadd.f32 %v2090, %v2377
    %v2379 = vpop.f32.mrb[0].mxu0
    %2380 = vdwg.mxu0
    %v2381 = vsel %vm1036, %v2375, -inf
    %2382 = vmax.xlane.f32.xlu0 %v2381
    %v2383 = vpop.xlane.xlu0 %2382
    %v2384 = vsel %vm1036, %v2378, -inf
    %2385 = vmax.xlane.f32.xlu0 %v2384
    %v2386 = vpop.xlane.xlu0 %2385
    %v2387 = vsub.f32 %v2375, %v2383
    %v2388 = vsub.f32 %v2378, %v2386
    %v2389 = vmul.f32 %v2387, 1.442695
    %v2390 = vpow.pop %v2389
    %v2391 = vmul.f32 %v2388, 1.442695
    %v2392 = vpow.pop %v2391
    %v2393 = vsel %vm1036, %v2390, 0.0
    %2394 = vadd.xlane.f32.xlu0 %v2393
    %v2395 = vpop.xlane.xlu0 %2394
    %v2396 = vsel %vm1036, %v2392, 0.0
    %2397 = vadd.xlane.f32.xlu0 %v2396
    %v2398 = vpop.xlane.xlu0 %2397
    %v2399 = vrcp.pop %v2395
    %v2400 = vrcp.pop %v2398
    %v2401 = vmul.f32 %v2390, %v2399
    %v2402 = vmul.f32 %v2392, %v2400
    %v2403 = vpack.c.bf16 %v2402, %v2401
    %2405 = vrot.lane.b32.xlu0 %v772, 96
    %v2406 = vpop.permute.xlu0 %2405
    %v2409 = vsel %vm1036, %v2403, 0
    %2411 = vmatprep.subr.bf16.mxu0 0
    %2412 = vmatpush1.bf16.msra.mxu0 %v2406
    %2413 = vmatprep.subr.bf16.mxu0 0
    %2414 = vmatpush1.bf16.msra.mxu0 0
    %2415 = vmatprep.subr.bf16.mxu0 0
    %2416 = vmatpush1.bf16.msra.mxu0 0
    %2417 = vmatprep.subr.bf16.mxu0 0
    %2418 = vmatpush1.bf16.msra.mxu0 0
    %2419 = vmatprep.subr.bf16.mxu0 0
    %2420 = vmatpush1.bf16.msra.mxu0 0
    %2421 = vmatprep.subr.bf16.mxu0 0
    %2422 = vmatpush1.bf16.msra.mxu0 0
    %2423 = vmatprep.subr.bf16.mxu0 0
    %2424 = vmatpush1.bf16.msra.mxu0 0
    %2425 = vmatprep.subr.bf16.mxu0 0
    %2426 = vmatpush1.bf16.msra.mxu0 0
    %2427 = vmatprep.subr.bf16.mxu0 0
    %2428 = vmatpush1.bf16.msra.mxu0 0
    %2429 = vmatprep.subr.bf16.mxu0 0
    %2430 = vmatpush1.bf16.msra.mxu0 0
    %2431 = vmatprep.subr.bf16.mxu0 0
    %2432 = vmatpush1.bf16.msra.mxu0 0
    %2433 = vmatprep.subr.bf16.mxu0 0
    %2434 = vmatpush1.bf16.msra.mxu0 0
    %2435 = vmatprep.subr.bf16.mxu0 0
    %2436 = vmatpush1.bf16.msra.mxu0 0
    %2437 = vmatprep.subr.bf16.mxu0 0
    %2438 = vmatpush1.bf16.msra.mxu0 0
    %2439 = vmatprep.subr.bf16.mxu0 0
    %2440 = vmatpush1.bf16.msra.mxu0 0
    %2441 = vmatprep.subr.bf16.mxu0 0
    %2442 = vmatpush1.bf16.msra.mxu0 0
    %2443 = vmatprep.mubr.bf16.mxu0 0
    %2444 = vmatmul.mubr.bf16.gmra.mrb[0].mxu0 %v2409
    %v2445 = vpop.f32.mrb[0].mxu0
    %v2446 = vadd.f32 0.0, %v2445
    %v2447 = vpop.f32.mrb[0].mxu0
    %v2448 = vpop.f32.mrb[0].mxu0
    %v2449 = vadd.f32 0.0, %v2448
    %v2450 = vpop.f32.mrb[0].mxu0
    %2451 = vdwg.mxu0
    %2454 = vrot.lane.b32.xlu0 %v2446, 32
    %v2455 = vpop.permute.xlu0 %2454
    %2456 = vrot.lane.b32.xlu0 %v2449, 32
    %v2457 = vpop.permute.xlu0 %2456
    %2460 = vst.msk [vmem:[#allocation2 + $0x28] sm:$0xff] %vm1234, %v2455
    %2461 = vst.msk [vmem:[#allocation2 + $0x38] sm:$0xff] %vm1234, %v2457
    %2462 = vrot.lane.b32.xlu0 %v773, 64
    %v2463 = vpop.permute.xlu0 %2462
    %v2465 = vsel %vm867, %v2463, 0
    %2467 = vmatprep.subr.bf16.mxu0 0
    %2468 = vmatpush1.bf16.msra.mxu0 %v1951
    %2469 = vmatprep.subr.bf16.mxu0 0
    %2470 = vmatpush1.bf16.msra.mxu0 %v1952
    %2471 = vmatprep.subr.bf16.mxu0 0
    %2472 = vmatpush1.bf16.msra.mxu0 0
    %2473 = vmatprep.subr.bf16.mxu0 0
    %2474 = vmatpush1.bf16.msra.mxu0 0
    %2475 = vmatprep.subr.bf16.mxu0 0
    %2476 = vmatpush1.bf16.msra.mxu0 0
    %2477 = vmatprep.subr.bf16.mxu0 0
    %2478 = vmatpush1.bf16.msra.mxu0 0
    %2479 = vmatprep.subr.bf16.mxu0 0
    %2480 = vmatpush1.bf16.msra.mxu0 0
    %2481 = vmatprep.subr.bf16.mxu0 0
    %2482 = vmatpush1.bf16.msra.mxu0 0
    %2483 = vmatprep.subr.bf16.mxu0 0
    %2484 = vmatpush1.bf16.msra.mxu0 0
    %2485 = vmatprep.subr.bf16.mxu0 0
    %2486 = vmatpush1.bf16.msra.mxu0 0
    %2487 = vmatprep.subr.bf16.mxu0 0
    %2488 = vmatpush1.bf16.msra.mxu0 0
    %2489 = vmatprep.subr.bf16.mxu0 0
    %2490 = vmatpush1.bf16.msra.mxu0 0
    %2491 = vmatprep.subr.bf16.mxu0 0
    %2492 = vmatpush1.bf16.msra.mxu0 0
    %2493 = vmatprep.subr.bf16.mxu0 0
    %2494 = vmatpush1.bf16.msra.mxu0 0
    %2495 = vmatprep.subr.bf16.mxu0 0
    %2496 = vmatpush1.bf16.msra.mxu0 0
    %2497 = vmatprep.subr.bf16.mxu0 0
    %2498 = vmatpush1.bf16.msra.mxu0 0
    %2499 = vmatprep.mubr.bf16.mxu0 0
    %2500 = vmatmul.mubr.bf16.gmra.mrb[0].mxu0 %v2465
    %v2501 = vpop.f32.mrb[0].mxu0
    %v2502 = vadd.f32 %v1967, %v2501
    %v2503 = vpop.f32.mrb[0].mxu0
    %v2504 = vpop.f32.mrb[0].mxu0
    %v2505 = vadd.f32 %v1967, %v2504
    %v2506 = vpop.f32.mrb[0].mxu0
    %2507 = vdwg.mxu0
    %v2508 = vsel %vm912, %v2502, -inf
    %2509 = vmax.xlane.f32.xlu0 %v2508
    %v2510 = vpop.xlane.xlu0 %2509
    %v2511 = vsel %vm912, %v2505, -inf
    %2512 = vmax.xlane.f32.xlu0 %v2511
    %v2513 = vpop.xlane.xlu0 %2512
    %v2514 = vsub.f32 %v2502, %v2510
    %v2515 = vsub.f32 %v2505, %v2513
    %v2516 = vmul.f32 %v2514, 1.442695
    %v2517 = vpow.pop %v2516
    %v2518 = vmul.f32 %v2515, 1.442695
    %v2519 = vpow.pop %v2518
    %v2520 = vsel %vm912, %v2517, 0.0
    %2521 = vadd.xlane.f32.xlu0 %v2520
    %v2522 = vpop.xlane.xlu0 %2521
    %v2523 = vsel %vm912, %v2519, 0.0
    %2524 = vadd.xlane.f32.xlu0 %v2523
    %v2525 = vpop.xlane.xlu0 %2524
    %v2526 = vrcp.pop %v2522
    %v2527 = vrcp.pop %v2525
    %v2528 = vmul.f32 %v2517, %v2526
    %v2529 = vmul.f32 %v2519, %v2527
    %v2530 = vpack.c.bf16 %v2529, %v2528
    %2531 = vrot.lane.b32.xlu0 %v2036, 64
    %v2532 = vpop.permute.xlu0 %2531
    %v2534 = vsel %vm912, %v2530, 0
    %v2537 = vsel %vm939, %v2532, 0
    %2539 = vmatprep.subr.bf16.mxu0 0
    %2540 = vmatpush1.bf16.msra.mxu0 %v2537
    %2541 = vmatprep.subr.bf16.mxu0 0
    %2542 = vmatpush1.bf16.msra.mxu0 0
    %2543 = vmatprep.subr.bf16.mxu0 0
    %2544 = vmatpush1.bf16.msra.mxu0 0
    %2545 = vmatprep.subr.bf16.mxu0 0
    %2546 = vmatpush1.bf16.msra.mxu0 0
    %2547 = vmatprep.subr.bf16.mxu0 0
    %2548 = vmatpush1.bf16.msra.mxu0 0
    %2549 = vmatprep.subr.bf16.mxu0 0
    %2550 = vmatpush1.bf16.msra.mxu0 0
    %2551 = vmatprep.subr.bf16.mxu0 0
    %2552 = vmatpush1.bf16.msra.mxu0 0
    %2553 = vmatprep.subr.bf16.mxu0 0
    %2554 = vmatpush1.bf16.msra.mxu0 0
    %2555 = vmatprep.subr.bf16.mxu0 0
    %2556 = vmatpush1.bf16.msra.mxu0 0
    %2557 = vmatprep.subr.bf16.mxu0 0
    %2558 = vmatpush1.bf16.msra.mxu0 0
    %2559 = vmatprep.subr.bf16.mxu0 0
    %2560 = vmatpush1.bf16.msra.mxu0 0
    %2561 = vmatprep.subr.bf16.mxu0 0
    %2562 = vmatpush1.bf16.msra.mxu0 0
    %2563 = vmatprep.subr.bf16.mxu0 0
    %2564 = vmatpush1.bf16.msra.mxu0 0
    %2565 = vmatprep.subr.bf16.mxu0 0
    %2566 = vmatpush1.bf16.msra.mxu0 0
    %2567 = vmatprep.subr.bf16.mxu0 0
    %2568 = vmatpush1.bf16.msra.mxu0 0
    %2569 = vmatprep.subr.bf16.mxu0 0
    %2570 = vmatpush1.bf16.msra.mxu0 0
    %2571 = vmatprep.mubr.bf16.mxu0 0
    %2572 = vmatmul.mubr.bf16.gmra.mrb[0].mxu0 %v2534
    %v2573 = vpop.f32.mrb[0].mxu0
    %v2574 = vadd.f32 0.0, %v2573
    %v2575 = vpop.f32.mrb[0].mxu0
    %v2576 = vpop.f32.mrb[0].mxu0
    %v2577 = vadd.f32 0.0, %v2576
    %v2578 = vpop.f32.mrb[0].mxu0
    %2579 = vdwg.mxu0
    %2582 = vrot.lane.b32.xlu0 %v2574, 64
    %v2583 = vpop.permute.xlu0 %2582
    %2584 = vrot.lane.b32.xlu0 %v2577, 64
    %v2585 = vpop.permute.xlu0 %2584
    %2588 = vst.msk [vmem:[#allocation2 + $0x20] sm:$0xff] %vm1491, %v2583
    %2589 = vst.msk [vmem:[#allocation2 + $0x30] sm:$0xff] %vm1491, %v2585
    %2590 = vrot.lane.b32.xlu0 %v771, 64
    %v2591 = vpop.permute.xlu0 %2590
    %v2593 = vsel %vm867, %v2591, 0
    %2595 = vmatprep.subr.bf16.mxu0 0
    %2596 = vmatpush1.bf16.msra.mxu0 %v1911
    %2597 = vmatprep.subr.bf16.mxu0 0
    %2598 = vmatpush1.bf16.msra.mxu0 %v1912
    %2599 = vmatprep.subr.bf16.mxu0 0
    %2600 = vmatpush1.bf16.msra.mxu0 0
    %2601 = vmatprep.subr.bf16.mxu0 0
    %2602 = vmatpush1.bf16.msra.mxu0 0
    %2603 = vmatprep.subr.bf16.mxu0 0
    %2604 = vmatpush1.bf16.msra.mxu0 0
    %2605 = vmatprep.subr.bf16.mxu0 0
    %2606 = vmatpush1.bf16.msra.mxu0 0
    %2607 = vmatprep.subr.bf16.mxu0 0
    %2608 = vmatpush1.bf16.msra.mxu0 0
    %2609 = vmatprep.subr.bf16.mxu0 0
    %2610 = vmatpush1.bf16.msra.mxu0 0
    %2611 = vmatprep.subr.bf16.mxu0 0
    %2612 = vmatpush1.bf16.msra.mxu0 0
    %2613 = vmatprep.subr.bf16.mxu0 0
    %2614 = vmatpush1.bf16.msra.mxu0 0
    %2615 = vmatprep.subr.bf16.mxu0 0
    %2616 = vmatpush1.bf16.msra.mxu0 0
    %2617 = vmatprep.subr.bf16.mxu0 0
    %2618 = vmatpush1.bf16.msra.mxu0 0
    %2619 = vmatprep.subr.bf16.mxu0 0
    %2620 = vmatpush1.bf16.msra.mxu0 0
    %2621 = vmatprep.subr.bf16.mxu0 0
    %2622 = vmatpush1.bf16.msra.mxu0 0
    %2623 = vmatprep.subr.bf16.mxu0 0
    %2624 = vmatpush1.bf16.msra.mxu0 0
    %2625 = vmatprep.subr.bf16.mxu0 0
    %2626 = vmatpush1.bf16.msra.mxu0 0
    %2627 = vmatprep.mubr.bf16.mxu0 0
    %2628 = vmatmul.mubr.bf16.gmra.mrb[0].mxu0 %v2593
    %v2629 = vpop.f32.mrb[0].mxu0
    %v2630 = vadd.f32 %v2090, %v2629
    %v2631 = vpop.f32.mrb[0].mxu0
    %v2632 = vpop.f32.mrb[0].mxu0
    %v2633 = vadd.f32 %v2090, %v2632
    %v2634 = vpop.f32.mrb[0].mxu0
    %2635 = vdwg.mxu0
    %v2636 = vsel %vm1036, %v2630, -inf
    %2637 = vmax.xlane.f32.xlu0 %v2636
    %v2638 = vpop.xlane.xlu0 %2637
    %v2639 = vsel %vm1036, %v2633, -inf
    %2640 = vmax.xlane.f32.xlu0 %v2639
    %v2641 = vpop.xlane.xlu0 %2640
    %v2642 = vsub.f32 %v2630, %v2638
    %v2643 = vsub.f32 %v2633, %v2641
    %v2644 = vmul.f32 %v2642, 1.442695
    %v2645 = vpow.pop %v2644
    %v2646 = vmul.f32 %v2643, 1.442695
    %v2647 = vpow.pop %v2646
    %v2648 = vsel %vm1036, %v2645, 0.0
    %2649 = vadd.xlane.f32.xlu0 %v2648
    %v2650 = vpop.xlane.xlu0 %2649
    %v2651 = vsel %vm1036, %v2647, 0.0
    %2652 = vadd.xlane.f32.xlu0 %v2651
    %v2653 = vpop.xlane.xlu0 %2652
    %v2654 = vrcp.pop %v2650
    %v2655 = vrcp.pop %v2653
    %v2656 = vmul.f32 %v2645, %v2654
    %v2657 = vmul.f32 %v2647, %v2655
    %v2658 = vpack.c.bf16 %v2657, %v2656
    %2659 = vrot.lane.b32.xlu0 %v772, 64
    %v2660 = vpop.permute.xlu0 %2659
    %v2663 = vsel %vm1036, %v2658, 0
    %2665 = vmatprep.subr.bf16.mxu0 0
    %2666 = vmatpush1.bf16.msra.mxu0 %v2660
    %2667 = vmatprep.subr.bf16.mxu0 0
    %2668 = vmatpush1.bf16.msra.mxu0 0
    %2669 = vmatprep.subr.bf16.mxu0 0
    %2670 = vmatpush1.bf16.msra.mxu0 0
    %2671 = vmatprep.subr.bf16.mxu0 0
    %2672 = vmatpush1.bf16.msra.mxu0 0
    %2673 = vmatprep.subr.bf16.mxu0 0
    %2674 = vmatpush1.bf16.msra.mxu0 0
    %2675 = vmatprep.subr.bf16.mxu0 0
    %2676 = vmatpush1.bf16.msra.mxu0 0
    %2677 = vmatprep.subr.bf16.mxu0 0
    %2678 = vmatpush1.bf16.msra.mxu0 0
    %2679 = vmatprep.subr.bf16.mxu0 0
    %2680 = vmatpush1.bf16.msra.mxu0 0
    %2681 = vmatprep.subr.bf16.mxu0 0
    %2682 = vmatpush1.bf16.msra.mxu0 0
    %2683 = vmatprep.subr.bf16.mxu0 0
    %2684 = vmatpush1.bf16.msra.mxu0 0
    %2685 = vmatprep.subr.bf16.mxu0 0
    %2686 = vmatpush1.bf16.msra.mxu0 0
    %2687 = vmatprep.subr.bf16.mxu0 0
    %2688 = vmatpush1.bf16.msra.mxu0 0
    %2689 = vmatprep.subr.bf16.mxu0 0
    %2690 = vmatpush1.bf16.msra.mxu0 0
    %2691 = vmatprep.subr.bf16.mxu0 0
    %2692 = vmatpush1.bf16.msra.mxu0 0
    %2693 = vmatprep.subr.bf16.mxu0 0
    %2694 = vmatpush1.bf16.msra.mxu0 0
    %2695 = vmatprep.subr.bf16.mxu0 0
    %2696 = vmatpush1.bf16.msra.mxu0 0
    %2697 = vmatprep.mubr.bf16.mxu0 0
    %2698 = vmatmul.mubr.bf16.gmra.mrb[0].mxu0 %v2663
    %v2699 = vpop.f32.mrb[0].mxu0
    %v2700 = vadd.f32 0.0, %v2699
    %v2701 = vpop.f32.mrb[0].mxu0
    %v2702 = vpop.f32.mrb[0].mxu0
    %v2703 = vadd.f32 0.0, %v2702
    %v2704 = vpop.f32.mrb[0].mxu0
    %2705 = vdwg.mxu0
    %2708 = vrot.lane.b32.xlu0 %v2700, 64
    %v2709 = vpop.permute.xlu0 %2708
    %2710 = vrot.lane.b32.xlu0 %v2703, 64
    %v2711 = vpop.permute.xlu0 %2710
    %2714 = vst.msk [vmem:[#allocation2 + $0x28] sm:$0xff] %vm1491, %v2709
    %2715 = vst.msk [vmem:[#allocation2 + $0x38] sm:$0xff] %vm1491, %v2711
    %2716 = vrot.lane.b32.xlu0 %v773, 32
    %v2717 = vpop.permute.xlu0 %2716
    %v2719 = vsel %vm867, %v2717, 0
    %2721 = vmatprep.subr.bf16.mxu0 0
    %2722 = vmatpush1.bf16.msra.mxu0 %v1953
    %2723 = vmatprep.subr.bf16.mxu0 0
    %2724 = vmatpush1.bf16.msra.mxu0 %v1954
    %2725 = vmatprep.subr.bf16.mxu0 0
    %2726 = vmatpush1.bf16.msra.mxu0 0
    %2727 = vmatprep.subr.bf16.mxu0 0
    %2728 = vmatpush1.bf16.msra.mxu0 0
    %2729 = vmatprep.subr.bf16.mxu0 0
    %2730 = vmatpush1.bf16.msra.mxu0 0
    %2731 = vmatprep.subr.bf16.mxu0 0
    %2732 = vmatpush1.bf16.msra.mxu0 0
    %2733 = vmatprep.subr.bf16.mxu0 0
    %2734 = vmatpush1.bf16.msra.mxu0 0
    %2735 = vmatprep.subr.bf16.mxu0 0
    %2736 = vmatpush1.bf16.msra.mxu0 0
    %2737 = vmatprep.subr.bf16.mxu0 0
    %2738 = vmatpush1.bf16.msra.mxu0 0
    %2739 = vmatprep.subr.bf16.mxu0 0
    %2740 = vmatpush1.bf16.msra.mxu0 0
    %2741 = vmatprep.subr.bf16.mxu0 0
    %2742 = vmatpush1.bf16.msra.mxu0 0
    %2743 = vmatprep.subr.bf16.mxu0 0
    %2744 = vmatpush1.bf16.msra.mxu0 0
    %2745 = vmatprep.subr.bf16.mxu0 0
    %2746 = vmatpush1.bf16.msra.mxu0 0
    %2747 = vmatprep.subr.bf16.mxu0 0
    %2748 = vmatpush1.bf16.msra.mxu0 0
    %2749 = vmatprep.subr.bf16.mxu0 0
    %2750 = vmatpush1.bf16.msra.mxu0 0
    %2751 = vmatprep.subr.bf16.mxu0 0
    %2752 = vmatpush1.bf16.msra.mxu0 0
    %2753 = vmatprep.mubr.bf16.mxu0 0
    %2754 = vmatmul.mubr.bf16.gmra.mrb[0].mxu0 %v2719
    %v2755 = vpop.f32.mrb[0].mxu0
    %v2756 = vadd.f32 %v1967, %v2755
    %v2757 = vpop.f32.mrb[0].mxu0
    %v2758 = vpop.f32.mrb[0].mxu0
    %v2759 = vadd.f32 %v1967, %v2758
    %v2760 = vpop.f32.mrb[0].mxu0
    %2761 = vdwg.mxu0
    %v2762 = vsel %vm912, %v2756, -inf
    %2763 = vmax.xlane.f32.xlu0 %v2762
    %v2764 = vpop.xlane.xlu0 %2763
    %v2765 = vsel %vm912, %v2759, -inf
    %2766 = vmax.xlane.f32.xlu0 %v2765
    %v2767 = vpop.xlane.xlu0 %2766
    %v2768 = vsub.f32 %v2756, %v2764
    %v2769 = vsub.f32 %v2759, %v2767
    %v2770 = vmul.f32 %v2768, 1.442695
    %v2771 = vpow.pop %v2770
    %v2772 = vmul.f32 %v2769, 1.442695
    %v2773 = vpow.pop %v2772
    %v2774 = vsel %vm912, %v2771, 0.0
    %2775 = vadd.xlane.f32.xlu0 %v2774
    %v2776 = vpop.xlane.xlu0 %2775
    %v2777 = vsel %vm912, %v2773, 0.0
    %2778 = vadd.xlane.f32.xlu0 %v2777
    %v2779 = vpop.xlane.xlu0 %2778
    %v2780 = vrcp.pop %v2776
    %v2781 = vrcp.pop %v2779
    %v2782 = vmul.f32 %v2771, %v2780
    %v2783 = vmul.f32 %v2773, %v2781
    %v2784 = vpack.c.bf16 %v2783, %v2782
    %2785 = vrot.lane.b32.xlu0 %v2036, 32
    %v2786 = vpop.permute.xlu0 %2785
    %v2788 = vsel %vm912, %v2784, 0
    %v2791 = vsel %vm939, %v2786, 0
    %2793 = vmatprep.subr.bf16.mxu0 0
    %2794 = vmatpush1.bf16.msra.mxu0 %v2791
    %2795 = vmatprep.subr.bf16.mxu0 0
    %2796 = vmatpush1.bf16.msra.mxu0 0
    %2797 = vmatprep.subr.bf16.mxu0 0
    %2798 = vmatpush1.bf16.msra.mxu0 0
    %2799 = vmatprep.subr.bf16.mxu0 0
    %2800 = vmatpush1.bf16.msra.mxu0 0
    %2801 = vmatprep.subr.bf16.mxu0 0
    %2802 = vmatpush1.bf16.msra.mxu0 0
    %2803 = vmatprep.subr.bf16.mxu0 0
    %2804 = vmatpush1.bf16.msra.mxu0 0
    %2805 = vmatprep.subr.bf16.mxu0 0
    %2806 = vmatpush1.bf16.msra.mxu0 0
    %2807 = vmatprep.subr.bf16.mxu0 0
    %2808 = vmatpush1.bf16.msra.mxu0 0
    %2809 = vmatprep.subr.bf16.mxu0 0
    %2810 = vmatpush1.bf16.msra.mxu0 0
    %2811 = vmatprep.subr.bf16.mxu0 0
    %2812 = vmatpush1.bf16.msra.mxu0 0
    %2813 = vmatprep.subr.bf16.mxu0 0
    %2814 = vmatpush1.bf16.msra.mxu0 0
    %2815 = vmatprep.subr.bf16.mxu0 0
    %2816 = vmatpush1.bf16.msra.mxu0 0
    %2817 = vmatprep.subr.bf16.mxu0 0
    %2818 = vmatpush1.bf16.msra.mxu0 0
    %2819 = vmatprep.subr.bf16.mxu0 0
    %2820 = vmatpush1.bf16.msra.mxu0 0
    %2821 = vmatprep.subr.bf16.mxu0 0
    %2822 = vmatpush1.bf16.msra.mxu0 0
    %2823 = vmatprep.subr.bf16.mxu0 0
    %2824 = vmatpush1.bf16.msra.mxu0 0
    %2825 = vmatprep.mubr.bf16.mxu0 0
    %2826 = vmatmul.mubr.bf16.gmra.mrb[0].mxu0 %v2788
    %v2827 = vpop.f32.mrb[0].mxu0
    %v2828 = vadd.f32 0.0, %v2827
    %v2829 = vpop.f32.mrb[0].mxu0
    %v2830 = vpop.f32.mrb[0].mxu0
    %v2831 = vadd.f32 0.0, %v2830
    %v2832 = vpop.f32.mrb[0].mxu0
    %2833 = vdwg.mxu0
    %2836 = vrot.lane.b32.xlu0 %v2828, 96
    %v2837 = vpop.permute.xlu0 %2836
    %2838 = vrot.lane.b32.xlu0 %v2831, 96
    %v2839 = vpop.permute.xlu0 %2838
    %2842 = vst.msk [vmem:[#allocation2 + $0x20] sm:$0xff] %vm1746, %v2837
    %2843 = vst.msk [vmem:[#allocation2 + $0x30] sm:$0xff] %vm1746, %v2839
    %2844 = vrot.lane.b32.xlu0 %v771, 32
    %v2845 = vpop.permute.xlu0 %2844
    %v2847 = vsel %vm867, %v2845, 0
    %2849 = vmatprep.subr.bf16.mxu0 0
    %2850 = vmatpush1.bf16.msra.mxu0 %v1913
    %2851 = vmatprep.subr.bf16.mxu0 0
    %2852 = vmatpush1.bf16.msra.mxu0 %v1914
    %2853 = vmatprep.subr.bf16.mxu0 0
    %2854 = vmatpush1.bf16.msra.mxu0 0
    %2855 = vmatprep.subr.bf16.mxu0 0
    %2856 = vmatpush1.bf16.msra.mxu0 0
    %2857 = vmatprep.subr.bf16.mxu0 0
    %2858 = vmatpush1.bf16.msra.mxu0 0
    %2859 = vmatprep.subr.bf16.mxu0 0
    %2860 = vmatpush1.bf16.msra.mxu0 0
    %2861 = vmatprep.subr.bf16.mxu0 0
    %2862 = vmatpush1.bf16.msra.mxu0 0
    %2863 = vmatprep.subr.bf16.mxu0 0
    %2864 = vmatpush1.bf16.msra.mxu0 0
    %2865 = vmatprep.subr.bf16.mxu0 0
    %2866 = vmatpush1.bf16.msra.mxu0 0
    %2867 = vmatprep.subr.bf16.mxu0 0
    %2868 = vmatpush1.bf16.msra.mxu0 0
    %2869 = vmatprep.subr.bf16.mxu0 0
    %2870 = vmatpush1.bf16.msra.mxu0 0
    %2871 = vmatprep.subr.bf16.mxu0 0
    %2872 = vmatpush1.bf16.msra.mxu0 0
    %2873 = vmatprep.subr.bf16.mxu0 0
    %2874 = vmatpush1.bf16.msra.mxu0 0
    %2875 = vmatprep.subr.bf16.mxu0 0
    %2876 = vmatpush1.bf16.msra.mxu0 0
    %2877 = vmatprep.subr.bf16.mxu0 0
    %2878 = vmatpush1.bf16.msra.mxu0 0
    %2879 = vmatprep.subr.bf16.mxu0 0
    %2880 = vmatpush1.bf16.msra.mxu0 0
    %2881 = vmatprep.mubr.bf16.mxu0 0
    %2882 = vmatmul.mubr.bf16.gmra.mrb[0].mxu0 %v2847
    %v2883 = vpop.f32.mrb[0].mxu0
    %v2884 = vadd.f32 %v2090, %v2883
    %v2885 = vpop.f32.mrb[0].mxu0
    %v2886 = vpop.f32.mrb[0].mxu0
    %v2887 = vadd.f32 %v2090, %v2886
    %v2888 = vpop.f32.mrb[0].mxu0
    %2889 = vdwg.mxu0
    %v2890 = vsel %vm1036, %v2884, -inf
    %2891 = vmax.xlane.f32.xlu0 %v2890
    %v2892 = vpop.xlane.xlu0 %2891
    %v2893 = vsel %vm1036, %v2887, -inf
    %2894 = vmax.xlane.f32.xlu0 %v2893
    %v2895 = vpop.xlane.xlu0 %2894
    %v2896 = vsub.f32 %v2884, %v2892
    %v2897 = vsub.f32 %v2887, %v2895
    %v2898 = vmul.f32 %v2896, 1.442695
    %v2899 = vpow.pop %v2898
    %v2900 = vmul.f32 %v2897, 1.442695
    %v2901 = vpow.pop %v2900
    %v2902 = vsel %vm1036, %v2899, 0.0
    %2903 = vadd.xlane.f32.xlu0 %v2902
    %v2904 = vpop.xlane.xlu0 %2903
    %v2905 = vsel %vm1036, %v2901, 0.0
    %2906 = vadd.xlane.f32.xlu0 %v2905
    %v2907 = vpop.xlane.xlu0 %2906
    %v2908 = vrcp.pop %v2904
    %v2909 = vrcp.pop %v2907
    %v2910 = vmul.f32 %v2899, %v2908
    %v2911 = vmul.f32 %v2901, %v2909
    %v2912 = vpack.c.bf16 %v2911, %v2910
    %2913 = vrot.lane.b32.xlu0 %v772, 32
    %v2914 = vpop.permute.xlu0 %2913
    %v2917 = vsel %vm1036, %v2912, 0
    %2919 = vmatprep.subr.bf16.mxu0 0
    %2920 = vmatpush1.bf16.msra.mxu0 %v2914
    %2921 = vmatprep.subr.bf16.mxu0 0
    %2922 = vmatpush1.bf16.msra.mxu0 0
    %2923 = vmatprep.subr.bf16.mxu0 0
    %2924 = vmatpush1.bf16.msra.mxu0 0
    %2925 = vmatprep.subr.bf16.mxu0 0
    %2926 = vmatpush1.bf16.msra.mxu0 0
    %2927 = vmatprep.subr.bf16.mxu0 0
    %2928 = vmatpush1.bf16.msra.mxu0 0
    %2929 = vmatprep.subr.bf16.mxu0 0
    %2930 = vmatpush1.bf16.msra.mxu0 0
    %2931 = vmatprep.subr.bf16.mxu0 0
    %2932 = vmatpush1.bf16.msra.mxu0 0
    %2933 = vmatprep.subr.bf16.mxu0 0
    %2934 = vmatpush1.bf16.msra.mxu0 0
    %2935 = vmatprep.subr.bf16.mxu0 0
    %2936 = vmatpush1.bf16.msra.mxu0 0
    %2937 = vmatprep.subr.bf16.mxu0 0
    %2938 = vmatpush1.bf16.msra.mxu0 0
    %2939 = vmatprep.subr.bf16.mxu0 0
    %2940 = vmatpush1.bf16.msra.mxu0 0
    %2941 = vmatprep.subr.bf16.mxu0 0
    %2942 = vmatpush1.bf16.msra.mxu0 0
    %2943 = vmatprep.subr.bf16.mxu0 0
    %2944 = vmatpush1.bf16.msra.mxu0 0
    %2945 = vmatprep.subr.bf16.mxu0 0
    %2946 = vmatpush1.bf16.msra.mxu0 0
    %2947 = vmatprep.subr.bf16.mxu0 0
    %2948 = vmatpush1.bf16.msra.mxu0 0
    %2949 = vmatprep.subr.bf16.mxu0 0
    %2950 = vmatpush1.bf16.msra.mxu0 0
    %2951 = vmatprep.mubr.bf16.mxu0 0
    %2952 = vmatmul.mubr.bf16.gmra.mrb[0].mxu0 %v2917
    %v2953 = vpop.f32.mrb[0].mxu0
    %v2954 = vadd.f32 0.0, %v2953
    %v2955 = vpop.f32.mrb[0].mxu0
    %v2956 = vpop.f32.mrb[0].mxu0
    %v2957 = vadd.f32 0.0, %v2956
    %v2958 = vpop.f32.mrb[0].mxu0
    %2959 = vdwg.mxu0
    %2962 = vrot.lane.b32.xlu0 %v2954, 96
    %v2963 = vpop.permute.xlu0 %2962
    %2964 = vrot.lane.b32.xlu0 %v2957, 96
    %v2965 = vpop.permute.xlu0 %2964
    %2968 = vst.msk [vmem:[#allocation2 + $0x28] sm:$0xff] %vm1746, %v2963
    %2969 = vst.msk [vmem:[#allocation2 + $0x38] sm:$0xff] %vm1746, %v2965
    %v2970 = vld [vmem:[#allocation2] sm:$0xff]
    %v2971 = vld [vmem:[#allocation2 + $0x8] sm:$0xff]
    %v2972 = vld [vmem:[#allocation2 + $0x10] sm:$0xff]
    %v2973 = vld [vmem:[#allocation2 + $0x18] sm:$0xff]
    %v2974 = vld [vmem:[#allocation2 + $0x20] sm:$0xff]
    %v2975 = vld [vmem:[#allocation2 + $0x28] sm:$0xff]
    %v2976 = vld [vmem:[#allocation2 + $0x30] sm:$0xff]
    %v2977 = vld [vmem:[#allocation2 + $0x38] sm:$0xff]
    %v2978 = vpack.c.bf16 %v2972, %v2970
    %v2979 = vpack.c.bf16 %v2973, %v2971
    %v2980 = vpack.c.bf16 %v2976, %v2974
    %v2981 = vpack.c.bf16 %v2977, %v2975
    %v2982 = vld [vmem:[#allocation12] sm:$0xf]
    %v2983 = vld [vmem:[#allocation12 + $0x4] sm:$0xf]
    %v2984 = vld [vmem:[#allocation12 + $0x8] sm:$0xf]
    %v2985 = vld [vmem:[#allocation12 + $0xc] sm:$0xf]
    %v2986 = vld [vmem:[#allocation12 + $0x10] sm:$0xf]
    %v2987 = vld [vmem:[#allocation12 + $0x14] sm:$0xf]
    %v2988 = vld [vmem:[#allocation12 + $0x18] sm:$0xf]
    %v2989 = vld [vmem:[#allocation12 + $0x1c] sm:$0xf]
    %v2990 = vld [vmem:[#allocation12 + $0x20] sm:$0xf]
    %v2991 = vld [vmem:[#allocation12 + $0x24] sm:$0xf]
    %v2992 = vld [vmem:[#allocation12 + $0x28] sm:$0xf]
    %v2993 = vld [vmem:[#allocation12 + $0x2c] sm:$0xf]
    %v2994 = vld [vmem:[#allocation12 + $0x30] sm:$0xf]
    %v2995 = vld [vmem:[#allocation12 + $0x34] sm:$0xf]
    %v2996 = vld [vmem:[#allocation12 + $0x38] sm:$0xf]
    %v2997 = vld [vmem:[#allocation12 + $0x3c] sm:$0xf]
    %v2998 = vld [vmem:[#allocation12 + $0x40] sm:$0xf]
    %v2999 = vld [vmem:[#allocation12 + $0x44] sm:$0xf]
    %v3000 = vld [vmem:[#allocation12 + $0x48] sm:$0xf]
    %v3001 = vld [vmem:[#allocation12 + $0x4c] sm:$0xf]
    %v3002 = vld [vmem:[#allocation12 + $0x50] sm:$0xf]
    %v3003 = vld [vmem:[#allocation12 + $0x54] sm:$0xf]
    %v3004 = vld [vmem:[#allocation12 + $0x58] sm:$0xf]
    %v3005 = vld [vmem:[#allocation12 + $0x5c] sm:$0xf]
    %v3006 = vld [vmem:[#allocation12 + $0x60] sm:$0xf]
    %v3007 = vld [vmem:[#allocation12 + $0x64] sm:$0xf]
    %v3008 = vld [vmem:[#allocation12 + $0x68] sm:$0xf]
    %v3009 = vld [vmem:[#allocation12 + $0x6c] sm:$0xf]
    %v3010 = vld [vmem:[#allocation12 + $0x70] sm:$0xf]
    %v3011 = vld [vmem:[#allocation12 + $0x74] sm:$0xf]
    %v3012 = vld [vmem:[#allocation12 + $0x78] sm:$0xf]
    %v3013 = vld [vmem:[#allocation12 + $0x7c] sm:$0xf]
    %v3014 = vrot.slane %v157, 6
    %v3015 = vlaneseq
    %v3016 = vshrl.u32 %v3015, 7
    %v3017 = vsub.s32 0, %v3016
    %v3018 = vrot.slane %v3014, %v3017
    %v3052 = vunpack.c.l.b16 %v2982
    %v3053 = vunpack.c.l.b16 %v2983
    %v3054 = vunpack.c.l.b16 %v2984
    %v3055 = vunpack.c.l.b16 %v2985
    %v3056 = vunpack.c.l.b16 %v2986
    %v3057 = vunpack.c.l.b16 %v2987
    %v3058 = vunpack.c.l.b16 %v2988
    %v3059 = vunpack.c.l.b16 %v2989
    %v3060 = vunpack.c.l.b16 %v2990
    %v3061 = vunpack.c.l.b16 %v2991
    %v3062 = vunpack.c.l.b16 %v2992
    %v3063 = vunpack.c.l.b16 %v2993
    %v3064 = vunpack.c.l.b16 %v2994
    %v3065 = vunpack.c.l.b16 %v2995
    %v3066 = vunpack.c.l.b16 %v2996
    %v3067 = vunpack.c.l.b16 %v2997
    %v3068 = vunpack.c.l.b16 %v2998
    %v3069 = vunpack.c.l.b16 %v2999
    %v3070 = vunpack.c.l.b16 %v3000
    %v3071 = vunpack.c.l.b16 %v3001
    %v3072 = vunpack.c.l.b16 %v3002
    %v3073 = vunpack.c.l.b16 %v3003
    %v3074 = vunpack.c.l.b16 %v3004
    %v3075 = vunpack.c.l.b16 %v3005
    %v3076 = vunpack.c.l.b16 %v3006
    %v3077 = vunpack.c.l.b16 %v3007
    %v3078 = vunpack.c.l.b16 %v3008
    %v3079 = vunpack.c.l.b16 %v3009
    %v3080 = vunpack.c.l.b16 %v3010
    %v3081 = vunpack.c.l.b16 %v3011
    %v3082 = vunpack.c.l.b16 %v3012
    %v3083 = vunpack.c.l.b16 %v3013
    %v3084 = vpack.c.b16 %v3053, %v3052
    %v3085 = vpack.c.b16 %v3055, %v3054
    %v3086 = vpack.c.b16 %v3057, %v3056
    %v3087 = vpack.c.b16 %v3059, %v3058
    %v3088 = vpack.c.b16 %v3061, %v3060
    %v3089 = vpack.c.b16 %v3063, %v3062
    %v3090 = vpack.c.b16 %v3065, %v3064
    %v3091 = vpack.c.b16 %v3067, %v3066
    %v3092 = vpack.c.b16 %v3069, %v3068
    %v3093 = vpack.c.b16 %v3071, %v3070
    %v3094 = vpack.c.b16 %v3073, %v3072
    %v3095 = vpack.c.b16 %v3075, %v3074
    %v3096 = vpack.c.b16 %v3077, %v3076
    %v3097 = vpack.c.b16 %v3079, %v3078
    %v3098 = vpack.c.b16 %v3081, %v3080
    %v3099 = vpack.c.b16 %v3083, %v3082
    %3116 = vmatprep.subr.bf16.mxu0 0
    %3117 = vmatpush1.bf16.msra.mxu0 %v3084
    %3118 = vmatprep.subr.bf16.mxu0 0
    %3119 = vmatpush1.bf16.msra.mxu0 %v3085
    %3120 = vmatprep.subr.bf16.mxu0 0
    %3121 = vmatpush1.bf16.msra.mxu0 %v3086
    %3122 = vmatprep.subr.bf16.mxu0 0
    %3123 = vmatpush1.bf16.msra.mxu0 %v3087
    %3124 = vmatprep.subr.bf16.mxu0 0
    %3125 = vmatpush1.bf16.msra.mxu0 %v3088
    %3126 = vmatprep.subr.bf16.mxu0 0
    %3127 = vmatpush1.bf16.msra.mxu0 %v3089
    %3128 = vmatprep.subr.bf16.mxu0 0
    %3129 = vmatpush1.bf16.msra.mxu0 %v3090
    %3130 = vmatprep.subr.bf16.mxu0 0
    %3131 = vmatpush1.bf16.msra.mxu0 %v3091
    %3132 = vmatprep.subr.bf16.mxu0 0
    %3133 = vmatpush1.bf16.msra.mxu0 %v3092
    %3134 = vmatprep.subr.bf16.mxu0 0
    %3135 = vmatpush1.bf16.msra.mxu0 %v3093
    %3136 = vmatprep.subr.bf16.mxu0 0
    %3137 = vmatpush1.bf16.msra.mxu0 %v3094
    %3138 = vmatprep.subr.bf16.mxu0 0
    %3139 = vmatpush1.bf16.msra.mxu0 %v3095
    %3140 = vmatprep.subr.bf16.mxu0 0
    %3141 = vmatpush1.bf16.msra.mxu0 %v3096
    %3142 = vmatprep.subr.bf16.mxu0 0
    %3143 = vmatpush1.bf16.msra.mxu0 %v3097
    %3144 = vmatprep.subr.bf16.mxu0 0
    %3145 = vmatpush1.bf16.msra.mxu0 %v3098
    %3146 = vmatprep.subr.bf16.mxu0 0
    %3147 = vmatpush1.bf16.msra.mxu0 %v3099
    %3148 = vmatprep.mubr.bf16.mxu0 %v2979
    %3149 = vmatmul.mubr.bf16.gmra.mrb[0].mxu0 %v2978
    %v3150 = vpop.f32.mrb[0].mxu0
    %v3151 = vadd.f32 %v3018, %v3150
    %v3152 = vpop.f32.mrb[0].mxu0
    %v3153 = vpop.f32.mrb[0].mxu0
    %v3154 = vadd.f32 %v3018, %v3153
    %v3155 = vpop.f32.mrb[0].mxu0
    %3156 = vmatprep.mubr.bf16.mxu0 %v2981
    %3157 = vmatmul.mubr.bf16.gmra.mrb[0].mxu0 %v2980
    %v3158 = vpop.f32.mrb[0].mxu0
    %v3159 = vadd.f32 %v3018, %v3158
    %v3160 = vpop.f32.mrb[0].mxu0
    %v3161 = vpop.f32.mrb[0].mxu0
    %v3162 = vadd.f32 %v3018, %v3161
    %v3163 = vpop.f32.mrb[0].mxu0
    %3164 = vdwg.mxu0
    %v3165 = vadd.f32 %v145, %v3151
    %v3166 = vadd.f32 %v146, %v3154
    %v3167 = vadd.f32 %v147, %v3159
    %v3168 = vadd.f32 %v148, %v3162
    %3169 = vadd.xlane.f32.xlu0 %v3165
    %v3170 = vpop.xlane.xlu0 %3169
    %3171 = vadd.xlane.f32.xlu0 %v3166
    %v3172 = vpop.xlane.xlu0 %3171
    %3173 = vadd.xlane.f32.xlu0 %v3167
    %v3174 = vpop.xlane.xlu0 %3173
    %3175 = vadd.xlane.f32.xlu0 %v3168
    %v3176 = vpop.xlane.xlu0 %3175
    %v3177 = vmul.f32 %v3170, %v167
    %v3178 = vmul.f32 %v3172, %v167
    %v3179 = vmul.f32 %v3174, %v167
    %v3180 = vmul.f32 %v3176, %v167
    %v3181 = vsub.f32 %v3165, %v3177
    %v3182 = vsub.f32 %v3166, %v3178
    %v3183 = vsub.f32 %v3167, %v3179
    %v3184 = vsub.f32 %v3168, %v3180
    %v3185 = vmul.f32 %v3181, %v3181
    %v3186 = vmul.f32 %v3182, %v3182
    %v3187 = vmul.f32 %v3183, %v3183
    %v3188 = vmul.f32 %v3184, %v3184
    %3189 = vadd.xlane.f32.xlu0 %v3185
    %v3190 = vpop.xlane.xlu0 %3189
    %3191 = vadd.xlane.f32.xlu0 %v3186
    %v3192 = vpop.xlane.xlu0 %3191
    %3193 = vadd.xlane.f32.xlu0 %v3187
    %v3194 = vpop.xlane.xlu0 %3193
    %3195 = vadd.xlane.f32.xlu0 %v3188
    %v3196 = vpop.xlane.xlu0 %3195
    %v3197 = vmul.f32 %v3190, 0.007874016
    %v3198 = vmul.f32 %v3192, 0.007874016
    %v3199 = vmul.f32 %v3194, 0.007874016
    %v3200 = vmul.f32 %v3196, 0.007874016
    %v3201 = vrsqrt.pop %v3197
    %v3202 = vmul.f32 %v3197, %v3201
    %vm3203 = vcmp.eq.f32.partialorder %v3197, inf
    %v3204 = vsel %vm3203, %v3197, %v3202
    %vm3205 = vcmp.eq.f32.partialorder %v3197, 0.0
    %v3206 = vand.u32 %v3197, 2147483648
    %v3207 = vsel %vm3205, %v3206, %v3204
    %v3208 = vrsqrt.pop %v3198
    %v3209 = vmul.f32 %v3198, %v3208
    %vm3210 = vcmp.eq.f32.partialorder %v3198, inf
    %v3211 = vsel %vm3210, %v3198, %v3209
    %vm3212 = vcmp.eq.f32.partialorder %v3198, 0.0
    %v3213 = vand.u32 %v3198, 2147483648
    %v3214 = vsel %vm3212, %v3213, %v3211
    %v3215 = vrsqrt.pop %v3199
    %v3216 = vmul.f32 %v3199, %v3215
    %vm3217 = vcmp.eq.f32.partialorder %v3199, inf
    %v3218 = vsel %vm3217, %v3199, %v3216
    %vm3219 = vcmp.eq.f32.partialorder %v3199, 0.0
    %v3220 = vand.u32 %v3199, 2147483648
    %v3221 = vsel %vm3219, %v3220, %v3218
    %v3222 = vrsqrt.pop %v3200
    %v3223 = vmul.f32 %v3200, %v3222
    %vm3224 = vcmp.eq.f32.partialorder %v3200, inf
    %v3225 = vsel %vm3224, %v3200, %v3223
    %vm3226 = vcmp.eq.f32.partialorder %v3200, 0.0
    %v3227 = vand.u32 %v3200, 2147483648
    %v3228 = vsel %vm3226, %v3227, %v3225
    %v3229 = vadd.f32 %v3207, 1e-06
    %v3230 = vadd.f32 %v3214, 1e-06
    %v3231 = vadd.f32 %v3221, 1e-06
    %v3232 = vadd.f32 %v3228, 1e-06
    %v3233 = vrcp.pop %v3229
    %v3234 = vrcp.pop %v3230
    %v3235 = vrcp.pop %v3231
    %v3236 = vrcp.pop %v3232
    %v3237 = vlaneseq
    %v3238 = vshrl.u32 %v3237, 7
    %v3239 = vsub.s32 0, %v3238
    %v3240 = vrot.slane %v155, %v3239
    %v3241 = vmul.f32 %v3240, %v3181
    %v3242 = vmul.f32 %v3240, %v3182
    %v3243 = vmul.f32 %v3240, %v3183
    %v3244 = vmul.f32 %v3240, %v3184
    %v3245 = vmul.f32 %v3241, %v3233
    %v3246 = vmul.f32 %v3242, %v3234
    %v3247 = vmul.f32 %v3243, %v3235
    %v3248 = vmul.f32 %v3244, %v3236
    %v3249 = vlaneseq
    %v3250 = vshrl.u32 %v3249, 7
    %v3251 = vsub.s32 0, %v3250
    %v3252 = vrot.slane %v156, %v3251
    %v3253 = vadd.f32 %v3245, %v3252
    %v3254 = vadd.f32 %v3246, %v3252
    %v3255 = vadd.f32 %v3247, %v3252
    %v3256 = vadd.f32 %v3248, %v3252
    %v3257 = vpack.c.bf16 %v3254, %v3253
    %v3258 = vpack.c.bf16 %v3256, %v3255
    %v3259 = vld [vmem:[#allocation14] sm:$0xff]
    %v3260 = vld [vmem:[#allocation14 + $0x8] sm:$0xff]
    %v3261 = vld [vmem:[#allocation14 + $0x10] sm:$0xff]
    %v3262 = vld [vmem:[#allocation14 + $0x18] sm:$0xff]
    %v3263 = vld [vmem:[#allocation14 + $0x20] sm:$0xff]
    %v3264 = vld [vmem:[#allocation14 + $0x28] sm:$0xff]
    %v3265 = vld [vmem:[#allocation14 + $0x30] sm:$0xff]
    %v3266 = vld [vmem:[#allocation14 + $0x38] sm:$0xff]
    %v3267 = vld [vmem:[#allocation14 + $0x40] sm:$0xff]
    %v3268 = vld [vmem:[#allocation14 + $0x48] sm:$0xff]
    %v3269 = vld [vmem:[#allocation14 + $0x50] sm:$0xff]
    %v3270 = vld [vmem:[#allocation14 + $0x58] sm:$0xff]
    %v3271 = vld [vmem:[#allocation14 + $0x60] sm:$0xff]
    %v3272 = vld [vmem:[#allocation14 + $0x68] sm:$0xff]
    %v3273 = vld [vmem:[#allocation14 + $0x70] sm:$0xff]
    %v3274 = vld [vmem:[#allocation14 + $0x78] sm:$0xff]
    %v3276 = vrot.slane %v157, 7
    %v3277 = vrot.slane %v158, 7
    %vm3278 = vcmask 1040384
    %v3279 = vsel %vm3278, %v3276, %v3277
    %v3280 = vlaneseq
    %v3281 = vshrl.u32 %v3280, 7
    %v3282 = vsub.s32 0, %v3281
    %v3283 = vrot.slane %v3279, %v3282
    %v3284 = vlaneseq
    %v3285 = vshrl.u32 %v3284, 7
    %v3286 = vsub.s32 1, %v3285
    %v3287 = vrot.slane %v3279, %v3286
    %v3306 = vunpack.c.l.b16 %v3259
    %v3307 = vunpack.c.h.b16 %v3259
    %v3308 = vunpack.c.l.b16 %v3260
    %v3309 = vunpack.c.h.b16 %v3260
    %v3310 = vunpack.c.l.b16 %v3261
    %v3311 = vunpack.c.h.b16 %v3261
    %v3312 = vunpack.c.l.b16 %v3262
    %v3313 = vunpack.c.h.b16 %v3262
    %v3314 = vunpack.c.l.b16 %v3263
    %v3315 = vunpack.c.h.b16 %v3263
    %v3316 = vunpack.c.l.b16 %v3264
    %v3317 = vunpack.c.h.b16 %v3264
    %v3318 = vunpack.c.l.b16 %v3265
    %v3319 = vunpack.c.h.b16 %v3265
    %v3320 = vunpack.c.l.b16 %v3266
    %v3321 = vunpack.c.h.b16 %v3266
    %v3322 = vunpack.c.l.b16 %v3267
    %v3323 = vunpack.c.h.b16 %v3267
    %v3324 = vunpack.c.l.b16 %v3268
    %v3325 = vunpack.c.h.b16 %v3268
    %v3326 = vunpack.c.l.b16 %v3269
    %v3327 = vunpack.c.h.b16 %v3269
    %v3328 = vunpack.c.l.b16 %v3270
    %v3329 = vunpack.c.h.b16 %v3270
    %v3330 = vunpack.c.l.b16 %v3271
    %v3331 = vunpack.c.h.b16 %v3271
    %v3332 = vunpack.c.l.b16 %v3272
    %v3333 = vunpack.c.h.b16 %v3272
    %v3334 = vunpack.c.l.b16 %v3273
    %v3335 = vunpack.c.h.b16 %v3273
    %v3336 = vunpack.c.l.b16 %v3274
    %v3337 = vunpack.c.h.b16 %v3274
    %v3338 = vpack.c.b16 %v3308, %v3306
    %v3339 = vpack.c.b16 %v3309, %v3307
    %v3340 = vpack.c.b16 %v3312, %v3310
    %v3341 = vpack.c.b16 %v3313, %v3311
    %v3342 = vpack.c.b16 %v3316, %v3314
    %v3343 = vpack.c.b16 %v3317, %v3315
    %v3344 = vpack.c.b16 %v3320, %v3318
    %v3345 = vpack.c.b16 %v3321, %v3319
    %v3346 = vpack.c.b16 %v3324, %v3322
    %v3347 = vpack.c.b16 %v3325, %v3323
    %v3348 = vpack.c.b16 %v3328, %v3326
    %v3349 = vpack.c.b16 %v3329, %v3327
    %v3350 = vpack.c.b16 %v3332, %v3330
    %v3351 = vpack.c.b16 %v3333, %v3331
    %v3352 = vpack.c.b16 %v3336, %v3334
    %v3353 = vpack.c.b16 %v3337, %v3335
    %3370 = vmatprep.subr.bf16.mxu0 %v3339
    %3371 = vmatpush1.bf16.msra.mxu0 %v3338
    %3372 = vmatprep.subr.bf16.mxu0 %v3341
    %3373 = vmatpush1.bf16.msra.mxu0 %v3340
    %3374 = vmatprep.subr.bf16.mxu0 %v3343
    %3375 = vmatpush1.bf16.msra.mxu0 %v3342
    %3376 = vmatprep.subr.bf16.mxu0 %v3345
    %3377 = vmatpush1.bf16.msra.mxu0 %v3344
    %3378 = vmatprep.subr.bf16.mxu0 %v3347
    %3379 = vmatpush1.bf16.msra.mxu0 %v3346
    %3380 = vmatprep.subr.bf16.mxu0 %v3349
    %3381 = vmatpush1.bf16.msra.mxu0 %v3348
    %3382 = vmatprep.subr.bf16.mxu0 %v3351
    %3383 = vmatpush1.bf16.msra.mxu0 %v3350
    %3384 = vmatprep.subr.bf16.mxu0 %v3353
    %3385 = vmatpush1.bf16.msra.mxu0 %v3352
    %3386 = vmatprep.subr.bf16.mxu0 0
    %3387 = vmatpush1.bf16.msra.mxu0 0
    %3388 = vmatprep.subr.bf16.mxu0 0
    %3389 = vmatpush1.bf16.msra.mxu0 0
    %3390 = vmatprep.subr.bf16.mxu0 0
    %3391 = vmatpush1.bf16.msra.mxu0 0
    %3392 = vmatprep.subr.bf16.mxu0 0
    %3393 = vmatpush1.bf16.msra.mxu0 0
    %3394 = vmatprep.subr.bf16.mxu0 0
    %3395 = vmatpush1.bf16.msra.mxu0 0
    %3396 = vmatprep.subr.bf16.mxu0 0
    %3397 = vmatpush1.bf16.msra.mxu0 0
    %3398 = vmatprep.subr.bf16.mxu0 0
    %3399 = vmatpush1.bf16.msra.mxu0 0
    %3400 = vmatprep.subr.bf16.mxu0 0
    %3401 = vmatpush1.bf16.msra.mxu0 0
    %3402 = vmatprep.mubr.bf16.mxu0 0
    %3403 = vmatmul.mubr.bf16.gmra.mrb[0].mxu0 %v3257
    %v3404 = vpop.f32.mrb[0].mxu0
    %v3405 = vadd.f32 %v3283, %v3404
    %v3406 = vpop.f32.mrb[0].mxu0
    %v3407 = vadd.f32 %v3287, %v3406
    %v3408 = vpop.f32.mrb[0].mxu0
    %v3409 = vadd.f32 %v3283, %v3408
    %v3410 = vpop.f32.mrb[0].mxu0
    %v3411 = vadd.f32 %v3287, %v3410
    %3412 = vmatprep.mubr.bf16.mxu0 0
    %3413 = vmatmul.mubr.bf16.gmra.mrb[0].mxu0 %v3258
    %v3414 = vpop.f32.mrb[0].mxu0
    %v3415 = vadd.f32 %v3283, %v3414
    %v3416 = vpop.f32.mrb[0].mxu0
    %v3417 = vadd.f32 %v3287, %v3416
    %v3418 = vpop.f32.mrb[0].mxu0
    %v3419 = vadd.f32 %v3283, %v3418
    %v3420 = vpop.f32.mrb[0].mxu0
    %v3421 = vadd.f32 %v3287, %v3420
    %3422 = vdwg.mxu0
    %v3423 = vmax.f32 %v3405, 0.0
    %v3424 = vmax.f32 %v3407, 0.0
    %v3425 = vmax.f32 %v3409, 0.0
    %v3426 = vmax.f32 %v3411, 0.0
    %v3427 = vmax.f32 %v3415, 0.0
    %v3428 = vmax.f32 %v3417, 0.0
    %v3429 = vmax.f32 %v3419, 0.0
    %v3430 = vmax.f32 %v3421, 0.0
    %v3431 = vpack.c.bf16 %v3425, %v3423
    %v3432 = vpack.c.bf16 %v3426, %v3424
    %v3433 = vpack.c.bf16 %v3429, %v3427
    %v3434 = vpack.c.bf16 %v3430, %v3428
    %v3435 = vld [vmem:[#allocation15] sm:$0xf]
    %v3436 = vld [vmem:[#allocation15 + $0x4] sm:$0xf]
    %v3437 = vld [vmem:[#allocation15 + $0x8] sm:$0xf]
    %v3438 = vld [vmem:[#allocation15 + $0xc] sm:$0xf]
    %v3439 = vld [vmem:[#allocation15 + $0x10] sm:$0xf]
    %v3440 = vld [vmem:[#allocation15 + $0x14] sm:$0xf]
    %v3441 = vld [vmem:[#allocation15 + $0x18] sm:$0xf]
    %v3442 = vld [vmem:[#allocation15 + $0x1c] sm:$0xf]
    %v3443 = vld [vmem:[#allocation15 + $0x20] sm:$0xf]
    %v3444 = vld [vmem:[#allocation15 + $0x24] sm:$0xf]
    %v3445 = vld [vmem:[#allocation15 + $0x28] sm:$0xf]
    %v3446 = vld [vmem:[#allocation15 + $0x2c] sm:$0xf]
    %v3447 = vld [vmem:[#allocation15 + $0x30] sm:$0xf]
    %v3448 = vld [vmem:[#allocation15 + $0x34] sm:$0xf]
    %v3449 = vld [vmem:[#allocation15 + $0x38] sm:$0xf]
    %v3450 = vld [vmem:[#allocation15 + $0x3c] sm:$0xf]
    %v3451 = vld [vmem:[#allocation15 + $0x40] sm:$0xf]
    %v3452 = vld [vmem:[#allocation15 + $0x44] sm:$0xf]
    %v3453 = vld [vmem:[#allocation15 + $0x48] sm:$0xf]
    %v3454 = vld [vmem:[#allocation15 + $0x4c] sm:$0xf]
    %v3455 = vld [vmem:[#allocation15 + $0x50] sm:$0xf]
    %v3456 = vld [vmem:[#allocation15 + $0x54] sm:$0xf]
    %v3457 = vld [vmem:[#allocation15 + $0x58] sm:$0xf]
    %v3458 = vld [vmem:[#allocation15 + $0x5c] sm:$0xf]
    %v3459 = vld [vmem:[#allocation15 + $0x60] sm:$0xf]
    %v3460 = vld [vmem:[#allocation15 + $0x64] sm:$0xf]
    %v3461 = vld [vmem:[#allocation15 + $0x68] sm:$0xf]
    %v3462 = vld [vmem:[#allocation15 + $0x6c] sm:$0xf]
    %v3463 = vld [vmem:[#allocation15 + $0x70] sm:$0xf]
    %v3464 = vld [vmem:[#allocation15 + $0x74] sm:$0xf]
    %v3465 = vld [vmem:[#allocation15 + $0x78] sm:$0xf]
    %v3466 = vld [vmem:[#allocation15 + $0x7c] sm:$0xf]
    %v3467 = vrot.slane %v158, 1
    %v3468 = vlaneseq
    %v3469 = vshrl.u32 %v3468, 7
    %v3470 = vsub.s32 0, %v3469
    %v3471 = vrot.slane %v3467, %v3470
    %v3505 = vunpack.c.l.b16 %v3435
    %v3506 = vunpack.c.l.b16 %v3436
    %v3507 = vunpack.c.l.b16 %v3437
    %v3508 = vunpack.c.l.b16 %v3438
    %v3509 = vunpack.c.l.b16 %v3439
    %v3510 = vunpack.c.l.b16 %v3440
    %v3511 = vunpack.c.l.b16 %v3441
    %v3512 = vunpack.c.l.b16 %v3442
    %v3513 = vunpack.c.l.b16 %v3443
    %v3514 = vunpack.c.l.b16 %v3444
    %v3515 = vunpack.c.l.b16 %v3445
    %v3516 = vunpack.c.l.b16 %v3446
    %v3517 = vunpack.c.l.b16 %v3447
    %v3518 = vunpack.c.l.b16 %v3448
    %v3519 = vunpack.c.l.b16 %v3449
    %v3520 = vunpack.c.l.b16 %v3450
    %v3521 = vunpack.c.l.b16 %v3451
    %v3522 = vunpack.c.l.b16 %v3452
    %v3523 = vunpack.c.l.b16 %v3453
    %v3524 = vunpack.c.l.b16 %v3454
    %v3525 = vunpack.c.l.b16 %v3455
    %v3526 = vunpack.c.l.b16 %v3456
    %v3527 = vunpack.c.l.b16 %v3457
    %v3528 = vunpack.c.l.b16 %v3458
    %v3529 = vunpack.c.l.b16 %v3459
    %v3530 = vunpack.c.l.b16 %v3460
    %v3531 = vunpack.c.l.b16 %v3461
    %v3532 = vunpack.c.l.b16 %v3462
    %v3533 = vunpack.c.l.b16 %v3463
    %v3534 = vunpack.c.l.b16 %v3464
    %v3535 = vunpack.c.l.b16 %v3465
    %v3536 = vunpack.c.l.b16 %v3466
    %v3537 = vpack.c.b16 %v3506, %v3505
    %v3538 = vpack.c.b16 %v3508, %v3507
    %v3539 = vpack.c.b16 %v3510, %v3509
    %v3540 = vpack.c.b16 %v3512, %v3511
    %v3541 = vpack.c.b16 %v3514, %v3513
    %v3542 = vpack.c.b16 %v3516, %v3515
    %v3543 = vpack.c.b16 %v3518, %v3517
    %v3544 = vpack.c.b16 %v3520, %v3519
    %v3545 = vpack.c.b16 %v3522, %v3521
    %v3546 = vpack.c.b16 %v3524, %v3523
    %v3547 = vpack.c.b16 %v3526, %v3525
    %v3548 = vpack.c.b16 %v3528, %v3527
    %v3549 = vpack.c.b16 %v3530, %v3529
    %v3550 = vpack.c.b16 %v3532, %v3531
    %v3551 = vpack.c.b16 %v3534, %v3533
    %v3552 = vpack.c.b16 %v3536, %v3535
    %3569 = vmatprep.subr.bf16.mxu0 0
    %3570 = vmatpush1.bf16.msra.mxu0 %v3537
    %3571 = vmatprep.subr.bf16.mxu0 0
    %3572 = vmatpush1.bf16.msra.mxu0 %v3538
    %3573 = vmatprep.subr.bf16.mxu0 0
    %3574 = vmatpush1.bf16.msra.mxu0 %v3539
    %3575 = vmatprep.subr.bf16.mxu0 0
    %3576 = vmatpush1.bf16.msra.mxu0 %v3540
    %3577 = vmatprep.subr.bf16.mxu0 0
    %3578 = vmatpush1.bf16.msra.mxu0 %v3541
    %3579 = vmatprep.subr.bf16.mxu0 0
    %3580 = vmatpush1.bf16.msra.mxu0 %v3542
    %3581 = vmatprep.subr.bf16.mxu0 0
    %3582 = vmatpush1.bf16.msra.mxu0 %v3543
    %3583 = vmatprep.subr.bf16.mxu0 0
    %3584 = vmatpush1.bf16.msra.mxu0 %v3544
    %3585 = vmatprep.subr.bf16.mxu0 0
    %3586 = vmatpush1.bf16.msra.mxu0 %v3545
    %3587 = vmatprep.subr.bf16.mxu0 0
    %3588 = vmatpush1.bf16.msra.mxu0 %v3546
    %3589 = vmatprep.subr.bf16.mxu0 0
    %3590 = vmatpush1.bf16.msra.mxu0 %v3547
    %3591 = vmatprep.subr.bf16.mxu0 0
    %3592 = vmatpush1.bf16.msra.mxu0 %v3548
    %3593 = vmatprep.subr.bf16.mxu0 0
    %3594 = vmatpush1.bf16.msra.mxu0 %v3549
    %3595 = vmatprep.subr.bf16.mxu0 0
    %3596 = vmatpush1.bf16.msra.mxu0 %v3550
    %3597 = vmatprep.subr.bf16.mxu0 0
    %3598 = vmatpush1.bf16.msra.mxu0 %v3551
    %3599 = vmatprep.subr.bf16.mxu0 0
    %3600 = vmatpush1.bf16.msra.mxu0 %v3552
    %3601 = vmatprep.mubr.bf16.mxu0 %v3432
    %3602 = vmatmul.mubr.bf16.gmra.mrb[0].mxu0 %v3431
    %v3603 = vpop.f32.mrb[0].mxu0
    %v3604 = vadd.f32 %v3471, %v3603
    %v3605 = vpop.f32.mrb[0].mxu0
    %v3606 = vpop.f32.mrb[0].mxu0
    %v3607 = vadd.f32 %v3471, %v3606
    %v3608 = vpop.f32.mrb[0].mxu0
    %3609 = vmatprep.mubr.bf16.mxu0 %v3434
    %3610 = vmatmul.mubr.bf16.gmra.mrb[0].mxu0 %v3433
    %v3611 = vpop.f32.mrb[0].mxu0
    %v3612 = vadd.f32 %v3471, %v3611
    %v3613 = vpop.f32.mrb[0].mxu0
    %v3614 = vpop.f32.mrb[0].mxu0
    %v3615 = vadd.f32 %v3471, %v3614
    %v3616 = vpop.f32.mrb[0].mxu0
    %3617 = vdwg.mxu0
    %v3618 = vadd.f32 %v3165, %v3604
    %v3619 = vadd.f32 %v3166, %v3607
    %v3620 = vadd.f32 %v3167, %v3612
    %v3621 = vadd.f32 %v3168, %v3615
    %3622 = vst [vmem:[#allocation17] sm:$0xff] %v3618
    %3623 = vst [vmem:[#allocation17 + $0x8] sm:$0xff] %v3619
    %3624 = vst [vmem:[#allocation17 + $0x10] sm:$0xff] %v3620
    %3625 = vst [vmem:[#allocation17 + $0x18] sm:$0xff] %v3621
    // Predicated region
    $region78: #{encoder_layer_forward.1} parent=1 // pred_check
      _
    $region79: #{encoder_layer_forward.1} parent=1 // pred_check_branch
      %3627 = sbr.rel (0) target = $region81
    $region80: #{encoder_layer_forward.1} parent=1 // pred_region
      %s3629 = ssub.s32 512, 512
      %3630 = vsyncadd [#allocation5], %s3629
      %s3631 = sshll.u32 [#allocation17], 4
      %s3632 = int_to_ptr.vmem [resolvable:$true] %s3631
      %3637 = dma.vmem_to_hbm [thread:$0]  %s3632, 512, %s11, [#allocation5], 128, 128, 8
    $region81: #{encoder_layer_forward.1} parent=1 // pred_fallthru
      _
    // Predicated region
    $region82: #{encoder_layer_forward.1} parent=1 // pred_check
      _
    $region83: #{encoder_layer_forward.1} parent=1 // pred_check_branch
      %3639 = sbr.rel (0) target = $region85
    $region84: #{encoder_layer_forward.1} parent=1 // pred_region
      %3640 = dma.done [#allocation5], 512
    $region85: #{encoder_layer_forward.1} parent=1 // pred_fallthru
      _
    %3641 = vsyncpa [#allocation4], 1
    %3642 = vsyncpa [#allocation7], 1
    %3643 = vsyncpa [#allocation10], 1
    %3644 = vsyncpa [#allocation13], 1
    %3645 = vsyncpa [#allocation16], 1
    %3646 = vsyncpa [#allocation5], 1

</llo_original>
